<compile_context>
chip_gen: v5e
topology: v5e:2x2
jax: 0.10.0
libtpu: 0.0.40
codegen_flags: <defaults>
</compile_context>

<pallas_src>
import math

import jax
import jax.numpy as jnp
from jax.experimental import pallas as pl
from jax.experimental.pallas import tpu as pltpu

HIDDEN = 128           # hidden_size (module default 768; small-scale run)
HEADS = 4              # num heads   (module default 12)
HEAD_DIM = HIDDEN // HEADS
LN_EPS = 1e-5


# ---------------------------------------------------------------------------
# In-kernel helpers (elementwise; built only from ops that lower in Mosaic)
# ---------------------------------------------------------------------------
def _erf(x):
    # Abramowitz & Stegun 7.1.26 rational approximation (|err| < 1.5e-7).
    a1, a2, a3, a4, a5 = 0.254829592, -0.284496736, 1.421413741, -1.453152027, 1.061405429
    p = 0.3275911
    sign = jnp.where(x >= 0.0, 1.0, -1.0)
    ax = jnp.abs(x)
    t = 1.0 / (1.0 + p * ax)
    poly = ((((a5 * t + a4) * t + a3) * t + a2) * t + a1) * t
    return sign * (1.0 - poly * jnp.exp(-ax * ax))


def _gelu_exact(x):
    # GELUActivation() == exact erf-based GELU.
    # TODO(synk): at real sizes (H=768) swap for tanh-GELU (EUP) after
    # re-validating against the tolerance; kept exact here for accuracy.
    return 0.5 * x * (1.0 + _erf(x * (1.0 / math.sqrt(2.0))))


def _layernorm(x, gamma, beta):
    mean = jnp.mean(x, axis=-1, keepdims=True)
    xc = x - mean
    var = jnp.mean(xc * xc, axis=-1, keepdims=True)
    inv = jax.lax.rsqrt(var + LN_EPS)
    return xc * inv * gamma + beta


# ---------------------------------------------------------------------------
# Fused BertLayer kernel.  One grid step == one batch element's [S, H] rows.
# Kernel args: (scalar-prefetch seq_ref, inputs..., output).
# ---------------------------------------------------------------------------
def bert_layer_kernel(seq_ref,                      # [B] int32 (SMEM scalar prefetch)
                      x_ref,                        # [S, H]   this sequence's rows
                      w_in_ref, b_in_ref,           # [H, 3H], [1, 3H]  (attn in_proj)
                      w_op_ref, b_op_ref,           # [H, H],  [1, H]   (attn out_proj)
                      w_ad_ref, b_ad_ref,           # [H, H],  [1, H]   (BertSelfOutput.dense)
                      g1_ref, be1_ref,              # [1, H], [1, H]    (LayerNorm 1)
                      w_int_ref, b_int_ref,         # [H, H],  [1, H]   (BertIntermediate.dense)
                      w_o_ref, b_o_ref,             # [H, H],  [1, H]   (BertOutput.dense)
                      g2_ref, be2_ref,              # [1, H], [1, H]    (LayerNorm 2)
                      out_ref):                     # [S, H]
    b = pl.program_id(0)
    seq_len = seq_ref[b]                            # scalar int32 from SMEM

    x = x_ref[...]                                  # [S, H]
    S = x.shape[0]

    # ---- MultiheadAttention: QKV projection (one K=128, N=3H GEMM) ----
    qkv = jnp.dot(x, w_in_ref[...], preferred_element_type=jnp.float32) + b_in_ref[...]
    q = qkv[:, :HIDDEN] * (1.0 / math.sqrt(HEAD_DIM))
    k = qkv[:, HIDDEN:2 * HIDDEN]
    v = qkv[:, 2 * HIDDEN:]

    # Head-major stacks [HEADS, S, HD]; the stack is a one-time relayout so
    # scores/context run as TWO batched dot_generals instead of 8 tiny GEMMs.
    def split_heads(t):
        return jnp.stack(
            [t[:, h * HEAD_DIM:(h + 1) * HEAD_DIM] for h in range(HEADS)], axis=0)

    qh = split_heads(q)
    kh = split_heads(k)
    vh = split_heads(v)

    # scores: 'hqd,hkd->hqk'
    scores = jax.lax.dot_general(
        qh, kh, (((2,), (2,)), ((0,), (0,))),
        preferred_element_type=jnp.float32)          # [HEADS, S, S]

    # Key-padding mask: key positions >= seq_len get -1e30 (exp underflows
    # to exactly 0 after max-subtraction).
    key_idx = jax.lax.broadcasted_iota(jnp.int32, (HEADS, S, S), 2)
    scores = jnp.where(key_idx >= seq_len, jnp.float32(-1e30), scores)

    # Numerically-safe softmax (row-max subtraction reinstated); the divide
    # uses the EUP approximate reciprocal (free slot).
    m = jnp.max(scores, axis=-1, keepdims=True)
    p = jnp.exp(scores - m)
    p = p * pl.reciprocal(jnp.sum(p, axis=-1, keepdims=True), approx=True)

    # context: 'hqk,hkd->hqd'
    ctx = jax.lax.dot_general(
        p, vh, (((2,), (1,)), ((0,), (0,))),
        preferred_element_type=jnp.float32)          # [HEADS, S, HD]

    # Lane-axis concat of head contexts -> one K=128 out_proj GEMM.
    ctx_cat = jnp.concatenate([ctx[h] for h in range(HEADS)], axis=-1)  # [S, H]
    attn = jnp.dot(ctx_cat, w_op_ref[...], preferred_element_type=jnp.float32) + b_op_ref[...]

    # ---- BertSelfOutput: dense + (dropout=id) + LayerNorm(residual) ----
    h1 = jnp.dot(attn, w_ad_ref[...], preferred_element_type=jnp.float32) + b_ad_ref[...]
    h1 = _layernorm(h1 + x, g1_ref[...], be1_ref[...])

    # ---- BertIntermediate: dense + exact GELU ----
    inter = _gelu_exact(
        jnp.dot(h1, w_int_ref[...], preferred_element_type=jnp.float32) + b_int_ref[...])

    # ---- BertOutput: dense + (dropout=id) + LayerNorm(residual) ----
    h2 = jnp.dot(inter, w_o_ref[...], preferred_element_type=jnp.float32) + b_o_ref[...]
    out_ref[...] = _layernorm(h2 + h1, g2_ref[...], be2_ref[...])


def bert_layer_pallas(x, seq_lengths, p):
    B, S, H = x.shape
    assert H == HIDDEN
    BS = B * S

    def build(single_buffer_weights):
        def w_spec(shape):
            n = len(shape)
            idx = lambda b, seq, _n=n: (0,) * _n       # grid-constant block
            if single_buffer_weights:
                return pl.BlockSpec(shape, idx, pipeline_mode=pl.Buffered(1))
            return pl.BlockSpec(shape, idx)

        row_spec = pl.BlockSpec((S, H), lambda b, seq: (b, 0))  # rows of batch b

        in_specs = [
            row_spec,                                     # x (flattened rows)
            w_spec((H, 3 * H)), w_spec((1, 3 * H)),       # in_proj
            w_spec((H, H)), w_spec((1, H)),               # out_proj
            w_spec((H, H)), w_spec((1, H)),               # BertSelfOutput.dense
            w_spec((1, H)), w_spec((1, H)),               # LayerNorm1
            w_spec((H, H)), w_spec((1, H)),               # BertIntermediate.dense
            w_spec((H, H)), w_spec((1, H)),               # BertOutput.dense
            w_spec((1, H)), w_spec((1, H)),               # LayerNorm2
        ]

        return pl.pallas_call(
            bert_layer_kernel,
            out_shape=jax.ShapeDtypeStruct((BS, H), jnp.float32),
            grid_spec=pltpu.PrefetchScalarGridSpec(
                num_scalar_prefetch=1,                    # seq_lengths -> SMEM
                grid=(B,),
                in_specs=in_specs,
                out_specs=pl.BlockSpec((S, H), lambda b, seq: (b, 0)),
            ),
            # Batch axis is independent -> megacore-shardable on v7x.
            # At H=768 also set vmem_limit_bytes here (default scoped limit
            # is well below the resident-weight footprint).
            compiler_params=pltpu.CompilerParams(dimension_semantics=("parallel",)),
        )

    r1 = lambda a: a.reshape(1, -1)
    args = (
        seq_lengths.astype(jnp.int32),
        x.reshape(BS, H),
        p["w_in"].T, r1(p["b_in"]),
        p["w_op"].T, r1(p["b_op"]),
        p["w_ad"].T, r1(p["b_ad"]),
        r1(p["g1"]), r1(p["be1"]),
        p["w_int"].T, r1(p["b_int"]),
        p["w_o"].T, r1(p["b_o"]),
        r1(p["g2"]), r1(p["be2"]),
    )

    try:
        out = jax.block_until_ready(build(single_buffer_weights=True)(*args))
    except Exception:
        # Fallback if this JAX build rejects Buffered(1) single-buffering;
        # semantics are identical, weights just get default double-buffering.
        out = jax.block_until_ready(build(single_buffer_weights=False)(*args))
    return out.reshape(B, S, H)


def bert_encoder_pallas(x, seq_lengths, layer_params):
    # num_hidden_layers = 1 by default.
    # TODO(synk): for >1 layers at real sizes, fuse into one pallas_call with
    # a leading layer grid axis indexing per-layer weight slabs so activations
    # stay in VMEM between layers.
    h = x
    for p in layer_params:
        h = bert_layer_pallas(h, seq_lengths, p)
    return h


# ---------------------------------------------------------------------------
# Pure-JAX reference (mirrors the PyTorch forward, eval mode)
# ---------------------------------------------------------------------------
def _ln_ref(x, g, b):
    mean = jnp.mean(x, axis=-1, keepdims=True)
    var = jnp.mean((x - mean) ** 2, axis=-1, keepdims=True)
    return (x - mean) * jax.lax.rsqrt(var + LN_EPS) * g + b


def bert_layer_ref(x, seq_lengths, p):
    B, S, H = x.shape
    pad = jnp.arange(S)[None, :] >= seq_lengths[:, None]          # [B, S] True => pad
    qkv = jnp.einsum("bsh,oh->bso", x, p["w_in"]) + p["b_in"]
    q, k, v = jnp.split(qkv, 3, axis=-1)
    q = q * (1.0 / math.sqrt(HEAD_DIM))
    qh = q.reshape(B, S, HEADS, HEAD_DIM)
    kh = k.reshape(B, S, HEADS, HEAD_DIM)
    vh = v.reshape(B, S, HEADS, HEAD_DIM)
    scores = jnp.einsum("bqnd,bknd->bnqk", qh, kh)
    scores = jnp.where(pad[:, None, None, :], -jnp.inf, scores)
    w = jax.nn.softmax(scores, axis=-1)
    ctx = jnp.einsum("bnqk,bknd->bqnd", w, vh).reshape(B, S, H)
    attn_out = ctx @ p["w_op"].T + p["b_op"]
    h1 = _ln_ref(attn_out @ p["w_ad"].T + p["b_ad"] + x, p["g1"], p["be1"])
    inter = jax.nn.gelu(h1 @ p["w_int"].T + p["b_int"], approximate=False)
    h2 = inter @ p["w_o"].T + p["b_o"]
    return _ln_ref(h2 + h1, p["g2"], p["be2"])


# ---------------------------------------------------------------------------
# Deterministic parameter init (PyTorch orientation: Linear weight = [out, in])
# ---------------------------------------------------------------------------
def init_layer_params(key):
    ks = jax.random.split(key, 16)
    n = lambda k, shp, s: jax.random.normal(k, shp, jnp.float32) * s
    return {
        "w_in":  n(ks[0], (3 * HIDDEN, HIDDEN), 0.05),
        "b_in":  n(ks[1], (3 * HIDDEN,), 0.02),
        "w_op":  n(ks[2], (HIDDEN, HIDDEN), 0.05),
        "b_op":  n(ks[3], (HIDDEN,), 0.02),
        "w_ad":  n(ks[4], (HIDDEN, HIDDEN), 0.05),
        "b_ad":  n(ks[5], (HIDDEN,), 0.02),
        "g1":    1.0 + n(ks[6], (HIDDEN,), 0.05),
        "be1":   n(ks[7], (HIDDEN,), 0.02),
        "w_int": n(ks[8], (HIDDEN, HIDDEN), 0.05),
        "b_int": n(ks[9], (HIDDEN,), 0.02),
        "w_o":   n(ks[10], (HIDDEN, HIDDEN), 0.05),
        "b_o":   n(ks[11], (HIDDEN,), 0.02),
        "g2":    1.0 + n(ks[12], (HIDDEN,), 0.05),
        "be2":   n(ks[13], (HIDDEN,), 0.02),
    }


if __name__ == "__main__":
    B, S = 2, 16
    key = jax.random.PRNGKey(0)
    kx, kp = jax.random.split(key)

    x = jax.random.normal(kx, (B, S, HIDDEN), jnp.float32)
    seq_lengths = jnp.array([S, 10], dtype=jnp.int32)   # second sequence is padded

    layer_params = [init_layer_params(kp)]              # num_hidden_layers = 1

    out = bert_encoder_pallas(x, seq_lengths, layer_params)
    out = jax.block_until_ready(out)

    ref = bert_layer_ref(x, seq_lengths, layer_params[0])
    max_err = float(jnp.max(jnp.abs(out - ref)))
    assert out.shape == (B, S, HIDDEN)
    assert max_err < 2e-3, f"mismatch vs reference: {max_err}"

    print("KERNEL_OK")
</pallas_src>

<mosaic_0001>
module attributes {stable_mosaic.version = 11 : i64} {
  func.func @bert_layer_kernel(%arg0: i32, %arg1: memref<2xi32, #tpu.memory_space<smem>>, %arg2: memref<16x128xf32, #tpu.memory_space<vmem>>, %arg3: memref<128x384xf32, #tpu.memory_space<vmem>>, %arg4: memref<1x384xf32, #tpu.memory_space<vmem>>, %arg5: memref<128x128xf32, #tpu.memory_space<vmem>>, %arg6: memref<1x128xf32, #tpu.memory_space<vmem>>, %arg7: memref<128x128xf32, #tpu.memory_space<vmem>>, %arg8: memref<1x128xf32, #tpu.memory_space<vmem>>, %arg9: memref<1x128xf32, #tpu.memory_space<vmem>>, %arg10: memref<1x128xf32, #tpu.memory_space<vmem>>, %arg11: memref<128x128xf32, #tpu.memory_space<vmem>>, %arg12: memref<1x128xf32, #tpu.memory_space<vmem>>, %arg13: memref<128x128xf32, #tpu.memory_space<vmem>>, %arg14: memref<1x128xf32, #tpu.memory_space<vmem>>, %arg15: memref<1x128xf32, #tpu.memory_space<vmem>>, %arg16: memref<1x128xf32, #tpu.memory_space<vmem>>, %arg17: memref<16x128xf32, #tpu.memory_space<vmem>>) attributes {dimension_semantics = [#tpu.dimension_semantics<parallel>], iteration_bounds = array<i64: 2>, scalar_prefetch = 1 : i64, scratch_operands = 0 : i64, tpu.core_type = #tpu.core_type<tc>, window_params = [{transform_indices = @transform_0, window_bounds = array<i64: 16, 128>}, {pipeline_mode = #tpu.pipeline_mode<synchronous>, transform_indices = @transform_1, window_bounds = array<i64: 128, 384>}, {pipeline_mode = #tpu.pipeline_mode<synchronous>, transform_indices = @transform_2, window_bounds = array<i64: 1, 384>}, {pipeline_mode = #tpu.pipeline_mode<synchronous>, transform_indices = @transform_3, window_bounds = array<i64: 128, 128>}, {pipeline_mode = #tpu.pipeline_mode<synchronous>, transform_indices = @transform_4, window_bounds = array<i64: 1, 128>}, {pipeline_mode = #tpu.pipeline_mode<synchronous>, transform_indices = @transform_5, window_bounds = array<i64: 128, 128>}, {pipeline_mode = #tpu.pipeline_mode<synchronous>, transform_indices = @transform_6, window_bounds = array<i64: 1, 128>}, {pipeline_mode = #tpu.pipeline_mode<synchronous>, transform_indices = @transform_7, window_bounds = array<i64: 1, 128>}, {pipeline_mode = #tpu.pipeline_mode<synchronous>, transform_indices = @transform_8, window_bounds = array<i64: 1, 128>}, {pipeline_mode = #tpu.pipeline_mode<synchronous>, transform_indices = @transform_9, window_bounds = array<i64: 128, 128>}, {pipeline_mode = #tpu.pipeline_mode<synchronous>, transform_indices = @transform_10, window_bounds = array<i64: 1, 128>}, {pipeline_mode = #tpu.pipeline_mode<synchronous>, transform_indices = @transform_11, window_bounds = array<i64: 128, 128>}, {pipeline_mode = #tpu.pipeline_mode<synchronous>, transform_indices = @transform_12, window_bounds = array<i64: 1, 128>}, {pipeline_mode = #tpu.pipeline_mode<synchronous>, transform_indices = @transform_13, window_bounds = array<i64: 1, 128>}, {pipeline_mode = #tpu.pipeline_mode<synchronous>, transform_indices = @transform_14, window_bounds = array<i64: 1, 128>}, {transform_indices = @transform_15, window_bounds = array<i64: 16, 128>}]} {
    %0 = arith.index_cast %arg0 : i32 to index
    %1 = memref.load %arg1[%0] : memref<2xi32, #tpu.memory_space<smem>>
    %c0 = arith.constant 0 : index
    %c0_0 = arith.constant 0 : index
    %2 = vector.load %arg2[%c0, %c0_0] : memref<16x128xf32, #tpu.memory_space<vmem>>, vector<16x128xf32>
    %c0_1 = arith.constant 0 : index
    %c0_2 = arith.constant 0 : index
    %3 = vector.load %arg3[%c0_1, %c0_2] : memref<128x384xf32, #tpu.memory_space<vmem>>, vector<128x384xf32>
    %cst = arith.constant dense<0.000000e+00> : vector<16x384xf32>
    %4 = tpu.matmul %2, %3, %cst {dimension_numbers = #tpu.dot_dimension_numbers<[1], [0], [0], [1], [0, 0, 1, 1], [], []>} : vector<16x128xf32>, vector<128x384xf32>, vector<16x384xf32> -> vector<16x384xf32>
    %c0_3 = arith.constant 0 : index
    %c0_4 = arith.constant 0 : index
    %5 = vector.load %arg4[%c0_3, %c0_4] : memref<1x384xf32, #tpu.memory_space<vmem>>, vector<1x384xf32>
    %6 = vector.broadcast %5 : vector<1x384xf32> to vector<16x384xf32>
    %7 = arith.addf %4, %6 : vector<16x384xf32>
    %8 = vector.extract_strided_slice %7 {offsets = [0, 0], sizes = [16, 128], strides = [1, 1]} : vector<16x384xf32> to vector<16x128xf32>
    %cst_5 = arith.constant 0.176776692 : f32
    %9 = vector.broadcast %cst_5 : f32 to vector<16x128xf32>
    %10 = arith.mulf %8, %9 : vector<16x128xf32>
    %11 = vector.extract_strided_slice %7 {offsets = [0, 128], sizes = [16, 128], strides = [1, 1]} : vector<16x384xf32> to vector<16x128xf32>
    %12 = vector.extract_strided_slice %7 {offsets = [0, 256], sizes = [16, 128], strides = [1, 1]} : vector<16x384xf32> to vector<16x128xf32>
    %13 = vector.extract_strided_slice %10 {offsets = [0, 0], sizes = [16, 32], strides = [1, 1]} : vector<16x128xf32> to vector<16x32xf32>
    %14 = vector.extract_strided_slice %10 {offsets = [0, 32], sizes = [16, 32], strides = [1, 1]} : vector<16x128xf32> to vector<16x32xf32>
    %15 = vector.extract_strided_slice %10 {offsets = [0, 64], sizes = [16, 32], strides = [1, 1]} : vector<16x128xf32> to vector<16x32xf32>
    %16 = vector.extract_strided_slice %10 {offsets = [0, 96], sizes = [16, 32], strides = [1, 1]} : vector<16x128xf32> to vector<16x32xf32>
    %17 = vector.shape_cast %13 : vector<16x32xf32> to vector<1x16x32xf32>
    %18 = vector.shape_cast %14 : vector<16x32xf32> to vector<1x16x32xf32>
    %19 = vector.shape_cast %15 : vector<16x32xf32> to vector<1x16x32xf32>
    %20 = vector.shape_cast %16 : vector<16x32xf32> to vector<1x16x32xf32>
    %21 = tpu.concatenate %17, %18, %19, %20 in 0 : vector<1x16x32xf32>, vector<1x16x32xf32>, vector<1x16x32xf32>, vector<1x16x32xf32> -> vector<4x16x32xf32>
    %22 = vector.extract_strided_slice %11 {offsets = [0, 0], sizes = [16, 32], strides = [1, 1]} : vector<16x128xf32> to vector<16x32xf32>
    %23 = vector.extract_strided_slice %11 {offsets = [0, 32], sizes = [16, 32], strides = [1, 1]} : vector<16x128xf32> to vector<16x32xf32>
    %24 = vector.extract_strided_slice %11 {offsets = [0, 64], sizes = [16, 32], strides = [1, 1]} : vector<16x128xf32> to vector<16x32xf32>
    %25 = vector.extract_strided_slice %11 {offsets = [0, 96], sizes = [16, 32], strides = [1, 1]} : vector<16x128xf32> to vector<16x32xf32>
    %26 = vector.shape_cast %22 : vector<16x32xf32> to vector<1x16x32xf32>
    %27 = vector.shape_cast %23 : vector<16x32xf32> to vector<1x16x32xf32>
    %28 = vector.shape_cast %24 : vector<16x32xf32> to vector<1x16x32xf32>
    %29 = vector.shape_cast %25 : vector<16x32xf32> to vector<1x16x32xf32>
    %30 = tpu.concatenate %26, %27, %28, %29 in 0 : vector<1x16x32xf32>, vector<1x16x32xf32>, vector<1x16x32xf32>, vector<1x16x32xf32> -> vector<4x16x32xf32>
    %31 = vector.extract_strided_slice %12 {offsets = [0, 0], sizes = [16, 32], strides = [1, 1]} : vector<16x128xf32> to vector<16x32xf32>
    %32 = vector.extract_strided_slice %12 {offsets = [0, 32], sizes = [16, 32], strides = [1, 1]} : vector<16x128xf32> to vector<16x32xf32>
    %33 = vector.extract_strided_slice %12 {offsets = [0, 64], sizes = [16, 32], strides = [1, 1]} : vector<16x128xf32> to vector<16x32xf32>
    %34 = vector.extract_strided_slice %12 {offsets = [0, 96], sizes = [16, 32], strides = [1, 1]} : vector<16x128xf32> to vector<16x32xf32>
    %35 = vector.shape_cast %31 : vector<16x32xf32> to vector<1x16x32xf32>
    %36 = vector.shape_cast %32 : vector<16x32xf32> to vector<1x16x32xf32>
    %37 = vector.shape_cast %33 : vector<16x32xf32> to vector<1x16x32xf32>
    %38 = vector.shape_cast %34 : vector<16x32xf32> to vector<1x16x32xf32>
    %39 = tpu.concatenate %35, %36, %37, %38 in 0 : vector<1x16x32xf32>, vector<1x16x32xf32>, vector<1x16x32xf32>, vector<1x16x32xf32> -> vector<4x16x32xf32>
    %cst_6 = arith.constant dense<0.000000e+00> : vector<4x16x16xf32>
    %40 = tpu.matmul %21, %30, %cst_6 {dimension_numbers = #tpu.dot_dimension_numbers<[2], [2], [1], [1], [0, 0, 0, 1, 1, 1], [0], [0]>} : vector<4x16x32xf32>, vector<4x16x32xf32>, vector<4x16x16xf32> -> vector<4x16x16xf32>
    %41 = tpu.iota {dimensions = array<i32: 2>} : vector<4x16x16xi32>
    %42 = vector.broadcast %1 : i32 to vector<4x16x16xi32>
    %43 = arith.cmpi sge, %41, %42 : vector<4x16x16xi32>
    %cst_7 = arith.constant -1.000000e+30 : f32
    %44 = vector.broadcast %cst_7 : f32 to vector<4x16x16xf32>
    %45 = arith.select %43, %44, %40 : vector<4x16x16xi1>, vector<4x16x16xf32>
    %cst_8 = arith.constant dense<0xFF800000> : vector<4x16xf32>
    %46 = vector.multi_reduction <maximumf>, %45, %cst_8 [2] : vector<4x16x16xf32> to vector<4x16xf32>
    %47 = vector.shape_cast %46 : vector<4x16xf32> to vector<4x16x1xf32>
    %48 = vector.broadcast %47 : vector<4x16x1xf32> to vector<4x16x16xf32>
    %49 = arith.subf %45, %48 : vector<4x16x16xf32>
    %50 = math.exp %49 : vector<4x16x16xf32>
    %cst_9 = arith.constant dense<0.000000e+00> : vector<4x16xf32>
    %51 = vector.multi_reduction <add>, %50, %cst_9 [2] : vector<4x16x16xf32> to vector<4x16xf32>
    %52 = vector.shape_cast %51 : vector<4x16xf32> to vector<4x16x1xf32>
    %53 = tpu.reciprocal %52 {approx = true} : vector<4x16x1xf32> -> vector<4x16x1xf32>
    %54 = vector.broadcast %53 : vector<4x16x1xf32> to vector<4x16x16xf32>
    %55 = arith.mulf %50, %54 : vector<4x16x16xf32>
    %cst_10 = arith.constant dense<0.000000e+00> : vector<4x16x32xf32>
    %56 = tpu.matmul %55, %39, %cst_10 {dimension_numbers = #tpu.dot_dimension_numbers<[2], [1], [1], [2], [0, 0, 0, 1, 1, 2], [0], [0]>} : vector<4x16x16xf32>, vector<4x16x32xf32>, vector<4x16x32xf32> -> vector<4x16x32xf32>
    %57 = vector.extract_strided_slice %56 {offsets = [0, 0, 0], sizes = [1, 16, 32], strides = [1, 1, 1]} : vector<4x16x32xf32> to vector<1x16x32xf32>
    %58 = vector.shape_cast %57 : vector<1x16x32xf32> to vector<16x32xf32>
    %59 = vector.extract_strided_slice %56 {offsets = [1, 0, 0], sizes = [1, 16, 32], strides = [1, 1, 1]} : vector<4x16x32xf32> to vector<1x16x32xf32>
    %60 = vector.shape_cast %59 : vector<1x16x32xf32> to vector<16x32xf32>
    %61 = vector.extract_strided_slice %56 {offsets = [2, 0, 0], sizes = [1, 16, 32], strides = [1, 1, 1]} : vector<4x16x32xf32> to vector<1x16x32xf32>
    %62 = vector.shape_cast %61 : vector<1x16x32xf32> to vector<16x32xf32>
    %63 = vector.extract_strided_slice %56 {offsets = [3, 0, 0], sizes = [1, 16, 32], strides = [1, 1, 1]} : vector<4x16x32xf32> to vector<1x16x32xf32>
    %64 = vector.shape_cast %63 : vector<1x16x32xf32> to vector<16x32xf32>
    %65 = tpu.concatenate %58, %60, %62, %64 in 1 : vector<16x32xf32>, vector<16x32xf32>, vector<16x32xf32>, vector<16x32xf32> -> vector<16x128xf32>
    %c0_11 = arith.constant 0 : index
    %c0_12 = arith.constant 0 : index
    %66 = vector.load %arg5[%c0_11, %c0_12] : memref<128x128xf32, #tpu.memory_space<vmem>>, vector<128x128xf32>
    %cst_13 = arith.constant dense<0.000000e+00> : vector<16x128xf32>
    %67 = tpu.matmul %65, %66, %cst_13 {dimension_numbers = #tpu.dot_dimension_numbers<[1], [0], [0], [1], [0, 0, 1, 1], [], []>} : vector<16x128xf32>, vector<128x128xf32>, vector<16x128xf32> -> vector<16x128xf32>
    %c0_14 = arith.constant 0 : index
    %c0_15 = arith.constant 0 : index
    %68 = vector.load %arg6[%c0_14, %c0_15] : memref<1x128xf32, #tpu.memory_space<vmem>>, vector<1x128xf32>
    %69 = vector.broadcast %68 : vector<1x128xf32> to vector<16x128xf32>
    %70 = arith.addf %67, %69 : vector<16x128xf32>
    %c0_16 = arith.constant 0 : index
    %c0_17 = arith.constant 0 : index
    %71 = vector.load %arg7[%c0_16, %c0_17] : memref<128x128xf32, #tpu.memory_space<vmem>>, vector<128x128xf32>
    %cst_18 = arith.constant dense<0.000000e+00> : vector<16x128xf32>
    %72 = tpu.matmul %70, %71, %cst_18 {dimension_numbers = #tpu.dot_dimension_numbers<[1], [0], [0], [1], [0, 0, 1, 1], [], []>} : vector<16x128xf32>, vector<128x128xf32>, vector<16x128xf32> -> vector<16x128xf32>
    %c0_19 = arith.constant 0 : index
    %c0_20 = arith.constant 0 : index
    %73 = vector.load %arg8[%c0_19, %c0_20] : memref<1x128xf32, #tpu.memory_space<vmem>>, vector<1x128xf32>
    %74 = vector.broadcast %73 : vector<1x128xf32> to vector<16x128xf32>
    %75 = arith.addf %72, %74 : vector<16x128xf32>
    %76 = arith.addf %75, %2 : vector<16x128xf32>
    %c0_21 = arith.constant 0 : index
    %c0_22 = arith.constant 0 : index
    %77 = vector.load %arg9[%c0_21, %c0_22] : memref<1x128xf32, #tpu.memory_space<vmem>>, vector<1x128xf32>
    %c0_23 = arith.constant 0 : index
    %c0_24 = arith.constant 0 : index
    %78 = vector.load %arg10[%c0_23, %c0_24] : memref<1x128xf32, #tpu.memory_space<vmem>>, vector<1x128xf32>
    %cst_25 = arith.constant dense<0.000000e+00> : vector<16xf32>
    %79 = vector.multi_reduction <add>, %76, %cst_25 [1] : vector<16x128xf32> to vector<16xf32>
    %80 = vector.shape_cast %79 : vector<16xf32> to vector<16x1xf32>
    %cst_26 = arith.constant 1.280000e+02 : f32
    %81 = vector.broadcast %cst_26 : f32 to vector<16x1xf32>
    %82 = arith.divf %80, %81 : vector<16x1xf32>
    %83 = vector.broadcast %82 : vector<16x1xf32> to vector<16x128xf32>
    %84 = arith.subf %76, %83 : vector<16x128xf32>
    %85 = arith.mulf %84, %84 : vector<16x128xf32>
    %cst_27 = arith.constant dense<0.000000e+00> : vector<16xf32>
    %86 = vector.multi_reduction <add>, %85, %cst_27 [1] : vector<16x128xf32> to vector<16xf32>
    %87 = vector.shape_cast %86 : vector<16xf32> to vector<16x1xf32>
    %cst_28 = arith.constant 1.280000e+02 : f32
    %88 = vector.broadcast %cst_28 : f32 to vector<16x1xf32>
    %89 = arith.divf %87, %88 : vector<16x1xf32>
    %cst_29 = arith.constant 9.99999974E-6 : f32
    %90 = vector.broadcast %cst_29 : f32 to vector<16x1xf32>
    %91 = arith.addf %89, %90 : vector<16x1xf32>
    %92 = math.rsqrt %91 : vector<16x1xf32>
    %93 = vector.broadcast %92 : vector<16x1xf32> to vector<16x128xf32>
    %94 = arith.mulf %84, %93 : vector<16x128xf32>
    %95 = vector.broadcast %77 : vector<1x128xf32> to vector<16x128xf32>
    %96 = arith.mulf %94, %95 : vector<16x128xf32>
    %97 = vector.broadcast %78 : vector<1x128xf32> to vector<16x128xf32>
    %98 = arith.addf %96, %97 : vector<16x128xf32>
    %c0_30 = arith.constant 0 : index
    %c0_31 = arith.constant 0 : index
    %99 = vector.load %arg11[%c0_30, %c0_31] : memref<128x128xf32, #tpu.memory_space<vmem>>, vector<128x128xf32>
    %cst_32 = arith.constant dense<0.000000e+00> : vector<16x128xf32>
    %100 = tpu.matmul %98, %99, %cst_32 {dimension_numbers = #tpu.dot_dimension_numbers<[1], [0], [0], [1], [0, 0, 1, 1], [], []>} : vector<16x128xf32>, vector<128x128xf32>, vector<16x128xf32> -> vector<16x128xf32>
    %c0_33 = arith.constant 0 : index
    %c0_34 = arith.constant 0 : index
    %101 = vector.load %arg12[%c0_33, %c0_34] : memref<1x128xf32, #tpu.memory_space<vmem>>, vector<1x128xf32>
    %102 = vector.broadcast %101 : vector<1x128xf32> to vector<16x128xf32>
    %103 = arith.addf %100, %102 : vector<16x128xf32>
    %cst_35 = arith.constant 5.000000e-01 : f32
    %104 = vector.broadcast %cst_35 : f32 to vector<16x128xf32>
    %105 = arith.mulf %104, %103 : vector<16x128xf32>
    %cst_36 = arith.constant 0.707106769 : f32
    %106 = vector.broadcast %cst_36 : f32 to vector<16x128xf32>
    %107 = arith.mulf %103, %106 : vector<16x128xf32>
    %cst_37 = arith.constant 0.000000e+00 : f32
    %108 = vector.broadcast %cst_37 : f32 to vector<16x128xf32>
    %109 = arith.cmpf oge, %107, %108 : vector<16x128xf32>
    %cst_38 = arith.constant 1.000000e+00 : f32
    %cst_39 = arith.constant -1.000000e+00 : f32
    %110 = vector.broadcast %cst_38 : f32 to vector<16x128xf32>
    %111 = vector.broadcast %cst_39 : f32 to vector<16x128xf32>
    %112 = arith.select %109, %110, %111 : vector<16x128xi1>, vector<16x128xf32>
    %113 = math.absf %107 : vector<16x128xf32>
    %cst_40 = arith.constant 0.327591091 : f32
    %114 = vector.broadcast %cst_40 : f32 to vector<16x128xf32>
    %115 = arith.mulf %114, %113 : vector<16x128xf32>
    %cst_41 = arith.constant 1.000000e+00 : f32
    %116 = vector.broadcast %cst_41 : f32 to vector<16x128xf32>
    %117 = arith.addf %116, %115 : vector<16x128xf32>
    %cst_42 = arith.constant 1.000000e+00 : f32
    %118 = vector.broadcast %cst_42 : f32 to vector<16x128xf32>
    %119 = arith.divf %118, %117 : vector<16x128xf32>
    %cst_43 = arith.constant 1.06140542 : f32
    %120 = vector.broadcast %cst_43 : f32 to vector<16x128xf32>
    %121 = arith.mulf %120, %119 : vector<16x128xf32>
    %cst_44 = arith.constant -1.45315206 : f32
    %122 = vector.broadcast %cst_44 : f32 to vector<16x128xf32>
    %123 = arith.addf %121, %122 : vector<16x128xf32>
    %124 = arith.mulf %123, %119 : vector<16x128xf32>
    %cst_45 = arith.constant 1.42141378 : f32
    %125 = vector.broadcast %cst_45 : f32 to vector<16x128xf32>
    %126 = arith.addf %124, %125 : vector<16x128xf32>
    %127 = arith.mulf %126, %119 : vector<16x128xf32>
    %cst_46 = arith.constant -0.284496725 : f32
    %128 = vector.broadcast %cst_46 : f32 to vector<16x128xf32>
    %129 = arith.addf %127, %128 : vector<16x128xf32>
    %130 = arith.mulf %129, %119 : vector<16x128xf32>
    %cst_47 = arith.constant 0.254829586 : f32
    %131 = vector.broadcast %cst_47 : f32 to vector<16x128xf32>
    %132 = arith.addf %130, %131 : vector<16x128xf32>
    %133 = arith.mulf %132, %119 : vector<16x128xf32>
    %cst_48 = arith.constant 0.000000e+00 : f32
    %134 = vector.broadcast %cst_48 : f32 to vector<16x128xf32>
    %135 = arith.subf %134, %113 : vector<16x128xf32>
    %136 = arith.mulf %135, %113 : vector<16x128xf32>
    %137 = math.exp %136 : vector<16x128xf32>
    %138 = arith.mulf %133, %137 : vector<16x128xf32>
    %cst_49 = arith.constant 1.000000e+00 : f32
    %139 = vector.broadcast %cst_49 : f32 to vector<16x128xf32>
    %140 = arith.subf %139, %138 : vector<16x128xf32>
    %141 = arith.mulf %112, %140 : vector<16x128xf32>
    %cst_50 = arith.constant 1.000000e+00 : f32
    %142 = vector.broadcast %cst_50 : f32 to vector<16x128xf32>
    %143 = arith.addf %142, %141 : vector<16x128xf32>
    %144 = arith.mulf %105, %143 : vector<16x128xf32>
    %c0_51 = arith.constant 0 : index
    %c0_52 = arith.constant 0 : index
    %145 = vector.load %arg13[%c0_51, %c0_52] : memref<128x128xf32, #tpu.memory_space<vmem>>, vector<128x128xf32>
    %cst_53 = arith.constant dense<0.000000e+00> : vector<16x128xf32>
    %146 = tpu.matmul %144, %145, %cst_53 {dimension_numbers = #tpu.dot_dimension_numbers<[1], [0], [0], [1], [0, 0, 1, 1], [], []>} : vector<16x128xf32>, vector<128x128xf32>, vector<16x128xf32> -> vector<16x128xf32>
    %c0_54 = arith.constant 0 : index
    %c0_55 = arith.constant 0 : index
    %147 = vector.load %arg14[%c0_54, %c0_55] : memref<1x128xf32, #tpu.memory_space<vmem>>, vector<1x128xf32>
    %148 = vector.broadcast %147 : vector<1x128xf32> to vector<16x128xf32>
    %149 = arith.addf %146, %148 : vector<16x128xf32>
    %150 = arith.addf %149, %98 : vector<16x128xf32>
    %c0_56 = arith.constant 0 : index
    %c0_57 = arith.constant 0 : index
    %151 = vector.load %arg15[%c0_56, %c0_57] : memref<1x128xf32, #tpu.memory_space<vmem>>, vector<1x128xf32>
    %c0_58 = arith.constant 0 : index
    %c0_59 = arith.constant 0 : index
    %152 = vector.load %arg16[%c0_58, %c0_59] : memref<1x128xf32, #tpu.memory_space<vmem>>, vector<1x128xf32>
    %cst_60 = arith.constant dense<0.000000e+00> : vector<16xf32>
    %153 = vector.multi_reduction <add>, %150, %cst_60 [1] : vector<16x128xf32> to vector<16xf32>
    %154 = vector.shape_cast %153 : vector<16xf32> to vector<16x1xf32>
    %cst_61 = arith.constant 1.280000e+02 : f32
    %155 = vector.broadcast %cst_61 : f32 to vector<16x1xf32>
    %156 = arith.divf %154, %155 : vector<16x1xf32>
    %157 = vector.broadcast %156 : vector<16x1xf32> to vector<16x128xf32>
    %158 = arith.subf %150, %157 : vector<16x128xf32>
    %159 = arith.mulf %158, %158 : vector<16x128xf32>
    %cst_62 = arith.constant dense<0.000000e+00> : vector<16xf32>
    %160 = vector.multi_reduction <add>, %159, %cst_62 [1] : vector<16x128xf32> to vector<16xf32>
    %161 = vector.shape_cast %160 : vector<16xf32> to vector<16x1xf32>
    %cst_63 = arith.constant 1.280000e+02 : f32
    %162 = vector.broadcast %cst_63 : f32 to vector<16x1xf32>
    %163 = arith.divf %161, %162 : vector<16x1xf32>
    %cst_64 = arith.constant 9.99999974E-6 : f32
    %164 = vector.broadcast %cst_64 : f32 to vector<16x1xf32>
    %165 = arith.addf %163, %164 : vector<16x1xf32>
    %166 = math.rsqrt %165 : vector<16x1xf32>
    %167 = vector.broadcast %166 : vector<16x1xf32> to vector<16x128xf32>
    %168 = arith.mulf %158, %167 : vector<16x128xf32>
    %169 = vector.broadcast %151 : vector<1x128xf32> to vector<16x128xf32>
    %170 = arith.mulf %168, %169 : vector<16x128xf32>
    %171 = vector.broadcast %152 : vector<1x128xf32> to vector<16x128xf32>
    %172 = arith.addf %170, %171 : vector<16x128xf32>
    %c0_65 = arith.constant 0 : index
    %c0_66 = arith.constant 0 : index
    %173 = vector.load %arg17[%c0_65, %c0_66] : memref<16x128xf32, #tpu.memory_space<vmem>>, vector<16x128xf32>
    tpu.vector_store %arg17[%c0_65, %c0_66], %172 {strides = array<i32>} : memref<16x128xf32, #tpu.memory_space<vmem>>, vector<16x128xf32>,
    return
  }
  func.func @transform_0(%arg0: i32, %arg1: memref<2xi32, #tpu.memory_space<smem>>) -> (i32, i32) {
    %c0_i32 = arith.constant 0 : i32
    %c0_i32_0 = arith.constant 0 : i32
    return %arg0, %c0_i32 : i32, i32
  }
  func.func @transform_1(%arg0: i32, %arg1: memref<2xi32, #tpu.memory_space<smem>>) -> (i32, i32) {
    %c0_i32 = arith.constant 0 : i32
    %c0_i32_0 = arith.constant 0 : i32
    %c0_i32_1 = arith.constant 0 : i32
    return %c0_i32, %c0_i32_0 : i32, i32
  }
  func.func @transform_2(%arg0: i32, %arg1: memref<2xi32, #tpu.memory_space<smem>>) -> (i32, i32) {
    %c0_i32 = arith.constant 0 : i32
    %c0_i32_0 = arith.constant 0 : i32
    %c0_i32_1 = arith.constant 0 : i32
    return %c0_i32, %c0_i32_0 : i32, i32
  }
  func.func @transform_3(%arg0: i32, %arg1: memref<2xi32, #tpu.memory_space<smem>>) -> (i32, i32) {
    %c0_i32 = arith.constant 0 : i32
    %c0_i32_0 = arith.constant 0 : i32
    %c0_i32_1 = arith.constant 0 : i32
    return %c0_i32, %c0_i32_0 : i32, i32
  }
  func.func @transform_4(%arg0: i32, %arg1: memref<2xi32, #tpu.memory_space<smem>>) -> (i32, i32) {
    %c0_i32 = arith.constant 0 : i32
    %c0_i32_0 = arith.constant 0 : i32
    %c0_i32_1 = arith.constant 0 : i32
    return %c0_i32, %c0_i32_0 : i32, i32
  }
  func.func @transform_5(%arg0: i32, %arg1: memref<2xi32, #tpu.memory_space<smem>>) -> (i32, i32) {
    %c0_i32 = arith.constant 0 : i32
    %c0_i32_0 = arith.constant 0 : i32
    %c0_i32_1 = arith.constant 0 : i32
    return %c0_i32, %c0_i32_0 : i32, i32
  }
  func.func @transform_6(%arg0: i32, %arg1: memref<2xi32, #tpu.memory_space<smem>>) -> (i32, i32) {
    %c0_i32 = arith.constant 0 : i32
    %c0_i32_0 = arith.constant 0 : i32
    %c0_i32_1 = arith.constant 0 : i32
    return %c0_i32, %c0_i32_0 : i32, i32
  }
  func.func @transform_7(%arg0: i32, %arg1: memref<2xi32, #tpu.memory_space<smem>>) -> (i32, i32) {
    %c0_i32 = arith.constant 0 : i32
    %c0_i32_0 = arith.constant 0 : i32
    %c0_i32_1 = arith.constant 0 : i32
    return %c0_i32, %c0_i32_0 : i32, i32
  }
  func.func @transform_8(%arg0: i32, %arg1: memref<2xi32, #tpu.memory_space<smem>>) -> (i32, i32) {
    %c0_i32 = arith.constant 0 : i32
    %c0_i32_0 = arith.constant 0 : i32
    %c0_i32_1 = arith.constant 0 : i32
    return %c0_i32, %c0_i32_0 : i32, i32
  }
  func.func @transform_9(%arg0: i32, %arg1: memref<2xi32, #tpu.memory_space<smem>>) -> (i32, i32) {
    %c0_i32 = arith.constant 0 : i32
    %c0_i32_0 = arith.constant 0 : i32
    %c0_i32_1 = arith.constant 0 : i32
    return %c0_i32, %c0_i32_0 : i32, i32
  }
  func.func @transform_10(%arg0: i32, %arg1: memref<2xi32, #tpu.memory_space<smem>>) -> (i32, i32) {
    %c0_i32 = arith.constant 0 : i32
    %c0_i32_0 = arith.constant 0 : i32
    %c0_i32_1 = arith.constant 0 : i32
    return %c0_i32, %c0_i32_0 : i32, i32
  }
  func.func @transform_11(%arg0: i32, %arg1: memref<2xi32, #tpu.memory_space<smem>>) -> (i32, i32) {
    %c0_i32 = arith.constant 0 : i32
    %c0_i32_0 = arith.constant 0 : i32
    %c0_i32_1 = arith.constant 0 : i32
    return %c0_i32, %c0_i32_0 : i32, i32
  }
  func.func @transform_12(%arg0: i32, %arg1: memref<2xi32, #tpu.memory_space<smem>>) -> (i32, i32) {
    %c0_i32 = arith.constant 0 : i32
    %c0_i32_0 = arith.constant 0 : i32
    %c0_i32_1 = arith.constant 0 : i32
    return %c0_i32, %c0_i32_0 : i32, i32
  }
  func.func @transform_13(%arg0: i32, %arg1: memref<2xi32, #tpu.memory_space<smem>>) -> (i32, i32) {
    %c0_i32 = arith.constant 0 : i32
    %c0_i32_0 = arith.constant 0 : i32
    %c0_i32_1 = arith.constant 0 : i32
    return %c0_i32, %c0_i32_0 : i32, i32
  }
  func.func @transform_14(%arg0: i32, %arg1: memref<2xi32, #tpu.memory_space<smem>>) -> (i32, i32) {
    %c0_i32 = arith.constant 0 : i32
    %c0_i32_0 = arith.constant 0 : i32
    %c0_i32_1 = arith.constant 0 : i32
    return %c0_i32, %c0_i32_0 : i32, i32
  }
  func.func @transform_15(%arg0: i32, %arg1: memref<2xi32, #tpu.memory_space<smem>>) -> (i32, i32) {
    %c0_i32 = arith.constant 0 : i32
    %c0_i32_0 = arith.constant 0 : i32
    return %arg0, %c0_i32 : i32, i32
  }
}

module attributes {stable_mosaic.version = 11 : i64} {
  func.func @bert_layer_kernel(%arg0: i32, %arg1: memref<2xi32, #tpu.memory_space<smem>>, %arg2: memref<16x128xf32, #tpu.memory_space<vmem>>, %arg3: memref<128x384xf32, #tpu.memory_space<vmem>>, %arg4: memref<1x384xf32, #tpu.memory_space<vmem>>, %arg5: memref<128x128xf32, #tpu.memory_space<vmem>>, %arg6: memref<1x128xf32, #tpu.memory_space<vmem>>, %arg7: memref<128x128xf32, #tpu.memory_space<vmem>>, %arg8: memref<1x128xf32, #tpu.memory_space<vmem>>, %arg9: memref<1x128xf32, #tpu.memory_space<vmem>>, %arg10: memref<1x128xf32, #tpu.memory_space<vmem>>, %arg11: memref<128x128xf32, #tpu.memory_space<vmem>>, %arg12: memref<1x128xf32, #tpu.memory_space<vmem>>, %arg13: memref<128x128xf32, #tpu.memory_space<vmem>>, %arg14: memref<1x128xf32, #tpu.memory_space<vmem>>, %arg15: memref<1x128xf32, #tpu.memory_space<vmem>>, %arg16: memref<1x128xf32, #tpu.memory_space<vmem>>, %arg17: memref<16x128xf32, #tpu.memory_space<vmem>>) attributes {dimension_semantics = [#tpu.dimension_semantics<parallel>], iteration_bounds = array<i64: 2>, scalar_prefetch = 1 : i64, scratch_operands = 0 : i64, tpu.core_type = #tpu.core_type<tc>, window_params = [{transform_indices = @transform_0, window_bounds = array<i64: 16, 128>}, {pipeline_mode = #tpu.pipeline_mode<synchronous>, transform_indices = @transform_1, window_bounds = array<i64: 128, 384>}, {pipeline_mode = #tpu.pipeline_mode<synchronous>, transform_indices = @transform_2, window_bounds = array<i64: 1, 384>}, {pipeline_mode = #tpu.pipeline_mode<synchronous>, transform_indices = @transform_3, window_bounds = array<i64: 128, 128>}, {pipeline_mode = #tpu.pipeline_mode<synchronous>, transform_indices = @transform_4, window_bounds = array<i64: 1, 128>}, {pipeline_mode = #tpu.pipeline_mode<synchronous>, transform_indices = @transform_5, window_bounds = array<i64: 128, 128>}, {pipeline_mode = #tpu.pipeline_mode<synchronous>, transform_indices = @transform_6, window_bounds = array<i64: 1, 128>}, {pipeline_mode = #tpu.pipeline_mode<synchronous>, transform_indices = @transform_7, window_bounds = array<i64: 1, 128>}, {pipeline_mode = #tpu.pipeline_mode<synchronous>, transform_indices = @transform_8, window_bounds = array<i64: 1, 128>}, {pipeline_mode = #tpu.pipeline_mode<synchronous>, transform_indices = @transform_9, window_bounds = array<i64: 128, 128>}, {pipeline_mode = #tpu.pipeline_mode<synchronous>, transform_indices = @transform_10, window_bounds = array<i64: 1, 128>}, {pipeline_mode = #tpu.pipeline_mode<synchronous>, transform_indices = @transform_11, window_bounds = array<i64: 128, 128>}, {pipeline_mode = #tpu.pipeline_mode<synchronous>, transform_indices = @transform_12, window_bounds = array<i64: 1, 128>}, {pipeline_mode = #tpu.pipeline_mode<synchronous>, transform_indices = @transform_13, window_bounds = array<i64: 1, 128>}, {pipeline_mode = #tpu.pipeline_mode<synchronous>, transform_indices = @transform_14, window_bounds = array<i64: 1, 128>}, {transform_indices = @transform_15, window_bounds = array<i64: 16, 128>}]} {
    %0 = arith.index_cast %arg0 : i32 to index
    %1 = memref.load %arg1[%0] : memref<2xi32, #tpu.memory_space<smem>>
    %c0 = arith.constant 0 : index
    %c0_0 = arith.constant 0 : index
    %2 = vector.load %arg2[%c0, %c0_0] : memref<16x128xf32, #tpu.memory_space<vmem>>, vector<16x128xf32>
    %c0_1 = arith.constant 0 : index
    %c0_2 = arith.constant 0 : index
    %3 = vector.load %arg3[%c0_1, %c0_2] : memref<128x384xf32, #tpu.memory_space<vmem>>, vector<128x384xf32>
    %cst = arith.constant dense<0.000000e+00> : vector<16x384xf32>
    %4 = tpu.matmul %2, %3, %cst {dimension_numbers = #tpu.dot_dimension_numbers<[1], [0], [0], [1], [0, 0, 1, 1], [], []>} : vector<16x128xf32>, vector<128x384xf32>, vector<16x384xf32> -> vector<16x384xf32>
    %c0_3 = arith.constant 0 : index
    %c0_4 = arith.constant 0 : index
    %5 = vector.load %arg4[%c0_3, %c0_4] : memref<1x384xf32, #tpu.memory_space<vmem>>, vector<1x384xf32>
    %6 = vector.broadcast %5 : vector<1x384xf32> to vector<16x384xf32>
    %7 = arith.addf %4, %6 : vector<16x384xf32>
    %8 = vector.extract_strided_slice %7 {offsets = [0, 0], sizes = [16, 128], strides = [1, 1]} : vector<16x384xf32> to vector<16x128xf32>
    %cst_5 = arith.constant 0.176776692 : f32
    %9 = vector.broadcast %cst_5 : f32 to vector<16x128xf32>
    %10 = arith.mulf %8, %9 : vector<16x128xf32>
    %11 = vector.extract_strided_slice %7 {offsets = [0, 128], sizes = [16, 128], strides = [1, 1]} : vector<16x384xf32> to vector<16x128xf32>
    %12 = vector.extract_strided_slice %7 {offsets = [0, 256], sizes = [16, 128], strides = [1, 1]} : vector<16x384xf32> to vector<16x128xf32>
    %13 = vector.extract_strided_slice %10 {offsets = [0, 0], sizes = [16, 32], strides = [1, 1]} : vector<16x128xf32> to vector<16x32xf32>
    %14 = vector.extract_strided_slice %10 {offsets = [0, 32], sizes = [16, 32], strides = [1, 1]} : vector<16x128xf32> to vector<16x32xf32>
    %15 = vector.extract_strided_slice %10 {offsets = [0, 64], sizes = [16, 32], strides = [1, 1]} : vector<16x128xf32> to vector<16x32xf32>
    %16 = vector.extract_strided_slice %10 {offsets = [0, 96], sizes = [16, 32], strides = [1, 1]} : vector<16x128xf32> to vector<16x32xf32>
    %17 = vector.shape_cast %13 : vector<16x32xf32> to vector<1x16x32xf32>
    %18 = vector.shape_cast %14 : vector<16x32xf32> to vector<1x16x32xf32>
    %19 = vector.shape_cast %15 : vector<16x32xf32> to vector<1x16x32xf32>
    %20 = vector.shape_cast %16 : vector<16x32xf32> to vector<1x16x32xf32>
    %21 = tpu.concatenate %17, %18, %19, %20 in 0 : vector<1x16x32xf32>, vector<1x16x32xf32>, vector<1x16x32xf32>, vector<1x16x32xf32> -> vector<4x16x32xf32>
    %22 = vector.extract_strided_slice %11 {offsets = [0, 0], sizes = [16, 32], strides = [1, 1]} : vector<16x128xf32> to vector<16x32xf32>
    %23 = vector.extract_strided_slice %11 {offsets = [0, 32], sizes = [16, 32], strides = [1, 1]} : vector<16x128xf32> to vector<16x32xf32>
    %24 = vector.extract_strided_slice %11 {offsets = [0, 64], sizes = [16, 32], strides = [1, 1]} : vector<16x128xf32> to vector<16x32xf32>
    %25 = vector.extract_strided_slice %11 {offsets = [0, 96], sizes = [16, 32], strides = [1, 1]} : vector<16x128xf32> to vector<16x32xf32>
    %26 = vector.shape_cast %22 : vector<16x32xf32> to vector<1x16x32xf32>
    %27 = vector.shape_cast %23 : vector<16x32xf32> to vector<1x16x32xf32>
    %28 = vector.shape_cast %24 : vector<16x32xf32> to vector<1x16x32xf32>
    %29 = vector.shape_cast %25 : vector<16x32xf32> to vector<1x16x32xf32>
    %30 = tpu.concatenate %26, %27, %28, %29 in 0 : vector<1x16x32xf32>, vector<1x16x32xf32>, vector<1x16x32xf32>, vector<1x16x32xf32> -> vector<4x16x32xf32>
    %31 = vector.extract_strided_slice %12 {offsets = [0, 0], sizes = [16, 32], strides = [1, 1]} : vector<16x128xf32> to vector<16x32xf32>
    %32 = vector.extract_strided_slice %12 {offsets = [0, 32], sizes = [16, 32], strides = [1, 1]} : vector<16x128xf32> to vector<16x32xf32>
    %33 = vector.extract_strided_slice %12 {offsets = [0, 64], sizes = [16, 32], strides = [1, 1]} : vector<16x128xf32> to vector<16x32xf32>
    %34 = vector.extract_strided_slice %12 {offsets = [0, 96], sizes = [16, 32], strides = [1, 1]} : vector<16x128xf32> to vector<16x32xf32>
    %35 = vector.shape_cast %31 : vector<16x32xf32> to vector<1x16x32xf32>
    %36 = vector.shape_cast %32 : vector<16x32xf32> to vector<1x16x32xf32>
    %37 = vector.shape_cast %33 : vector<16x32xf32> to vector<1x16x32xf32>
    %38 = vector.shape_cast %34 : vector<16x32xf32> to vector<1x16x32xf32>
    %39 = tpu.concatenate %35, %36, %37, %38 in 0 : vector<1x16x32xf32>, vector<1x16x32xf32>, vector<1x16x32xf32>, vector<1x16x32xf32> -> vector<4x16x32xf32>
    %cst_6 = arith.constant dense<0.000000e+00> : vector<4x16x16xf32>
    %40 = tpu.matmul %21, %30, %cst_6 {dimension_numbers = #tpu.dot_dimension_numbers<[2], [2], [1], [1], [0, 0, 0, 1, 1, 1], [0], [0]>} : vector<4x16x32xf32>, vector<4x16x32xf32>, vector<4x16x16xf32> -> vector<4x16x16xf32>
    %41 = tpu.iota {dimensions = array<i32: 2>} : vector<4x16x16xi32>
    %42 = vector.broadcast %1 : i32 to vector<4x16x16xi32>
    %43 = arith.cmpi sge, %41, %42 : vector<4x16x16xi32>
    %cst_7 = arith.constant -1.000000e+30 : f32
    %44 = vector.broadcast %cst_7 : f32 to vector<4x16x16xf32>
    %45 = arith.select %43, %44, %40 : vector<4x16x16xi1>, vector<4x16x16xf32>
    %cst_8 = arith.constant dense<0xFF800000> : vector<4x16xf32>
    %46 = vector.multi_reduction <maximumf>, %45, %cst_8 [2] : vector<4x16x16xf32> to vector<4x16xf32>
    %47 = vector.shape_cast %46 : vector<4x16xf32> to vector<4x16x1xf32>
    %48 = vector.broadcast %47 : vector<4x16x1xf32> to vector<4x16x16xf32>
    %49 = arith.subf %45, %48 : vector<4x16x16xf32>
    %50 = math.exp %49 : vector<4x16x16xf32>
    %cst_9 = arith.constant dense<0.000000e+00> : vector<4x16xf32>
    %51 = vector.multi_reduction <add>, %50, %cst_9 [2] : vector<4x16x16xf32> to vector<4x16xf32>
    %52 = vector.shape_cast %51 : vector<4x16xf32> to vector<4x16x1xf32>
    %53 = tpu.reciprocal %52 {approx = true} : vector<4x16x1xf32> -> vector<4x16x1xf32>
    %54 = vector.broadcast %53 : vector<4x16x1xf32> to vector<4x16x16xf32>
    %55 = arith.mulf %50, %54 : vector<4x16x16xf32>
    %cst_10 = arith.constant dense<0.000000e+00> : vector<4x16x32xf32>
    %56 = tpu.matmul %55, %39, %cst_10 {dimension_numbers = #tpu.dot_dimension_numbers<[2], [1], [1], [2], [0, 0, 0, 1, 1, 2], [0], [0]>} : vector<4x16x16xf32>, vector<4x16x32xf32>, vector<4x16x32xf32> -> vector<4x16x32xf32>
    %57 = vector.extract_strided_slice %56 {offsets = [0, 0, 0], sizes = [1, 16, 32], strides = [1, 1, 1]} : vector<4x16x32xf32> to vector<1x16x32xf32>
    %58 = vector.shape_cast %57 : vector<1x16x32xf32> to vector<16x32xf32>
    %59 = vector.extract_strided_slice %56 {offsets = [1, 0, 0], sizes = [1, 16, 32], strides = [1, 1, 1]} : vector<4x16x32xf32> to vector<1x16x32xf32>
    %60 = vector.shape_cast %59 : vector<1x16x32xf32> to vector<16x32xf32>
    %61 = vector.extract_strided_slice %56 {offsets = [2, 0, 0], sizes = [1, 16, 32], strides = [1, 1, 1]} : vector<4x16x32xf32> to vector<1x16x32xf32>
    %62 = vector.shape_cast %61 : vector<1x16x32xf32> to vector<16x32xf32>
    %63 = vector.extract_strided_slice %56 {offsets = [3, 0, 0], sizes = [1, 16, 32], strides = [1, 1, 1]} : vector<4x16x32xf32> to vector<1x16x32xf32>
    %64 = vector.shape_cast %63 : vector<1x16x32xf32> to vector<16x32xf32>
    %65 = tpu.concatenate %58, %60, %62, %64 in 1 : vector<16x32xf32>, vector<16x32xf32>, vector<16x32xf32>, vector<16x32xf32> -> vector<16x128xf32>
    %c0_11 = arith.constant 0 : index
    %c0_12 = arith.constant 0 : index
    %66 = vector.load %arg5[%c0_11, %c0_12] : memref<128x128xf32, #tpu.memory_space<vmem>>, vector<128x128xf32>
    %cst_13 = arith.constant dense<0.000000e+00> : vector<16x128xf32>
    %67 = tpu.matmul %65, %66, %cst_13 {dimension_numbers = #tpu.dot_dimension_numbers<[1], [0], [0], [1], [0, 0, 1, 1], [], []>} : vector<16x128xf32>, vector<128x128xf32>, vector<16x128xf32> -> vector<16x128xf32>
    %c0_14 = arith.constant 0 : index
    %c0_15 = arith.constant 0 : index
    %68 = vector.load %arg6[%c0_14, %c0_15] : memref<1x128xf32, #tpu.memory_space<vmem>>, vector<1x128xf32>
    %69 = vector.broadcast %68 : vector<1x128xf32> to vector<16x128xf32>
    %70 = arith.addf %67, %69 : vector<16x128xf32>
    %c0_16 = arith.constant 0 : index
    %c0_17 = arith.constant 0 : index
    %71 = vector.load %arg7[%c0_16, %c0_17] : memref<128x128xf32, #tpu.memory_space<vmem>>, vector<128x128xf32>
    %cst_18 = arith.constant dense<0.000000e+00> : vector<16x128xf32>
    %72 = tpu.matmul %70, %71, %cst_18 {dimension_numbers = #tpu.dot_dimension_numbers<[1], [0], [0], [1], [0, 0, 1, 1], [], []>} : vector<16x128xf32>, vector<128x128xf32>, vector<16x128xf32> -> vector<16x128xf32>
    %c0_19 = arith.constant 0 : index
    %c0_20 = arith.constant 0 : index
    %73 = vector.load %arg8[%c0_19, %c0_20] : memref<1x128xf32, #tpu.memory_space<vmem>>, vector<1x128xf32>
    %74 = vector.broadcast %73 : vector<1x128xf32> to vector<16x128xf32>
    %75 = arith.addf %72, %74 : vector<16x128xf32>
    %76 = arith.addf %75, %2 : vector<16x128xf32>
    %c0_21 = arith.constant 0 : index
    %c0_22 = arith.constant 0 : index
    %77 = vector.load %arg9[%c0_21, %c0_22] : memref<1x128xf32, #tpu.memory_space<vmem>>, vector<1x128xf32>
    %c0_23 = arith.constant 0 : index
    %c0_24 = arith.constant 0 : index
    %78 = vector.load %arg10[%c0_23, %c0_24] : memref<1x128xf32, #tpu.memory_space<vmem>>, vector<1x128xf32>
    %cst_25 = arith.constant dense<0.000000e+00> : vector<16xf32>
    %79 = vector.multi_reduction <add>, %76, %cst_25 [1] : vector<16x128xf32> to vector<16xf32>
    %80 = vector.shape_cast %79 : vector<16xf32> to vector<16x1xf32>
    %cst_26 = arith.constant 1.280000e+02 : f32
    %81 = vector.broadcast %cst_26 : f32 to vector<16x1xf32>
    %82 = arith.divf %80, %81 : vector<16x1xf32>
    %83 = vector.broadcast %82 : vector<16x1xf32> to vector<16x128xf32>
    %84 = arith.subf %76, %83 : vector<16x128xf32>
    %85 = arith.mulf %84, %84 : vector<16x128xf32>
    %cst_27 = arith.constant dense<0.000000e+00> : vector<16xf32>
    %86 = vector.multi_reduction <add>, %85, %cst_27 [1] : vector<16x128xf32> to vector<16xf32>
    %87 = vector.shape_cast %86 : vector<16xf32> to vector<16x1xf32>
    %cst_28 = arith.constant 1.280000e+02 : f32
    %88 = vector.broadcast %cst_28 : f32 to vector<16x1xf32>
    %89 = arith.divf %87, %88 : vector<16x1xf32>
    %cst_29 = arith.constant 9.99999974E-6 : f32
    %90 = vector.broadcast %cst_29 : f32 to vector<16x1xf32>
    %91 = arith.addf %89, %90 : vector<16x1xf32>
    %92 = math.rsqrt %91 : vector<16x1xf32>
    %93 = vector.broadcast %92 : vector<16x1xf32> to vector<16x128xf32>
    %94 = arith.mulf %84, %93 : vector<16x128xf32>
    %95 = vector.broadcast %77 : vector<1x128xf32> to vector<16x128xf32>
    %96 = arith.mulf %94, %95 : vector<16x128xf32>
    %97 = vector.broadcast %78 : vector<1x128xf32> to vector<16x128xf32>
    %98 = arith.addf %96, %97 : vector<16x128xf32>
    %c0_30 = arith.constant 0 : index
    %c0_31 = arith.constant 0 : index
    %99 = vector.load %arg11[%c0_30, %c0_31] : memref<128x128xf32, #tpu.memory_space<vmem>>, vector<128x128xf32>
    %cst_32 = arith.constant dense<0.000000e+00> : vector<16x128xf32>
    %100 = tpu.matmul %98, %99, %cst_32 {dimension_numbers = #tpu.dot_dimension_numbers<[1], [0], [0], [1], [0, 0, 1, 1], [], []>} : vector<16x128xf32>, vector<128x128xf32>, vector<16x128xf32> -> vector<16x128xf32>
    %c0_33 = arith.constant 0 : index
    %c0_34 = arith.constant 0 : index
    %101 = vector.load %arg12[%c0_33, %c0_34] : memref<1x128xf32, #tpu.memory_space<vmem>>, vector<1x128xf32>
    %102 = vector.broadcast %101 : vector<1x128xf32> to vector<16x128xf32>
    %103 = arith.addf %100, %102 : vector<16x128xf32>
    %cst_35 = arith.constant 5.000000e-01 : f32
    %104 = vector.broadcast %cst_35 : f32 to vector<16x128xf32>
    %105 = arith.mulf %104, %103 : vector<16x128xf32>
    %cst_36 = arith.constant 0.707106769 : f32
    %106 = vector.broadcast %cst_36 : f32 to vector<16x128xf32>
    %107 = arith.mulf %103, %106 : vector<16x128xf32>
    %cst_37 = arith.constant 0.000000e+00 : f32
    %108 = vector.broadcast %cst_37 : f32 to vector<16x128xf32>
    %109 = arith.cmpf oge, %107, %108 : vector<16x128xf32>
    %cst_38 = arith.constant 1.000000e+00 : f32
    %cst_39 = arith.constant -1.000000e+00 : f32
    %110 = vector.broadcast %cst_38 : f32 to vector<16x128xf32>
    %111 = vector.broadcast %cst_39 : f32 to vector<16x128xf32>
    %112 = arith.select %109, %110, %111 : vector<16x128xi1>, vector<16x128xf32>
    %113 = math.absf %107 : vector<16x128xf32>
    %cst_40 = arith.constant 0.327591091 : f32
    %114 = vector.broadcast %cst_40 : f32 to vector<16x128xf32>
    %115 = arith.mulf %114, %113 : vector<16x128xf32>
    %cst_41 = arith.constant 1.000000e+00 : f32
    %116 = vector.broadcast %cst_41 : f32 to vector<16x128xf32>
    %117 = arith.addf %116, %115 : vector<16x128xf32>
    %cst_42 = arith.constant 1.000000e+00 : f32
    %118 = vector.broadcast %cst_42 : f32 to vector<16x128xf32>
    %119 = arith.divf %118, %117 : vector<16x128xf32>
    %cst_43 = arith.constant 1.06140542 : f32
    %120 = vector.broadcast %cst_43 : f32 to vector<16x128xf32>
    %121 = arith.mulf %120, %119 : vector<16x128xf32>
    %cst_44 = arith.constant -1.45315206 : f32
    %122 = vector.broadcast %cst_44 : f32 to vector<16x128xf32>
    %123 = arith.addf %121, %122 : vector<16x128xf32>
    %124 = arith.mulf %123, %119 : vector<16x128xf32>
    %cst_45 = arith.constant 1.42141378 : f32
    %125 = vector.broadcast %cst_45 : f32 to vector<16x128xf32>
    %126 = arith.addf %124, %125 : vector<16x128xf32>
    %127 = arith.mulf %126, %119 : vector<16x128xf32>
    %cst_46 = arith.constant -0.284496725 : f32
    %128 = vector.broadcast %cst_46 : f32 to vector<16x128xf32>
    %129 = arith.addf %127, %128 : vector<16x128xf32>
    %130 = arith.mulf %129, %119 : vector<16x128xf32>
    %cst_47 = arith.constant 0.254829586 : f32
    %131 = vector.broadcast %cst_47 : f32 to vector<16x128xf32>
    %132 = arith.addf %130, %131 : vector<16x128xf32>
    %133 = arith.mulf %132, %119 : vector<16x128xf32>
    %cst_48 = arith.constant 0.000000e+00 : f32
    %134 = vector.broadcast %cst_48 : f32 to vector<16x128xf32>
    %135 = arith.subf %134, %113 : vector<16x128xf32>
    %136 = arith.mulf %135, %113 : vector<16x128xf32>
    %137 = math.exp %136 : vector<16x128xf32>
    %138 = arith.mulf %133, %137 : vector<16x128xf32>
    %cst_49 = arith.constant 1.000000e+00 : f32
    %139 = vector.broadcast %cst_49 : f32 to vector<16x128xf32>
    %140 = arith.subf %139, %138 : vector<16x128xf32>
    %141 = arith.mulf %112, %140 : vector<16x128xf32>
    %cst_50 = arith.constant 1.000000e+00 : f32
    %142 = vector.broadcast %cst_50 : f32 to vector<16x128xf32>
    %143 = arith.addf %142, %141 : vector<16x128xf32>
    %144 = arith.mulf %105, %143 : vector<16x128xf32>
    %c0_51 = arith.constant 0 : index
    %c0_52 = arith.constant 0 : index
    %145 = vector.load %arg13[%c0_51, %c0_52] : memref<128x128xf32, #tpu.memory_space<vmem>>, vector<128x128xf32>
    %cst_53 = arith.constant dense<0.000000e+00> : vector<16x128xf32>
    %146 = tpu.matmul %144, %145, %cst_53 {dimension_numbers = #tpu.dot_dimension_numbers<[1], [0], [0], [1], [0, 0, 1, 1], [], []>} : vector<16x128xf32>, vector<128x128xf32>, vector<16x128xf32> -> vector<16x128xf32>
    %c0_54 = arith.constant 0 : index
    %c0_55 = arith.constant 0 : index
    %147 = vector.load %arg14[%c0_54, %c0_55] : memref<1x128xf32, #tpu.memory_space<vmem>>, vector<1x128xf32>
    %148 = vector.broadcast %147 : vector<1x128xf32> to vector<16x128xf32>
    %149 = arith.addf %146, %148 : vector<16x128xf32>
    %150 = arith.addf %149, %98 : vector<16x128xf32>
    %c0_56 = arith.constant 0 : index
    %c0_57 = arith.constant 0 : index
    %151 = vector.load %arg15[%c0_56, %c0_57] : memref<1x128xf32, #tpu.memory_space<vmem>>, vector<1x128xf32>
    %c0_58 = arith.constant 0 : index
    %c0_59 = arith.constant 0 : index
    %152 = vector.load %arg16[%c0_58, %c0_59] : memref<1x128xf32, #tpu.memory_space<vmem>>, vector<1x128xf32>
    %cst_60 = arith.constant dense<0.000000e+00> : vector<16xf32>
    %153 = vector.multi_reduction <add>, %150, %cst_60 [1] : vector<16x128xf32> to vector<16xf32>
    %154 = vector.shape_cast %153 : vector<16xf32> to vector<16x1xf32>
    %cst_61 = arith.constant 1.280000e+02 : f32
    %155 = vector.broadcast %cst_61 : f32 to vector<16x1xf32>
    %156 = arith.divf %154, %155 : vector<16x1xf32>
    %157 = vector.broadcast %156 : vector<16x1xf32> to vector<16x128xf32>
    %158 = arith.subf %150, %157 : vector<16x128xf32>
    %159 = arith.mulf %158, %158 : vector<16x128xf32>
    %cst_62 = arith.constant dense<0.000000e+00> : vector<16xf32>
    %160 = vector.multi_reduction <add>, %159, %cst_62 [1] : vector<16x128xf32> to vector<16xf32>
    %161 = vector.shape_cast %160 : vector<16xf32> to vector<16x1xf32>
    %cst_63 = arith.constant 1.280000e+02 : f32
    %162 = vector.broadcast %cst_63 : f32 to vector<16x1xf32>
    %163 = arith.divf %161, %162 : vector<16x1xf32>
    %cst_64 = arith.constant 9.99999974E-6 : f32
    %164 = vector.broadcast %cst_64 : f32 to vector<16x1xf32>
    %165 = arith.addf %163, %164 : vector<16x1xf32>
    %166 = math.rsqrt %165 : vector<16x1xf32>
    %167 = vector.broadcast %166 : vector<16x1xf32> to vector<16x128xf32>
    %168 = arith.mulf %158, %167 : vector<16x128xf32>
    %169 = vector.broadcast %151 : vector<1x128xf32> to vector<16x128xf32>
    %170 = arith.mulf %168, %169 : vector<16x128xf32>
    %171 = vector.broadcast %152 : vector<1x128xf32> to vector<16x128xf32>
    %172 = arith.addf %170, %171 : vector<16x128xf32>
    %c0_65 = arith.constant 0 : index
    %c0_66 = arith.constant 0 : index
    %173 = vector.load %arg17[%c0_65, %c0_66] : memref<16x128xf32, #tpu.memory_space<vmem>>, vector<16x128xf32>
    tpu.vector_store %arg17[%c0_65, %c0_66], %172 {strides = array<i32>} : memref<16x128xf32, #tpu.memory_space<vmem>>, vector<16x128xf32>,
    return
  }
  func.func @transform_0(%arg0: i32, %arg1: memref<2xi32, #tpu.memory_space<smem>>) -> (i32, i32) {
    %c0_i32 = arith.constant 0 : i32
    %c0_i32_0 = arith.constant 0 : i32
    return %arg0, %c0_i32 : i32, i32
  }
  func.func @transform_1(%arg0: i32, %arg1: memref<2xi32, #tpu.memory_space<smem>>) -> (i32, i32) {
    %c0_i32 = arith.constant 0 : i32
    %c0_i32_0 = arith.constant 0 : i32
    %c0_i32_1 = arith.constant 0 : i32
    return %c0_i32, %c0_i32_0 : i32, i32
  }
  func.func @transform_2(%arg0: i32, %arg1: memref<2xi32, #tpu.memory_space<smem>>) -> (i32, i32) {
    %c0_i32 = arith.constant 0 : i32
    %c0_i32_0 = arith.constant 0 : i32
    %c0_i32_1 = arith.constant 0 : i32
    return %c0_i32, %c0_i32_0 : i32, i32
  }
  func.func @transform_3(%arg0: i32, %arg1: memref<2xi32, #tpu.memory_space<smem>>) -> (i32, i32) {
    %c0_i32 = arith.constant 0 : i32
    %c0_i32_0 = arith.constant 0 : i32
    %c0_i32_1 = arith.constant 0 : i32
    return %c0_i32, %c0_i32_0 : i32, i32
  }
  func.func @transform_4(%arg0: i32, %arg1: memref<2xi32, #tpu.memory_space<smem>>) -> (i32, i32) {
    %c0_i32 = arith.constant 0 : i32
    %c0_i32_0 = arith.constant 0 : i32
    %c0_i32_1 = arith.constant 0 : i32
    return %c0_i32, %c0_i32_0 : i32, i32
  }
  func.func @transform_5(%arg0: i32, %arg1: memref<2xi32, #tpu.memory_space<smem>>) -> (i32, i32) {
    %c0_i32 = arith.constant 0 : i32
    %c0_i32_0 = arith.constant 0 : i32
    %c0_i32_1 = arith.constant 0 : i32
    return %c0_i32, %c0_i32_0 : i32, i32
  }
  func.func @transform_6(%arg0: i32, %arg1: memref<2xi32, #tpu.memory_space<smem>>) -> (i32, i32) {
    %c0_i32 = arith.constant 0 : i32
    %c0_i32_0 = arith.constant 0 : i32
    %c0_i32_1 = arith.constant 0 : i32
    return %c0_i32, %c0_i32_0 : i32, i32
  }
  func.func @transform_7(%arg0: i32, %arg1: memref<2xi32, #tpu.memory_space<smem>>) -> (i32, i32) {
    %c0_i32 = arith.constant 0 : i32
    %c0_i32_0 = arith.constant 0 : i32
    %c0_i32_1 = arith.constant 0 : i32
    return %c0_i32, %c0_i32_0 : i32, i32
  }
  func.func @transform_8(%arg0: i32, %arg1: memref<2xi32, #tpu.memory_space<smem>>) -> (i32, i32) {
    %c0_i32 = arith.constant 0 : i32
    %c0_i32_0 = arith.constant 0 : i32
    %c0_i32_1 = arith.constant 0 : i32
    return %c0_i32, %c0_i32_0 : i32, i32
  }
  func.func @transform_9(%arg0: i32, %arg1: memref<2xi32, #tpu.memory_space<smem>>) -> (i32, i32) {
    %c0_i32 = arith.constant 0 : i32
    %c0_i32_0 = arith.constant 0 : i32
    %c0_i32_1 = arith.constant 0 : i32
    return %c0_i32, %c0_i32_0 : i32, i32
  }
  func.func @transform_10(%arg0: i32, %arg1: memref<2xi32, #tpu.memory_space<smem>>) -> (i32, i32) {
    %c0_i32 = arith.constant 0 : i32
    %c0_i32_0 = arith.constant 0 : i32
    %c0_i32_1 = arith.constant 0 : i32
    return %c0_i32, %c0_i32_0 : i32, i32
  }
  func.func @transform_11(%arg0: i32, %arg1: memref<2xi32, #tpu.memory_space<smem>>) -> (i32, i32) {
    %c0_i32 = arith.constant 0 : i32
    %c0_i32_0 = arith.constant 0 : i32
    %c0_i32_1 = arith.constant 0 : i32
    return %c0_i32, %c0_i32_0 : i32, i32
  }
  func.func @transform_12(%arg0: i32, %arg1: memref<2xi32, #tpu.memory_space<smem>>) -> (i32, i32) {
    %c0_i32 = arith.constant 0 : i32
    %c0_i32_0 = arith.constant 0 : i32
    %c0_i32_1 = arith.constant 0 : i32
    return %c0_i32, %c0_i32_0 : i32, i32
  }
  func.func @transform_13(%arg0: i32, %arg1: memref<2xi32, #tpu.memory_space<smem>>) -> (i32, i32) {
    %c0_i32 = arith.constant 0 : i32
    %c0_i32_0 = arith.constant 0 : i32
    %c0_i32_1 = arith.constant 0 : i32
    return %c0_i32, %c0_i32_0 : i32, i32
  }
  func.func @transform_14(%arg0: i32, %arg1: memref<2xi32, #tpu.memory_space<smem>>) -> (i32, i32) {
    %c0_i32 = arith.constant 0 : i32
    %c0_i32_0 = arith.constant 0 : i32
    %c0_i32_1 = arith.constant 0 : i32
    return %c0_i32, %c0_i32_0 : i32, i32
  }
  func.func @transform_15(%arg0: i32, %arg1: memref<2xi32, #tpu.memory_space<smem>>) -> (i32, i32) {
    %c0_i32 = arith.constant 0 : i32
    %c0_i32_0 = arith.constant 0 : i32
    return %arg0, %c0_i32 : i32, i32
  }
}

</mosaic_0001>

<llo_original>
// kernel: tpu_custom_call.1
$region0: #{tpu_custom_call.1}
  #allocation0 [shape = 'u32[]', space=smem, size = 0x4, offset = 0x4, fixed_abs, tag = 'smem constant byte address 0x4 - core index']
  #allocation1 [shape = 'u32[72,128]{1,0:T(1,128)}', space=vmem, size = 0x9000, scoped, tag = 'internal scratch']
  #allocation2 [shape = 's32[1]{0}', space=sflag, size = 0x4, scoped, tag = 'scoped memory for tpu_custom_call.1']
  #allocation3 [shape = 'u8[512]{0}', space=smem, size = 0x200, scoped, tag = 'prefetched SMEM operand 0']
  %s0 = inlined_call_operand.hbm [shape: s32[2], index: 0, kind: input, shape index: {}]
  %s1 = inlined_call_operand.hbm [shape: f32[32,128], index: 1, kind: input, shape index: {}]
  %s2 = inlined_call_operand.hbm [shape: f32[128,384], index: 2, kind: input, shape index: {}]
  %s3 = inlined_call_operand.hbm [shape: f32[1,384], index: 3, kind: input, shape index: {}]
  %s4 = inlined_call_operand.hbm [shape: f32[128,128], index: 4, kind: input, shape index: {}]
  %s5 = inlined_call_operand.vmem [shape: f32[1,128], index: 5, kind: input, shape index: {}]
  %s6 = inlined_call_operand.hbm [shape: f32[128,128], index: 6, kind: input, shape index: {}]
  %s7 = inlined_call_operand.vmem [shape: f32[1,128], index: 7, kind: input, shape index: {}]
  %s8 = inlined_call_operand.vmem [shape: f32[1,128], index: 8, kind: input, shape index: {}]
  %s9 = inlined_call_operand.vmem [shape: f32[1,128], index: 9, kind: input, shape index: {}]
  %s10 = inlined_call_operand.hbm [shape: f32[128,128], index: 10, kind: input, shape index: {}]
  %s11 = inlined_call_operand.vmem [shape: f32[1,128], index: 11, kind: input, shape index: {}]
  %s12 = inlined_call_operand.hbm [shape: f32[128,128], index: 12, kind: input, shape index: {}]
  %s13 = inlined_call_operand.vmem [shape: f32[1,128], index: 13, kind: input, shape index: {}]
  %s14 = inlined_call_operand.vmem [shape: f32[1,128], index: 14, kind: input, shape index: {}]
  %s15 = inlined_call_operand.vmem [shape: f32[1,128], index: 15, kind: input, shape index: {}]
  %s16 = inlined_call_operand.hbm [shape: f32[32,128], index: 16, kind: output, shape index: {}]
  %s17 = sld [smem:[#allocation0]]
  $region121: #{tpu_custom_call.1} parent=0
    _
  %s19 = ssub.s32 1, %s17
  %s20 = scalar_select 0, %s19, %s17
  %s22 = sshll.u32 %s0, 4
  %s23 = int_to_ptr.hbm [resolvable:$true] %s22
  %25 = dma.hbm_to_smem %s23, 16, [#allocation3], [#allocation2]
  %27 = dma.done [#allocation2], 16
  %28 = sfence
  $region1: #{tpu_custom_call.1} parent=0
    #allocation4 [shape = 'u8[16384]{0}', space=vmem, size = 0x4000, scoped, tag = 'input window, operand 1']
    #allocation5 [shape = 's32[2]{0}', space=sflag, size = 0x8, scoped, tag = 'scoped memory for tpu_custom_call.1']
    #allocation6 [shape = 's32[2]{0}', space=sflag, size = 0x8, scoped, tag = 'scoped memory for tpu_custom_call.1']
    #allocation7 [shape = 'u8[196608]{0}', space=vmem, size = 0x30000, scoped, tag = 'input window, operand 2, single buffered']
    #allocation8 [shape = 's32[1]{0}', space=sflag, size = 0x4, scoped, tag = 'scoped memory for tpu_custom_call.1']
    #allocation9 [shape = 'u8[1536]{0}', space=vmem, size = 0x800, scoped, tag = 'input window, operand 3, single buffered']
    #allocation10 [shape = 'u8[65536]{0}', space=vmem, size = 0x10000, scoped, tag = 'input window, operand 4, single buffered']
    #allocation11 [shape = 's32[1]{0}', space=sflag, size = 0x4, scoped, tag = 'scoped memory for tpu_custom_call.1']
    #allocation12 [shape = 'u8[65536]{0}', space=vmem, size = 0x10000, scoped, tag = 'input window, operand 6, single buffered']
    #allocation13 [shape = 'u8[65536]{0}', space=vmem, size = 0x10000, scoped, tag = 'input window, operand 10, single buffered']
    #allocation14 [shape = 's32[1]{0}', space=sflag, size = 0x4, scoped, tag = 'scoped memory for tpu_custom_call.1']
    #allocation15 [shape = 'u8[65536]{0}', space=vmem, size = 0x10000, scoped, tag = 'input window, operand 12, single buffered']
    #allocation16 [shape = 'u8[16384]{0}', space=vmem, size = 0x4000, scoped, tag = 'output window, operand 0']
    %29 = vsyncpa [#allocation5], 0
    %s30 = scalar_lea.sflag [#allocation5], 1
    %31 = vsyncpa %s30, 0
    %32 = vsyncpa [#allocation8], 0
    %33 = vsyncpa [#allocation11], 0
    %34 = vsyncpa [#allocation14], 0
    %35 = vsyncpa [#allocation6], 0
    %s36 = scalar_lea.sflag [#allocation6], 1
    %37 = vsyncpa %s36, 0
    loop: start=0, step=1, limit=4
    $region2: #{tpu_custom_call.1} parent=1 // loop_pre_header
      _
    $region3: #{tpu_custom_call.1} parent=1 // loop_header
      %s39 = sphi 0, %s43
      %p40 = scmp.ge.s32.totalorder %s39, 4
      %s49 = sphi 0, %s51
      %s52 = sphi 0, %s49
      %s53 = sphi 0, %s52
      %s69 = sphi 0, %s53
      %s73 = sphi 0, %s73
      %s75 = sphi 0, %s73
      %s76 = sphi 0, %s75
      %s90 = sphi 0, %s76
      %s94 = sphi 0, %s94
      %s96 = sphi 0, %s94
      %s97 = sphi 0, %s96
      %s111 = sphi 0, %s97
      %s115 = sphi 0, %s115
      %s117 = sphi 0, %s115
      %s118 = sphi 0, %s117
      %s132 = sphi 0, %s118
      %s136 = sphi 0, %s136
      %s138 = sphi 0, %s136
      %s139 = sphi 0, %s138
      %s153 = sphi 0, %s139
      %s157 = sphi 0, %s157
      %s159 = sphi 0, %s157
      %s160 = sphi 0, %s159
      %s174 = sphi 0, %s160
      %s178 = sphi 0, %s178
      %s180 = sphi 0, %s178
      %s181 = sphi 0, %s180
      %s195 = sphi 0, %s181
      %s199 = sphi 0, %s199
      %s201 = sphi 0, %s199
      %s202 = sphi 0, %s201
      %s216 = sphi 0, %s202
      %s220 = sphi 0, %s220
      %s222 = sphi 0, %s220
      %s223 = sphi 0, %s222
      %s237 = sphi 0, %s223
      %s241 = sphi 0, %s241
      %s243 = sphi 0, %s241
      %s244 = sphi 0, %s243
      %s258 = sphi 0, %s244
      %s262 = sphi 0, %s262
      %s264 = sphi 0, %s262
      %s265 = sphi 0, %s264
      %s279 = sphi 0, %s265
      %s283 = sphi 0, %s283
      %s285 = sphi 0, %s283
      %s286 = sphi 0, %s285
      %s300 = sphi 0, %s286
      %s304 = sphi 0, %s304
      %s306 = sphi 0, %s304
      %s307 = sphi 0, %s306
      %s321 = sphi 0, %s307
      %s325 = sphi 0, %s325
      %s327 = sphi 0, %s325
      %s328 = sphi 0, %s327
      %s342 = sphi 0, %s328
      %s346 = sphi 0, %s346
      %s348 = sphi 0, %s346
      %s349 = sphi 0, %s348
      %s363 = sphi 0, %s349
      %s369 = sphi 0, %s371
      %s372 = sphi 0, %s369
      %s373 = sphi 0, %s372
      %s389 = sphi 0, %s373
    $region4: #{tpu_custom_call.1} parent=1 // loop_header_branch
      %42 = sbr.rel (%p40) target = $region8
    $region5: #{tpu_custom_call.1} parent=1 // loop_body
      %s44 = ssub.s32 %s39, 1
      %s45 = ssub.s32 %s39, 2
      %s46 = sadd.s32 %s39, 1
      %s47 = ssub.s32 %s39, %s46
      %p48 = scmp.eq.s32.totalorder %s47, 0
      %s50 = sadd.s32 %s49, 1
      %s51 = scalar_select %p48, %s49, %s50
      %p54 = pneg %p48
      %p55 = scmp.eq.s32.totalorder %s39, 1
      %p56 = por %p54, %p55
      %p57 = scmp.ne.s32.totalorder %s49, %s52
      %p58 = scmp.eq.s32.totalorder %s39, 0
      %p59 = por %p57, %p58
      %p60 = scmp.ne.s32.totalorder %s49, %s52
      %p61 = scmp.eq.s32.totalorder %s44, 1
      %p62 = por %p60, %p61
      %p63 = scmp.ne.s32.totalorder %s52, %s53
      %p64 = scmp.eq.s32.totalorder %s44, 0
      %p65 = por %p63, %p64
      %p66 = scmp.ne.s32.totalorder %s52, %s53
      %p67 = scmp.eq.s32.totalorder %s45, 1
      %p68 = por %p66, %p67
      %p70 = scmp.ne.s32.totalorder %s53, %s69
      %p71 = scmp.eq.s32.totalorder %s45, 0
      %p72 = por %p70, %p71
      %s74 = sadd.s32 %s73, 1
      %p77 = scmp.eq.s32.totalorder %s39, 1
      %p78 = scmp.ne.s32.totalorder %s73, %s75
      %p79 = scmp.eq.s32.totalorder %s39, 0
      %p80 = por %p78, %p79
      %p81 = scmp.ne.s32.totalorder %s73, %s75
      %p82 = scmp.eq.s32.totalorder %s44, 1
      %p83 = por %p81, %p82
      %p84 = scmp.ne.s32.totalorder %s75, %s76
      %p85 = scmp.eq.s32.totalorder %s44, 0
      %p86 = por %p84, %p85
      %p87 = scmp.ne.s32.totalorder %s75, %s76
      %p88 = scmp.eq.s32.totalorder %s45, 1
      %p89 = por %p87, %p88
      %p91 = scmp.ne.s32.totalorder %s76, %s90
      %p92 = scmp.eq.s32.totalorder %s45, 0
      %p93 = por %p91, %p92
      %s95 = sadd.s32 %s94, 1
      %p98 = scmp.eq.s32.totalorder %s39, 1
      %p99 = scmp.ne.s32.totalorder %s94, %s96
      %p100 = scmp.eq.s32.totalorder %s39, 0
      %p101 = por %p99, %p100
      %p102 = scmp.ne.s32.totalorder %s94, %s96
      %p103 = scmp.eq.s32.totalorder %s44, 1
      %p104 = por %p102, %p103
      %p105 = scmp.ne.s32.totalorder %s96, %s97
      %p106 = scmp.eq.s32.totalorder %s44, 0
      %p107 = por %p105, %p106
      %p108 = scmp.ne.s32.totalorder %s96, %s97
      %p109 = scmp.eq.s32.totalorder %s45, 1
      %p110 = por %p108, %p109
      %p112 = scmp.ne.s32.totalorder %s97, %s111
      %p113 = scmp.eq.s32.totalorder %s45, 0
      %p114 = por %p112, %p113
      %s116 = sadd.s32 %s115, 1
      %p119 = scmp.eq.s32.totalorder %s39, 1
      %p120 = scmp.ne.s32.totalorder %s115, %s117
      %p121 = scmp.eq.s32.totalorder %s39, 0
      %p122 = por %p120, %p121
      %p123 = scmp.ne.s32.totalorder %s115, %s117
      %p124 = scmp.eq.s32.totalorder %s44, 1
      %p125 = por %p123, %p124
      %p126 = scmp.ne.s32.totalorder %s117, %s118
      %p127 = scmp.eq.s32.totalorder %s44, 0
      %p128 = por %p126, %p127
      %p129 = scmp.ne.s32.totalorder %s117, %s118
      %p130 = scmp.eq.s32.totalorder %s45, 1
      %p131 = por %p129, %p130
      %p133 = scmp.ne.s32.totalorder %s118, %s132
      %p134 = scmp.eq.s32.totalorder %s45, 0
      %p135 = por %p133, %p134
      %s137 = sadd.s32 %s136, 1
      %p140 = scmp.eq.s32.totalorder %s39, 1
      %p141 = scmp.ne.s32.totalorder %s136, %s138
      %p142 = scmp.eq.s32.totalorder %s39, 0
      %p143 = por %p141, %p142
      %p144 = scmp.ne.s32.totalorder %s136, %s138
      %p145 = scmp.eq.s32.totalorder %s44, 1
      %p146 = por %p144, %p145
      %p147 = scmp.ne.s32.totalorder %s138, %s139
      %p148 = scmp.eq.s32.totalorder %s44, 0
      %p149 = por %p147, %p148
      %p150 = scmp.ne.s32.totalorder %s138, %s139
      %p151 = scmp.eq.s32.totalorder %s45, 1
      %p152 = por %p150, %p151
      %p154 = scmp.ne.s32.totalorder %s139, %s153
      %p155 = scmp.eq.s32.totalorder %s45, 0
      %p156 = por %p154, %p155
      %s158 = sadd.s32 %s157, 1
      %p161 = scmp.eq.s32.totalorder %s39, 1
      %p162 = scmp.ne.s32.totalorder %s157, %s159
      %p163 = scmp.eq.s32.totalorder %s39, 0
      %p164 = por %p162, %p163
      %p165 = scmp.ne.s32.totalorder %s157, %s159
      %p166 = scmp.eq.s32.totalorder %s44, 1
      %p167 = por %p165, %p166
      %p168 = scmp.ne.s32.totalorder %s159, %s160
      %p169 = scmp.eq.s32.totalorder %s44, 0
      %p170 = por %p168, %p169
      %p171 = scmp.ne.s32.totalorder %s159, %s160
      %p172 = scmp.eq.s32.totalorder %s45, 1
      %p173 = por %p171, %p172
      %p175 = scmp.ne.s32.totalorder %s160, %s174
      %p176 = scmp.eq.s32.totalorder %s45, 0
      %p177 = por %p175, %p176
      %s179 = sadd.s32 %s178, 1
      %p182 = scmp.eq.s32.totalorder %s39, 1
      %p183 = scmp.ne.s32.totalorder %s178, %s180
      %p184 = scmp.eq.s32.totalorder %s39, 0
      %p185 = por %p183, %p184
      %p186 = scmp.ne.s32.totalorder %s178, %s180
      %p187 = scmp.eq.s32.totalorder %s44, 1
      %p188 = por %p186, %p187
      %p189 = scmp.ne.s32.totalorder %s180, %s181
      %p190 = scmp.eq.s32.totalorder %s44, 0
      %p191 = por %p189, %p190
      %p192 = scmp.ne.s32.totalorder %s180, %s181
      %p193 = scmp.eq.s32.totalorder %s45, 1
      %p194 = por %p192, %p193
      %p196 = scmp.ne.s32.totalorder %s181, %s195
      %p197 = scmp.eq.s32.totalorder %s45, 0
      %p198 = por %p196, %p197
      %s200 = sadd.s32 %s199, 1
      %p203 = scmp.eq.s32.totalorder %s39, 1
      %p204 = scmp.ne.s32.totalorder %s199, %s201
      %p205 = scmp.eq.s32.totalorder %s39, 0
      %p206 = por %p204, %p205
      %p207 = scmp.ne.s32.totalorder %s199, %s201
      %p208 = scmp.eq.s32.totalorder %s44, 1
      %p209 = por %p207, %p208
      %p210 = scmp.ne.s32.totalorder %s201, %s202
      %p211 = scmp.eq.s32.totalorder %s44, 0
      %p212 = por %p210, %p211
      %p213 = scmp.ne.s32.totalorder %s201, %s202
      %p214 = scmp.eq.s32.totalorder %s45, 1
      %p215 = por %p213, %p214
      %p217 = scmp.ne.s32.totalorder %s202, %s216
      %p218 = scmp.eq.s32.totalorder %s45, 0
      %p219 = por %p217, %p218
      %s221 = sadd.s32 %s220, 1
      %p224 = scmp.eq.s32.totalorder %s39, 1
      %p225 = scmp.ne.s32.totalorder %s220, %s222
      %p226 = scmp.eq.s32.totalorder %s39, 0
      %p227 = por %p225, %p226
      %p228 = scmp.ne.s32.totalorder %s220, %s222
      %p229 = scmp.eq.s32.totalorder %s44, 1
      %p230 = por %p228, %p229
      %p231 = scmp.ne.s32.totalorder %s222, %s223
      %p232 = scmp.eq.s32.totalorder %s44, 0
      %p233 = por %p231, %p232
      %p234 = scmp.ne.s32.totalorder %s222, %s223
      %p235 = scmp.eq.s32.totalorder %s45, 1
      %p236 = por %p234, %p235
      %p238 = scmp.ne.s32.totalorder %s223, %s237
      %p239 = scmp.eq.s32.totalorder %s45, 0
      %p240 = por %p238, %p239
      %s242 = sadd.s32 %s241, 1
      %p245 = scmp.eq.s32.totalorder %s39, 1
      %p246 = scmp.ne.s32.totalorder %s241, %s243
      %p247 = scmp.eq.s32.totalorder %s39, 0
      %p248 = por %p246, %p247
      %p249 = scmp.ne.s32.totalorder %s241, %s243
      %p250 = scmp.eq.s32.totalorder %s44, 1
      %p251 = por %p249, %p250
      %p252 = scmp.ne.s32.totalorder %s243, %s244
      %p253 = scmp.eq.s32.totalorder %s44, 0
      %p254 = por %p252, %p253
      %p255 = scmp.ne.s32.totalorder %s243, %s244
      %p256 = scmp.eq.s32.totalorder %s45, 1
      %p257 = por %p255, %p256
      %p259 = scmp.ne.s32.totalorder %s244, %s258
      %p260 = scmp.eq.s32.totalorder %s45, 0
      %p261 = por %p259, %p260
      %s263 = sadd.s32 %s262, 1
      %p266 = scmp.eq.s32.totalorder %s39, 1
      %p267 = scmp.ne.s32.totalorder %s262, %s264
      %p268 = scmp.eq.s32.totalorder %s39, 0
      %p269 = por %p267, %p268
      %p270 = scmp.ne.s32.totalorder %s262, %s264
      %p271 = scmp.eq.s32.totalorder %s44, 1
      %p272 = por %p270, %p271
      %p273 = scmp.ne.s32.totalorder %s264, %s265
      %p274 = scmp.eq.s32.totalorder %s44, 0
      %p275 = por %p273, %p274
      %p276 = scmp.ne.s32.totalorder %s264, %s265
      %p277 = scmp.eq.s32.totalorder %s45, 1
      %p278 = por %p276, %p277
      %p280 = scmp.ne.s32.totalorder %s265, %s279
      %p281 = scmp.eq.s32.totalorder %s45, 0
      %p282 = por %p280, %p281
      %s284 = sadd.s32 %s283, 1
      %p287 = scmp.eq.s32.totalorder %s39, 1
      %p288 = scmp.ne.s32.totalorder %s283, %s285
      %p289 = scmp.eq.s32.totalorder %s39, 0
      %p290 = por %p288, %p289
      %p291 = scmp.ne.s32.totalorder %s283, %s285
      %p292 = scmp.eq.s32.totalorder %s44, 1
      %p293 = por %p291, %p292
      %p294 = scmp.ne.s32.totalorder %s285, %s286
      %p295 = scmp.eq.s32.totalorder %s44, 0
      %p296 = por %p294, %p295
      %p297 = scmp.ne.s32.totalorder %s285, %s286
      %p298 = scmp.eq.s32.totalorder %s45, 1
      %p299 = por %p297, %p298
      %p301 = scmp.ne.s32.totalorder %s286, %s300
      %p302 = scmp.eq.s32.totalorder %s45, 0
      %p303 = por %p301, %p302
      %s305 = sadd.s32 %s304, 1
      %p308 = scmp.eq.s32.totalorder %s39, 1
      %p309 = scmp.ne.s32.totalorder %s304, %s306
      %p310 = scmp.eq.s32.totalorder %s39, 0
      %p311 = por %p309, %p310
      %p312 = scmp.ne.s32.totalorder %s304, %s306
      %p313 = scmp.eq.s32.totalorder %s44, 1
      %p314 = por %p312, %p313
      %p315 = scmp.ne.s32.totalorder %s306, %s307
      %p316 = scmp.eq.s32.totalorder %s44, 0
      %p317 = por %p315, %p316
      %p318 = scmp.ne.s32.totalorder %s306, %s307
      %p319 = scmp.eq.s32.totalorder %s45, 1
      %p320 = por %p318, %p319
      %p322 = scmp.ne.s32.totalorder %s307, %s321
      %p323 = scmp.eq.s32.totalorder %s45, 0
      %p324 = por %p322, %p323
      %s326 = sadd.s32 %s325, 1
      %p329 = scmp.eq.s32.totalorder %s39, 1
      %p330 = scmp.ne.s32.totalorder %s325, %s327
      %p331 = scmp.eq.s32.totalorder %s39, 0
      %p332 = por %p330, %p331
      %p333 = scmp.ne.s32.totalorder %s325, %s327
      %p334 = scmp.eq.s32.totalorder %s44, 1
      %p335 = por %p333, %p334
      %p336 = scmp.ne.s32.totalorder %s327, %s328
      %p337 = scmp.eq.s32.totalorder %s44, 0
      %p338 = por %p336, %p337
      %p339 = scmp.ne.s32.totalorder %s327, %s328
      %p340 = scmp.eq.s32.totalorder %s45, 1
      %p341 = por %p339, %p340
      %p343 = scmp.ne.s32.totalorder %s328, %s342
      %p344 = scmp.eq.s32.totalorder %s45, 0
      %p345 = por %p343, %p344
      %s347 = sadd.s32 %s346, 1
      %p350 = scmp.eq.s32.totalorder %s39, 1
      %p351 = scmp.ne.s32.totalorder %s346, %s348
      %p352 = scmp.eq.s32.totalorder %s39, 0
      %p353 = por %p351, %p352
      %p354 = scmp.ne.s32.totalorder %s346, %s348
      %p355 = scmp.eq.s32.totalorder %s44, 1
      %p356 = por %p354, %p355
      %p357 = scmp.ne.s32.totalorder %s348, %s349
      %p358 = scmp.eq.s32.totalorder %s44, 0
      %p359 = por %p357, %p358
      %p360 = scmp.ne.s32.totalorder %s348, %s349
      %p361 = scmp.eq.s32.totalorder %s45, 1
      %p362 = por %p360, %p361
      %p364 = scmp.ne.s32.totalorder %s349, %s363
      %p365 = scmp.eq.s32.totalorder %s45, 0
      %p366 = por %p364, %p365
      %s367 = ssub.s32 %s39, %s46
      %p368 = scmp.eq.s32.totalorder %s367, 0
      %s370 = sadd.s32 %s369, 1
      %s371 = scalar_select %p368, %s369, %s370
      %p374 = pneg %p368
      %p375 = scmp.eq.s32.totalorder %s39, 1
      %p376 = por %p374, %p375
      %p377 = scmp.ne.s32.totalorder %s369, %s372
      %p378 = scmp.eq.s32.totalorder %s39, 0
      %p379 = por %p377, %p378
      %p380 = scmp.ne.s32.totalorder %s369, %s372
      %p381 = scmp.eq.s32.totalorder %s44, 1
      %p382 = por %p380, %p381
      %p383 = scmp.ne.s32.totalorder %s372, %s373
      %p384 = scmp.eq.s32.totalorder %s44, 0
      %p385 = por %p383, %p384
      %p386 = scmp.ne.s32.totalorder %s372, %s373
      %p387 = scmp.eq.s32.totalorder %s45, 1
      %p388 = por %p386, %p387
      %p390 = scmp.ne.s32.totalorder %s373, %s389
      %p391 = scmp.eq.s32.totalorder %s45, 0
      %p392 = por %p390, %p391
      %p393 = scmp.le.s32.totalorder 1, %s39
      %p394 = scmp.lt.s32.totalorder %s39, 3
      %p395 = pnand %p393, %p394
      %p396 = pneg %p395
      // Predicated region
      $region9: #{tpu_custom_call.1} parent=5 // pred_check
        _
      $region10: #{tpu_custom_call.1} parent=5 // pred_check_branch
        %398 = sbr.rel (%p395) target = $region12
      $region11: #{tpu_custom_call.1} parent=5 // pred_region
        %s399 = ssub.s32 %s39, 1
        // Predicated region
        $region13: #{tpu_custom_call.1} parent=11 // pred_check
          %p400 = pneg %p86
        $region14: #{tpu_custom_call.1} parent=11 // pred_check_branch
          %402 = sbr.rel (%p400) target = $region16
        $region15: #{tpu_custom_call.1} parent=11 // pred_region
          %404 = vsyncadd [#allocation8], 0
          %s405 = sshll.u32 %s2, 4
          %s406 = int_to_ptr.hbm [resolvable:$true] %s405
          %s407 = sshll.u32 [#allocation7], 4
          %s408 = int_to_ptr.vmem [resolvable:$true] %s407
          %413 = dma.hbm_to_vmem [thread:$0]  %s406, 6144, %s408, [#allocation8], 384, 384, 24
        $region16: #{tpu_custom_call.1} parent=11 // pred_fallthru
          _
        // Predicated region
        $region17: #{tpu_custom_call.1} parent=11 // pred_check
          %p414 = pneg %p107
        $region18: #{tpu_custom_call.1} parent=11 // pred_check_branch
          %416 = sbr.rel (%p414) target = $region20
        $region19: #{tpu_custom_call.1} parent=11 // pred_region
          %418 = vsyncadd [#allocation8], 0
          %s420 = sshll.u32 %s3, 4
          %s421 = int_to_ptr.hbm [resolvable:$true] %s420
          %s422 = sshll.u32 [#allocation9], 4
          %s423 = int_to_ptr.vmem [resolvable:$true] %s422
          %425 = dma.hbm_to_vmem [thread:$0]  %s421, 48, %s423, [#allocation8]
        $region20: #{tpu_custom_call.1} parent=11 // pred_fallthru
          _
        // Predicated region
        $region21: #{tpu_custom_call.1} parent=11 // pred_check
          %p426 = pneg %p128
        $region22: #{tpu_custom_call.1} parent=11 // pred_check_branch
          %428 = sbr.rel (%p426) target = $region24
        $region23: #{tpu_custom_call.1} parent=11 // pred_region
          %430 = vsyncadd [#allocation11], 0
          %s431 = sshll.u32 %s4, 4
          %s432 = int_to_ptr.hbm [resolvable:$true] %s431
          %s433 = sshll.u32 [#allocation10], 4
          %s434 = int_to_ptr.vmem [resolvable:$true] %s433
          %439 = dma.hbm_to_vmem [thread:$0]  %s432, 2048, %s434, [#allocation11], 128, 128, 8
        $region24: #{tpu_custom_call.1} parent=11 // pred_fallthru
          _
        // Predicated region
        $region25: #{tpu_custom_call.1} parent=11 // pred_check
          %p440 = pneg %p149
        $region26: #{tpu_custom_call.1} parent=11 // pred_check_branch
          %442 = sbr.rel (%p440) target = $region28
        $region27: #{tpu_custom_call.1} parent=11 // pred_region
          _
        $region28: #{tpu_custom_call.1} parent=11 // pred_fallthru
          _
        // Predicated region
        $region29: #{tpu_custom_call.1} parent=11 // pred_check
          %p443 = pneg %p170
        $region30: #{tpu_custom_call.1} parent=11 // pred_check_branch
          %445 = sbr.rel (%p443) target = $region32
        $region31: #{tpu_custom_call.1} parent=11 // pred_region
          %447 = vsyncadd [#allocation11], 0
          %s448 = sshll.u32 %s6, 4
          %s449 = int_to_ptr.hbm [resolvable:$true] %s448
          %s450 = sshll.u32 [#allocation12], 4
          %s451 = int_to_ptr.vmem [resolvable:$true] %s450
          %456 = dma.hbm_to_vmem [thread:$0]  %s449, 2048, %s451, [#allocation11], 128, 128, 8
        $region32: #{tpu_custom_call.1} parent=11 // pred_fallthru
          _
        // Predicated region
        $region33: #{tpu_custom_call.1} parent=11 // pred_check
          %p457 = pneg %p191
        $region34: #{tpu_custom_call.1} parent=11 // pred_check_branch
          %459 = sbr.rel (%p457) target = $region36
        $region35: #{tpu_custom_call.1} parent=11 // pred_region
          _
        $region36: #{tpu_custom_call.1} parent=11 // pred_fallthru
          _
        // Predicated region
        $region37: #{tpu_custom_call.1} parent=11 // pred_check
          %p460 = pneg %p212
        $region38: #{tpu_custom_call.1} parent=11 // pred_check_branch
          %462 = sbr.rel (%p460) target = $region40
        $region39: #{tpu_custom_call.1} parent=11 // pred_region
          _
        $region40: #{tpu_custom_call.1} parent=11 // pred_fallthru
          _
        // Predicated region
        $region41: #{tpu_custom_call.1} parent=11 // pred_check
          %p463 = pneg %p233
        $region42: #{tpu_custom_call.1} parent=11 // pred_check_branch
          %465 = sbr.rel (%p463) target = $region44
        $region43: #{tpu_custom_call.1} parent=11 // pred_region
          _
        $region44: #{tpu_custom_call.1} parent=11 // pred_fallthru
          _
        // Predicated region
        $region45: #{tpu_custom_call.1} parent=11 // pred_check
          %p466 = pneg %p254
        $region46: #{tpu_custom_call.1} parent=11 // pred_check_branch
          %468 = sbr.rel (%p466) target = $region48
        $region47: #{tpu_custom_call.1} parent=11 // pred_region
          %470 = vsyncadd [#allocation14], 0
          %s471 = sshll.u32 %s10, 4
          %s472 = int_to_ptr.hbm [resolvable:$true] %s471
          %s473 = sshll.u32 [#allocation13], 4
          %s474 = int_to_ptr.vmem [resolvable:$true] %s473
          %479 = dma.hbm_to_vmem [thread:$0]  %s472, 2048, %s474, [#allocation14], 128, 128, 8
        $region48: #{tpu_custom_call.1} parent=11 // pred_fallthru
          _
        // Predicated region
        $region49: #{tpu_custom_call.1} parent=11 // pred_check
          %p480 = pneg %p275
        $region50: #{tpu_custom_call.1} parent=11 // pred_check_branch
          %482 = sbr.rel (%p480) target = $region52
        $region51: #{tpu_custom_call.1} parent=11 // pred_region
          _
        $region52: #{tpu_custom_call.1} parent=11 // pred_fallthru
          _
        // Predicated region
        $region53: #{tpu_custom_call.1} parent=11 // pred_check
          %p483 = pneg %p296
        $region54: #{tpu_custom_call.1} parent=11 // pred_check_branch
          %485 = sbr.rel (%p483) target = $region56
        $region55: #{tpu_custom_call.1} parent=11 // pred_region
          %487 = vsyncadd [#allocation14], 0
          %s488 = sshll.u32 %s12, 4
          %s489 = int_to_ptr.hbm [resolvable:$true] %s488
          %s490 = sshll.u32 [#allocation15], 4
          %s491 = int_to_ptr.vmem [resolvable:$true] %s490
          %496 = dma.hbm_to_vmem [thread:$0]  %s489, 2048, %s491, [#allocation14], 128, 128, 8
        $region56: #{tpu_custom_call.1} parent=11 // pred_fallthru
          _
        // Predicated region
        $region57: #{tpu_custom_call.1} parent=11 // pred_check
          %p497 = pneg %p317
        $region58: #{tpu_custom_call.1} parent=11 // pred_check_branch
          %499 = sbr.rel (%p497) target = $region60
        $region59: #{tpu_custom_call.1} parent=11 // pred_region
          _
        $region60: #{tpu_custom_call.1} parent=11 // pred_fallthru
          _
        // Predicated region
        $region61: #{tpu_custom_call.1} parent=11 // pred_check
          %p500 = pneg %p338
        $region62: #{tpu_custom_call.1} parent=11 // pred_check_branch
          %502 = sbr.rel (%p500) target = $region64
        $region63: #{tpu_custom_call.1} parent=11 // pred_region
          _
        $region64: #{tpu_custom_call.1} parent=11 // pred_fallthru
          _
        // Predicated region
        $region65: #{tpu_custom_call.1} parent=11 // pred_check
          %p503 = pneg %p359
        $region66: #{tpu_custom_call.1} parent=11 // pred_check_branch
          %505 = sbr.rel (%p503) target = $region68
        $region67: #{tpu_custom_call.1} parent=11 // pred_region
          _
        $region68: #{tpu_custom_call.1} parent=11 // pred_fallthru
          _
      $region12: #{tpu_custom_call.1} parent=5 // pred_fallthru
        _
      %p506 = scmp.lt.s32.totalorder %s39, 2
      // Predicated region
      $region69: #{tpu_custom_call.1} parent=5 // pred_check
        %p507 = pneg %p506
      $region70: #{tpu_custom_call.1} parent=5 // pred_check_branch
        %509 = sbr.rel (%p507) target = $region72
      $region71: #{tpu_custom_call.1} parent=5 // pred_region
        // Predicated region
        $region73: #{tpu_custom_call.1} parent=71 // pred_check
          %p510 = pneg %p59
        $region74: #{tpu_custom_call.1} parent=71 // pred_check_branch
          %512 = sbr.rel (%p510) target = $region76
        $region75: #{tpu_custom_call.1} parent=71 // pred_region
          %s513 = sand.u32 %s49, 1
          %s514 = scalar_lea.sflag [#allocation5], %s513
          %s515 = sand.u32 %s49, 1
          %s516 = smul.addr %s515, 16
          %s517 = scalar_lea.vmem [#allocation4], %s516
          %s518 = smul.u32 2, %s39
          %520 = vsyncadd %s514, 0
          %s521 = smul.addr %s518, 8
          %s522 = scalar_lea.hbm %s1, %s521
          %s523 = sshll.u32 %s522, 4
          %s524 = int_to_ptr.hbm [resolvable:$true] %s523
          %s525 = sshll.u32 %s517, 4
          %s526 = int_to_ptr.vmem [resolvable:$true] %s525
          %531 = dma.hbm_to_vmem [thread:$0]  %s524, 256, %s526, %s514, 128, 128, 8
        $region76: #{tpu_custom_call.1} parent=71 // pred_fallthru
          _
      $region72: #{tpu_custom_call.1} parent=5 // pred_fallthru
        _
      %p532 = scmp.le.s32.totalorder 1, %s39
      %p533 = scmp.lt.s32.totalorder %s39, 3
      %p534 = pnand %p532, %p533
      %p535 = pneg %p534
      // Predicated region
      $region77: #{tpu_custom_call.1} parent=5 // pred_check
        _
      $region78: #{tpu_custom_call.1} parent=5 // pred_check_branch
        %537 = sbr.rel (%p534) target = $region80
      $region79: #{tpu_custom_call.1} parent=5 // pred_region
        %s538 = ssub.s32 %s39, 1
        %s539 = sand.u32 %s52, 1
        %s540 = scalar_lea.sflag [#allocation5], %s539
        %s541 = sand.u32 %s52, 1
        %s542 = smul.addr %s541, 16
        %s543 = scalar_lea.vmem [#allocation4], %s542
        // Predicated region
        $region81: #{tpu_custom_call.1} parent=79 // pred_check
          %p544 = pneg %p65
        $region82: #{tpu_custom_call.1} parent=79 // pred_check_branch
          %546 = sbr.rel (%p544) target = $region84
        $region83: #{tpu_custom_call.1} parent=79 // pred_region
          %548 = dma.done %s540, 256
        $region84: #{tpu_custom_call.1} parent=79 // pred_fallthru
          _
        // Predicated region
        $region85: #{tpu_custom_call.1} parent=79 // pred_check
          %p549 = pneg %p86
        $region86: #{tpu_custom_call.1} parent=79 // pred_check_branch
          %551 = sbr.rel (%p549) target = $region88
        $region87: #{tpu_custom_call.1} parent=79 // pred_region
          %553 = dma.done [#allocation8], 6144
        $region88: #{tpu_custom_call.1} parent=79 // pred_fallthru
          _
        // Predicated region
        $region89: #{tpu_custom_call.1} parent=79 // pred_check
          %p554 = pneg %p107
        $region90: #{tpu_custom_call.1} parent=79 // pred_check_branch
          %556 = sbr.rel (%p554) target = $region92
        $region91: #{tpu_custom_call.1} parent=79 // pred_region
          %558 = dma.done [#allocation8], 48
        $region92: #{tpu_custom_call.1} parent=79 // pred_fallthru
          _
        // Predicated region
        $region93: #{tpu_custom_call.1} parent=79 // pred_check
          %p559 = pneg %p128
        $region94: #{tpu_custom_call.1} parent=79 // pred_check_branch
          %561 = sbr.rel (%p559) target = $region96
        $region95: #{tpu_custom_call.1} parent=79 // pred_region
          %563 = dma.done [#allocation11], 2048
        $region96: #{tpu_custom_call.1} parent=79 // pred_fallthru
          _
        // Predicated region
        $region97: #{tpu_custom_call.1} parent=79 // pred_check
          %p564 = pneg %p170
        $region98: #{tpu_custom_call.1} parent=79 // pred_check_branch
          %566 = sbr.rel (%p564) target = $region100
        $region99: #{tpu_custom_call.1} parent=79 // pred_region
          %568 = dma.done [#allocation11], 2048
        $region100: #{tpu_custom_call.1} parent=79 // pred_fallthru
          _
        // Predicated region
        $region101: #{tpu_custom_call.1} parent=79 // pred_check
          %p569 = pneg %p254
        $region102: #{tpu_custom_call.1} parent=79 // pred_check_branch
          %571 = sbr.rel (%p569) target = $region104
        $region103: #{tpu_custom_call.1} parent=79 // pred_region
          %573 = dma.done [#allocation14], 2048
        $region104: #{tpu_custom_call.1} parent=79 // pred_fallthru
          _
        // Predicated region
        $region105: #{tpu_custom_call.1} parent=79 // pred_check
          %p574 = pneg %p296
        $region106: #{tpu_custom_call.1} parent=79 // pred_check_branch
          %576 = sbr.rel (%p574) target = $region108
        $region107: #{tpu_custom_call.1} parent=79 // pred_region
          %578 = dma.done [#allocation14], 2048
        $region108: #{tpu_custom_call.1} parent=79 // pred_fallthru
          _
        %s579 = sand.u32 %s52, 1
        %s580 = scalar_lea.sflag [#allocation5], %s579
        %s581 = sand.u32 %s52, 1
        %s582 = smul.addr %s581, 16
        %s583 = scalar_lea.vmem [#allocation4], %s582
        %p584 = pneg %p65
        %p585 = pneg %p62
        %p586 = pneg %p86
        %p587 = pneg %p83
        %p588 = pneg %p107
        %p589 = pneg %p104
        %p590 = pneg %p128
        %p591 = pneg %p125
        %p592 = pneg %p149
        %p593 = pneg %p146
        %p594 = pneg %p170
        %p595 = pneg %p167
        %p596 = pneg %p191
        %p597 = pneg %p188
        %p598 = pneg %p212
        %p599 = pneg %p209
        %p600 = pneg %p233
        %p601 = pneg %p230
        %p602 = pneg %p254
        %p603 = pneg %p251
        %p604 = pneg %p275
        %p605 = pneg %p272
        %p606 = pneg %p296
        %p607 = pneg %p293
        %p608 = pneg %p317
        %p609 = pneg %p314
        %p610 = pneg %p338
        %p611 = pneg %p335
        %p612 = pneg %p359
        %p613 = pneg %p356
        %p614 = pneg %p385
        %p615 = pneg %p382
        %s616 = sand.u32 %s372, 1
        %s617 = scalar_lea.sflag [#allocation6], %s616
        %s618 = sand.u32 %s372, 1
        %s619 = smul.addr %s618, 16
        %s620 = scalar_lea.vmem [#allocation16], %s619
        %s621 = smul.u32 2, %s44
        %s622 = smul.u32 2, %s44
        %s623 = sld [smem:[#allocation3 + %s44]]
        %v624 = vld [vmem:[%s543] sm:$0xff]
        %v625 = vld [vmem:[%s543 + $0x8] sm:$0xff]
        %v626 = vld [vmem:[#allocation7] sm:$0xff]
        %v627 = vld [vmem:[#allocation7 + $0x8] sm:$0xff]
        %v628 = vld [vmem:[#allocation7 + $0x10] sm:$0xff]
        %v629 = vld [vmem:[#allocation7 + $0x18] sm:$0xff]
        %v630 = vld [vmem:[#allocation7 + $0x20] sm:$0xff]
        %v631 = vld [vmem:[#allocation7 + $0x28] sm:$0xff]
        %v632 = vld [vmem:[#allocation7 + $0x30] sm:$0xff]
        %v633 = vld [vmem:[#allocation7 + $0x38] sm:$0xff]
        %v634 = vld [vmem:[#allocation7 + $0x40] sm:$0xff]
        %v635 = vld [vmem:[#allocation7 + $0x48] sm:$0xff]
        %v636 = vld [vmem:[#allocation7 + $0x50] sm:$0xff]
        %v637 = vld [vmem:[#allocation7 + $0x58] sm:$0xff]
        %v638 = vld [vmem:[#allocation7 + $0x60] sm:$0xff]
        %v639 = vld [vmem:[#allocation7 + $0x68] sm:$0xff]
        %v640 = vld [vmem:[#allocation7 + $0x70] sm:$0xff]
        %v641 = vld [vmem:[#allocation7 + $0x78] sm:$0xff]
        %v642 = vld [vmem:[#allocation7 + $0x80] sm:$0xff]
        %v643 = vld [vmem:[#allocation7 + $0x88] sm:$0xff]
        %v644 = vld [vmem:[#allocation7 + $0x90] sm:$0xff]
        %v645 = vld [vmem:[#allocation7 + $0x98] sm:$0xff]
        %v646 = vld [vmem:[#allocation7 + $0xa0] sm:$0xff]
        %v647 = vld [vmem:[#allocation7 + $0xa8] sm:$0xff]
        %v648 = vld [vmem:[#allocation7 + $0xb0] sm:$0xff]
        %v649 = vld [vmem:[#allocation7 + $0xb8] sm:$0xff]
        %v650 = vld [vmem:[#allocation7 + $0xc0] sm:$0xff]
        %v651 = vld [vmem:[#allocation7 + $0xc8] sm:$0xff]
        %v652 = vld [vmem:[#allocation7 + $0xd0] sm:$0xff]
        %v653 = vld [vmem:[#allocation7 + $0xd8] sm:$0xff]
        %v654 = vld [vmem:[#allocation7 + $0xe0] sm:$0xff]
        %v655 = vld [vmem:[#allocation7 + $0xe8] sm:$0xff]
        %v656 = vld [vmem:[#allocation7 + $0xf0] sm:$0xff]
        %v657 = vld [vmem:[#allocation7 + $0xf8] sm:$0xff]
        %v658 = vld [vmem:[#allocation7 + $0x100] sm:$0xff]
        %v659 = vld [vmem:[#allocation7 + $0x108] sm:$0xff]
        %v660 = vld [vmem:[#allocation7 + $0x110] sm:$0xff]
        %v661 = vld [vmem:[#allocation7 + $0x118] sm:$0xff]
        %v662 = vld [vmem:[#allocation7 + $0x120] sm:$0xff]
        %v663 = vld [vmem:[#allocation7 + $0x128] sm:$0xff]
        %v664 = vld [vmem:[#allocation7 + $0x130] sm:$0xff]
        %v665 = vld [vmem:[#allocation7 + $0x138] sm:$0xff]
        %v666 = vld [vmem:[#allocation7 + $0x140] sm:$0xff]
        %v667 = vld [vmem:[#allocation7 + $0x148] sm:$0xff]
        %v668 = vld [vmem:[#allocation7 + $0x150] sm:$0xff]
        %v669 = vld [vmem:[#allocation7 + $0x158] sm:$0xff]
        %v670 = vld [vmem:[#allocation7 + $0x160] sm:$0xff]
        %v671 = vld [vmem:[#allocation7 + $0x168] sm:$0xff]
        %v672 = vld [vmem:[#allocation7 + $0x170] sm:$0xff]
        %v673 = vld [vmem:[#allocation7 + $0x178] sm:$0xff]
        %v674 = vld [vmem:[#allocation9] sm:$0x7]
        %v676 = vperm.slane %v674, 0
        %v677 = vperm.slane %v674, 1
        %v678 = vperm.slane %v674, 2
        %682 = vmatpush.msra.mxu0 %v671
        %683 = vmatpush.msra.mxu0 %v668
        %684 = vmatpush.msra.mxu0 %v665
        %685 = vmatpush.msra.mxu0 %v662
        %686 = vmatpush.msra.mxu0 %v659
        %687 = vmatpush.msra.mxu0 %v656
        %688 = vmatpush.msra.mxu0 %v653
        %689 = vmatpush.msra.mxu0 %v650
        %690 = vmatpush.msra.mxu0 %v647
        %691 = vmatpush.msra.mxu0 %v644
        %692 = vmatpush.msra.mxu0 %v641
        %693 = vmatpush.msra.mxu0 %v638
        %694 = vmatpush.msra.mxu0 %v635
        %695 = vmatpush.msra.mxu0 %v632
        %696 = vmatpush.msra.mxu0 %v629
        %697 = vmatpush.msra.mxu0 %v626
        %698 = vmatmul.f32.gmra.mxu0 %v624
        %v699 = vpop.f32.mrf.mxu0
        %v700 = vadd.f32 %v676, %v699
        %701 = vmatmul.f32.gmra.mxu0 %v625
        %v702 = vpop.f32.mrf.mxu0
        %v703 = vadd.f32 %v676, %v702
        %704 = vdwg.mxu0
        %705 = vmatpush.msra.mxu0 %v672
        %706 = vmatpush.msra.mxu0 %v669
        %707 = vmatpush.msra.mxu0 %v666
        %708 = vmatpush.msra.mxu0 %v663
        %709 = vmatpush.msra.mxu0 %v660
        %710 = vmatpush.msra.mxu0 %v657
        %711 = vmatpush.msra.mxu0 %v654
        %712 = vmatpush.msra.mxu0 %v651
        %713 = vmatpush.msra.mxu0 %v648
        %714 = vmatpush.msra.mxu0 %v645
        %715 = vmatpush.msra.mxu0 %v642
        %716 = vmatpush.msra.mxu0 %v639
        %717 = vmatpush.msra.mxu0 %v636
        %718 = vmatpush.msra.mxu0 %v633
        %719 = vmatpush.msra.mxu0 %v630
        %720 = vmatpush.msra.mxu0 %v627
        %721 = vmatmul.f32.gmra.mxu0 %v624
        %v722 = vpop.f32.mrf.mxu0
        %v723 = vadd.f32 %v677, %v722
        %724 = vmatmul.f32.gmra.mxu0 %v625
        %v725 = vpop.f32.mrf.mxu0
        %v726 = vadd.f32 %v677, %v725
        %727 = vdwg.mxu0
        %728 = vmatpush.msra.mxu0 %v673
        %729 = vmatpush.msra.mxu0 %v670
        %730 = vmatpush.msra.mxu0 %v667
        %731 = vmatpush.msra.mxu0 %v664
        %732 = vmatpush.msra.mxu0 %v661
        %733 = vmatpush.msra.mxu0 %v658
        %734 = vmatpush.msra.mxu0 %v655
        %735 = vmatpush.msra.mxu0 %v652
        %736 = vmatpush.msra.mxu0 %v649
        %737 = vmatpush.msra.mxu0 %v646
        %738 = vmatpush.msra.mxu0 %v643
        %739 = vmatpush.msra.mxu0 %v640
        %740 = vmatpush.msra.mxu0 %v637
        %741 = vmatpush.msra.mxu0 %v634
        %742 = vmatpush.msra.mxu0 %v631
        %743 = vmatpush.msra.mxu0 %v628
        %744 = vmatmul.f32.gmra.mxu0 %v624
        %v745 = vpop.f32.mrf.mxu0
        %v746 = vadd.f32 %v678, %v745
        %747 = vmatmul.f32.gmra.mxu0 %v625
        %v748 = vpop.f32.mrf.mxu0
        %v749 = vadd.f32 %v678, %v748
        %750 = vdwg.mxu0
        %v751 = vmul.f32 %v700, 0.17677669
        %v752 = vmul.f32 %v703, 0.17677669
        %755 = vrot.lane.b32.xlu0 %v751, 96
        %v756 = vpop.permute.xlu0 %755
        %757 = vrot.lane.b32.xlu0 %v752, 96
        %v758 = vpop.permute.xlu0 %757
        %759 = vrot.lane.b32.xlu0 %v751, 64
        %v760 = vpop.permute.xlu0 %759
        %761 = vrot.lane.b32.xlu0 %v752, 64
        %v762 = vpop.permute.xlu0 %761
        %763 = vrot.lane.b32.xlu0 %v751, 32
        %v764 = vpop.permute.xlu0 %763
        %765 = vrot.lane.b32.xlu0 %v752, 32
        %v766 = vpop.permute.xlu0 %765
        %769 = vrot.lane.b32.xlu0 %v723, 96
        %v770 = vpop.permute.xlu0 %769
        %771 = vrot.lane.b32.xlu0 %v726, 96
        %v772 = vpop.permute.xlu0 %771
        %773 = vrot.lane.b32.xlu0 %v723, 64
        %v774 = vpop.permute.xlu0 %773
        %775 = vrot.lane.b32.xlu0 %v726, 64
        %v776 = vpop.permute.xlu0 %775
        %777 = vrot.lane.b32.xlu0 %v723, 32
        %v778 = vpop.permute.xlu0 %777
        %779 = vrot.lane.b32.xlu0 %v726, 32
        %v780 = vpop.permute.xlu0 %779
        %783 = vrot.lane.b32.xlu0 %v746, 96
        %v784 = vpop.permute.xlu0 %783
        %785 = vrot.lane.b32.xlu0 %v749, 96
        %v786 = vpop.permute.xlu0 %785
        %789 = vrot.lane.b32.xlu0 %v746, 64
        %v790 = vpop.permute.xlu0 %789
        %791 = vrot.lane.b32.xlu0 %v749, 64
        %v792 = vpop.permute.xlu0 %791
        %795 = vrot.lane.b32.xlu0 %v746, 32
        %v796 = vpop.permute.xlu0 %795
        %797 = vrot.lane.b32.xlu0 %v749, 32
        %v798 = vpop.permute.xlu0 %797
        %vm801 = vcmask 261120
        %v802 = vsel %vm801, %v751, 0
        %v804 = vsel %vm801, %v752, 0
        %v806 = vsel %vm801, %v723, 0
        %v808 = vsel %vm801, %v726, 0
        %810 = vmatpush.xpose.msra.mxu0 0.0
        %811 = vmatpush.xpose.msra.mxu0 0.0
        %812 = vmatpush.xpose.msra.mxu0 0.0
        %813 = vmatpush.xpose.msra.mxu0 0.0
        %814 = vmatpush.xpose.msra.mxu0 0.0
        %815 = vmatpush.xpose.msra.mxu0 0.0
        %816 = vmatpush.xpose.msra.mxu0 0.0
        %817 = vmatpush.xpose.msra.mxu0 0.0
        %818 = vmatpush.xpose.msra.mxu0 0.0
        %819 = vmatpush.xpose.msra.mxu0 0.0
        %820 = vmatpush.xpose.msra.mxu0 0.0
        %821 = vmatpush.xpose.msra.mxu0 0.0
        %822 = vmatpush.xpose.msra.mxu0 0.0
        %823 = vmatpush.xpose.msra.mxu0 0.0
        %824 = vmatpush.xpose.msra.mxu0 %v808
        %825 = vmatpush.xpose.msra.mxu0 %v806
        %826 = vmatmul.f32.gmra.mxu0 %v802
        %v827 = vpop.f32.mrf.mxu0
        %v828 = vadd.f32 0.0, %v827
        %829 = vmatmul.f32.gmra.mxu0 %v804
        %v830 = vpop.f32.mrf.mxu0
        %v831 = vadd.f32 0.0, %v830
        %832 = vdwg.mxu0
        %v833 = vsel %vm801, %v756, 0
        %v835 = vsel %vm801, %v758, 0
        %v837 = vsel %vm801, %v770, 0
        %v839 = vsel %vm801, %v772, 0
        %841 = vmatpush.xpose.msra.mxu0 0.0
        %842 = vmatpush.xpose.msra.mxu0 0.0
        %843 = vmatpush.xpose.msra.mxu0 0.0
        %844 = vmatpush.xpose.msra.mxu0 0.0
        %845 = vmatpush.xpose.msra.mxu0 0.0
        %846 = vmatpush.xpose.msra.mxu0 0.0
        %847 = vmatpush.xpose.msra.mxu0 0.0
        %848 = vmatpush.xpose.msra.mxu0 0.0
        %849 = vmatpush.xpose.msra.mxu0 0.0
        %850 = vmatpush.xpose.msra.mxu0 0.0
        %851 = vmatpush.xpose.msra.mxu0 0.0
        %852 = vmatpush.xpose.msra.mxu0 0.0
        %853 = vmatpush.xpose.msra.mxu0 0.0
        %854 = vmatpush.xpose.msra.mxu0 0.0
        %855 = vmatpush.xpose.msra.mxu0 %v839
        %856 = vmatpush.xpose.msra.mxu0 %v837
        %857 = vmatmul.f32.gmra.mxu0 %v833
        %v858 = vpop.f32.mrf.mxu0
        %v859 = vadd.f32 0.0, %v858
        %860 = vmatmul.f32.gmra.mxu0 %v835
        %v861 = vpop.f32.mrf.mxu0
        %v862 = vadd.f32 0.0, %v861
        %863 = vdwg.mxu0
        %v864 = vsel %vm801, %v760, 0
        %v866 = vsel %vm801, %v762, 0
        %v868 = vsel %vm801, %v774, 0
        %v870 = vsel %vm801, %v776, 0
        %872 = vmatpush.xpose.msra.mxu0 0.0
        %873 = vmatpush.xpose.msra.mxu0 0.0
        %874 = vmatpush.xpose.msra.mxu0 0.0
        %875 = vmatpush.xpose.msra.mxu0 0.0
        %876 = vmatpush.xpose.msra.mxu0 0.0
        %877 = vmatpush.xpose.msra.mxu0 0.0
        %878 = vmatpush.xpose.msra.mxu0 0.0
        %879 = vmatpush.xpose.msra.mxu0 0.0
        %880 = vmatpush.xpose.msra.mxu0 0.0
        %881 = vmatpush.xpose.msra.mxu0 0.0
        %882 = vmatpush.xpose.msra.mxu0 0.0
        %883 = vmatpush.xpose.msra.mxu0 0.0
        %884 = vmatpush.xpose.msra.mxu0 0.0
        %885 = vmatpush.xpose.msra.mxu0 0.0
        %886 = vmatpush.xpose.msra.mxu0 %v870
        %887 = vmatpush.xpose.msra.mxu0 %v868
        %888 = vmatmul.f32.gmra.mxu0 %v864
        %v889 = vpop.f32.mrf.mxu0
        %v890 = vadd.f32 0.0, %v889
        %891 = vmatmul.f32.gmra.mxu0 %v866
        %v892 = vpop.f32.mrf.mxu0
        %v893 = vadd.f32 0.0, %v892
        %894 = vdwg.mxu0
        %v895 = vsel %vm801, %v764, 0
        %v897 = vsel %vm801, %v766, 0
        %v899 = vsel %vm801, %v778, 0
        %v901 = vsel %vm801, %v780, 0
        %903 = vmatpush.xpose.msra.mxu0 0.0
        %904 = vmatpush.xpose.msra.mxu0 0.0
        %905 = vmatpush.xpose.msra.mxu0 0.0
        %906 = vmatpush.xpose.msra.mxu0 0.0
        %907 = vmatpush.xpose.msra.mxu0 0.0
        %908 = vmatpush.xpose.msra.mxu0 0.0
        %909 = vmatpush.xpose.msra.mxu0 0.0
        %910 = vmatpush.xpose.msra.mxu0 0.0
        %911 = vmatpush.xpose.msra.mxu0 0.0
        %912 = vmatpush.xpose.msra.mxu0 0.0
        %913 = vmatpush.xpose.msra.mxu0 0.0
        %914 = vmatpush.xpose.msra.mxu0 0.0
        %915 = vmatpush.xpose.msra.mxu0 0.0
        %916 = vmatpush.xpose.msra.mxu0 0.0
        %917 = vmatpush.xpose.msra.mxu0 %v901
        %918 = vmatpush.xpose.msra.mxu0 %v899
        %919 = vmatmul.f32.gmra.mxu0 %v895
        %v920 = vpop.f32.mrf.mxu0
        %v921 = vadd.f32 0.0, %v920
        %922 = vmatmul.f32.gmra.mxu0 %v897
        %v923 = vpop.f32.mrf.mxu0
        %v924 = vadd.f32 0.0, %v923
        %925 = vdwg.mxu0
        %v926 = vlaneseq
        %v927 = vand.u32 %v926, 127
        %v928 = vstv %s623
        %vm929 = vcmp.ge.s32.totalorder %v927, %v928
        %v930 = vsel %vm929, -1e+30, %v828
        %v931 = vsel %vm929, -1e+30, %v831
        %v932 = vsel %vm929, -1e+30, %v859
        %v933 = vsel %vm929, -1e+30, %v862
        %v934 = vsel %vm929, -1e+30, %v890
        %v935 = vsel %vm929, -1e+30, %v893
        %v936 = vsel %vm929, -1e+30, %v921
        %v937 = vsel %vm929, -1e+30, %v924
        %vm938 = vcmask 130048
        %v939 = vsel %vm938, %v930, -inf
        %940 = vmax.xlane.f32.xlu0 %v939
        %v941 = vpop.xlane.xlu0 %940
        %v942 = vsel %vm938, %v931, -inf
        %943 = vmax.xlane.f32.xlu0 %v942
        %v944 = vpop.xlane.xlu0 %943
        %v945 = vsel %vm938, %v932, -inf
        %946 = vmax.xlane.f32.xlu0 %v945
        %v947 = vpop.xlane.xlu0 %946
        %v948 = vsel %vm938, %v933, -inf
        %949 = vmax.xlane.f32.xlu0 %v948
        %v950 = vpop.xlane.xlu0 %949
        %v951 = vsel %vm938, %v934, -inf
        %952 = vmax.xlane.f32.xlu0 %v951
        %v953 = vpop.xlane.xlu0 %952
        %v954 = vsel %vm938, %v935, -inf
        %955 = vmax.xlane.f32.xlu0 %v954
        %v956 = vpop.xlane.xlu0 %955
        %v957 = vsel %vm938, %v936, -inf
        %958 = vmax.xlane.f32.xlu0 %v957
        %v959 = vpop.xlane.xlu0 %958
        %v960 = vsel %vm938, %v937, -inf
        %961 = vmax.xlane.f32.xlu0 %v960
        %v962 = vpop.xlane.xlu0 %961
        %v963 = vsub.f32 %v930, %v941
        %v964 = vsub.f32 %v931, %v944
        %v965 = vsub.f32 %v932, %v947
        %v966 = vsub.f32 %v933, %v950
        %v967 = vsub.f32 %v934, %v953
        %v968 = vsub.f32 %v935, %v956
        %v969 = vsub.f32 %v936, %v959
        %v970 = vsub.f32 %v937, %v962
        %v971 = vmul.f32 %v963, 1.442695
        %v972 = vpow.pop %v971
        %v973 = vmul.f32 %v964, 1.442695
        %v974 = vpow.pop %v973
        %v975 = vmul.f32 %v965, 1.442695
        %v976 = vpow.pop %v975
        %v977 = vmul.f32 %v966, 1.442695
        %v978 = vpow.pop %v977
        %v979 = vmul.f32 %v967, 1.442695
        %v980 = vpow.pop %v979
        %v981 = vmul.f32 %v968, 1.442695
        %v982 = vpow.pop %v981
        %v983 = vmul.f32 %v969, 1.442695
        %v984 = vpow.pop %v983
        %v985 = vmul.f32 %v970, 1.442695
        %v986 = vpow.pop %v985
        %v987 = vsel %vm938, %v972, 0.0
        %988 = vadd.xlane.f32.xlu0 %v987
        %v989 = vpop.xlane.xlu0 %988
        %v990 = vsel %vm938, %v974, 0.0
        %991 = vadd.xlane.f32.xlu0 %v990
        %v992 = vpop.xlane.xlu0 %991
        %v993 = vsel %vm938, %v976, 0.0
        %994 = vadd.xlane.f32.xlu0 %v993
        %v995 = vpop.xlane.xlu0 %994
        %v996 = vsel %vm938, %v978, 0.0
        %997 = vadd.xlane.f32.xlu0 %v996
        %v998 = vpop.xlane.xlu0 %997
        %v999 = vsel %vm938, %v980, 0.0
        %1000 = vadd.xlane.f32.xlu0 %v999
        %v1001 = vpop.xlane.xlu0 %1000
        %v1002 = vsel %vm938, %v982, 0.0
        %1003 = vadd.xlane.f32.xlu0 %v1002
        %v1004 = vpop.xlane.xlu0 %1003
        %v1005 = vsel %vm938, %v984, 0.0
        %1006 = vadd.xlane.f32.xlu0 %v1005
        %v1007 = vpop.xlane.xlu0 %1006
        %v1008 = vsel %vm938, %v986, 0.0
        %1009 = vadd.xlane.f32.xlu0 %v1008
        %v1010 = vpop.xlane.xlu0 %1009
        %v1011 = vrcp.pop %v989
        %v1012 = vrcp.pop %v992
        %v1013 = vrcp.pop %v995
        %v1014 = vrcp.pop %v998
        %v1015 = vrcp.pop %v1001
        %v1016 = vrcp.pop %v1004
        %v1017 = vrcp.pop %v1007
        %v1018 = vrcp.pop %v1010
        %v1019 = vmul.f32 %v972, %v1011
        %v1020 = vmul.f32 %v974, %v1012
        %v1021 = vmul.f32 %v976, %v1013
        %v1022 = vmul.f32 %v978, %v1014
        %v1023 = vmul.f32 %v980, %v1015
        %v1024 = vmul.f32 %v982, %v1016
        %v1025 = vmul.f32 %v984, %v1017
        %v1026 = vmul.f32 %v986, %v1018
        %v1028 = vsel %vm938, %v1019, 0
        %v1031 = vsel %vm938, %v1020, 0
        %1033 = vmatpush.msra.mxu0 0.0
        %1034 = vmatpush.msra.mxu0 0.0
        %1035 = vmatpush.msra.mxu0 0.0
        %1036 = vmatpush.msra.mxu0 0.0
        %1037 = vmatpush.msra.mxu0 0.0
        %1038 = vmatpush.msra.mxu0 0.0
        %1039 = vmatpush.msra.mxu0 0.0
        %1040 = vmatpush.msra.mxu0 0.0
        %1041 = vmatpush.msra.mxu0 0.0
        %1042 = vmatpush.msra.mxu0 0.0
        %1043 = vmatpush.msra.mxu0 0.0
        %1044 = vmatpush.msra.mxu0 0.0
        %1045 = vmatpush.msra.mxu0 0.0
        %1046 = vmatpush.msra.mxu0 0.0
        %1047 = vmatpush.msra.mxu0 %v749
        %1048 = vmatpush.msra.mxu0 %v746
        %1049 = vmatmul.f32.gmra.mxu0 %v1028
        %v1050 = vpop.f32.mrf.mxu0
        %v1051 = vadd.f32 0.0, %v1050
        %1052 = vmatmul.f32.gmra.mxu0 %v1031
        %v1053 = vpop.f32.mrf.mxu0
        %v1054 = vadd.f32 0.0, %v1053
        %1055 = vdwg.mxu0
        %v1057 = vsel %vm938, %v1021, 0
        %v1060 = vsel %vm938, %v1022, 0
        %1062 = vmatpush.msra.mxu0 0.0
        %1063 = vmatpush.msra.mxu0 0.0
        %1064 = vmatpush.msra.mxu0 0.0
        %1065 = vmatpush.msra.mxu0 0.0
        %1066 = vmatpush.msra.mxu0 0.0
        %1067 = vmatpush.msra.mxu0 0.0
        %1068 = vmatpush.msra.mxu0 0.0
        %1069 = vmatpush.msra.mxu0 0.0
        %1070 = vmatpush.msra.mxu0 0.0
        %1071 = vmatpush.msra.mxu0 0.0
        %1072 = vmatpush.msra.mxu0 0.0
        %1073 = vmatpush.msra.mxu0 0.0
        %1074 = vmatpush.msra.mxu0 0.0
        %1075 = vmatpush.msra.mxu0 0.0
        %1076 = vmatpush.msra.mxu0 %v786
        %1077 = vmatpush.msra.mxu0 %v784
        %1078 = vmatmul.f32.gmra.mxu0 %v1057
        %v1079 = vpop.f32.mrf.mxu0
        %v1080 = vadd.f32 0.0, %v1079
        %1081 = vmatmul.f32.gmra.mxu0 %v1060
        %v1082 = vpop.f32.mrf.mxu0
        %v1083 = vadd.f32 0.0, %v1082
        %1084 = vdwg.mxu0
        %v1086 = vsel %vm938, %v1023, 0
        %v1089 = vsel %vm938, %v1024, 0
        %1091 = vmatpush.msra.mxu0 0.0
        %1092 = vmatpush.msra.mxu0 0.0
        %1093 = vmatpush.msra.mxu0 0.0
        %1094 = vmatpush.msra.mxu0 0.0
        %1095 = vmatpush.msra.mxu0 0.0
        %1096 = vmatpush.msra.mxu0 0.0
        %1097 = vmatpush.msra.mxu0 0.0
        %1098 = vmatpush.msra.mxu0 0.0
        %1099 = vmatpush.msra.mxu0 0.0
        %1100 = vmatpush.msra.mxu0 0.0
        %1101 = vmatpush.msra.mxu0 0.0
        %1102 = vmatpush.msra.mxu0 0.0
        %1103 = vmatpush.msra.mxu0 0.0
        %1104 = vmatpush.msra.mxu0 0.0
        %1105 = vmatpush.msra.mxu0 %v792
        %1106 = vmatpush.msra.mxu0 %v790
        %1107 = vmatmul.f32.gmra.mxu0 %v1086
        %v1108 = vpop.f32.mrf.mxu0
        %v1109 = vadd.f32 0.0, %v1108
        %1110 = vmatmul.f32.gmra.mxu0 %v1089
        %v1111 = vpop.f32.mrf.mxu0
        %v1112 = vadd.f32 0.0, %v1111
        %1113 = vdwg.mxu0
        %v1115 = vsel %vm938, %v1025, 0
        %v1118 = vsel %vm938, %v1026, 0
        %1120 = vmatpush.msra.mxu0 0.0
        %1121 = vmatpush.msra.mxu0 0.0
        %1122 = vmatpush.msra.mxu0 0.0
        %1123 = vmatpush.msra.mxu0 0.0
        %1124 = vmatpush.msra.mxu0 0.0
        %1125 = vmatpush.msra.mxu0 0.0
        %1126 = vmatpush.msra.mxu0 0.0
        %1127 = vmatpush.msra.mxu0 0.0
        %1128 = vmatpush.msra.mxu0 0.0
        %1129 = vmatpush.msra.mxu0 0.0
        %1130 = vmatpush.msra.mxu0 0.0
        %1131 = vmatpush.msra.mxu0 0.0
        %1132 = vmatpush.msra.mxu0 0.0
        %1133 = vmatpush.msra.mxu0 0.0
        %1134 = vmatpush.msra.mxu0 %v798
        %1135 = vmatpush.msra.mxu0 %v796
        %1136 = vmatmul.f32.gmra.mxu0 %v1115
        %v1137 = vpop.f32.mrf.mxu0
        %v1138 = vadd.f32 0.0, %v1137
        %1139 = vmatmul.f32.gmra.mxu0 %v1118
        %v1140 = vpop.f32.mrf.mxu0
        %v1141 = vadd.f32 0.0, %v1140
        %1142 = vdwg.mxu0
        %1145 = vrot.lane.b32.xlu0 %v1080, 32
        %v1146 = vpop.permute.xlu0 %1145
        %1147 = vrot.lane.b32.xlu0 %v1083, 32
        %v1148 = vpop.permute.xlu0 %1147
        %1153 = vrot.lane.b32.xlu0 %v1109, 64
        %v1154 = vpop.permute.xlu0 %1153
        %1155 = vrot.lane.b32.xlu0 %v1112, 64
        %v1156 = vpop.permute.xlu0 %1155
        %1161 = vrot.lane.b32.xlu0 %v1138, 96
        %v1162 = vpop.permute.xlu0 %1161
        %1163 = vrot.lane.b32.xlu0 %v1141, 96
        %v1164 = vpop.permute.xlu0 %1163
        %v1167 = vsel %vm801, %v1051, %v1146
        %v1168 = vsel %vm801, %v1054, %v1148
        %vm1169 = vcmask 523264
        %v1170 = vsel %vm1169, %v1167, %v1154
        %v1171 = vsel %vm1169, %v1168, %v1156
        %vm1172 = vcmask 785408
        %v1173 = vsel %vm1172, %v1170, %v1162
        %v1174 = vsel %vm1172, %v1171, %v1164
        %v1175 = vld [vmem:[#allocation10] sm:$0xff]
        %v1176 = vld [vmem:[#allocation10 + $0x8] sm:$0xff]
        %v1177 = vld [vmem:[#allocation10 + $0x10] sm:$0xff]
        %v1178 = vld [vmem:[#allocation10 + $0x18] sm:$0xff]
        %v1179 = vld [vmem:[#allocation10 + $0x20] sm:$0xff]
        %v1180 = vld [vmem:[#allocation10 + $0x28] sm:$0xff]
        %v1181 = vld [vmem:[#allocation10 + $0x30] sm:$0xff]
        %v1182 = vld [vmem:[#allocation10 + $0x38] sm:$0xff]
        %v1183 = vld [vmem:[#allocation10 + $0x40] sm:$0xff]
        %v1184 = vld [vmem:[#allocation10 + $0x48] sm:$0xff]
        %v1185 = vld [vmem:[#allocation10 + $0x50] sm:$0xff]
        %v1186 = vld [vmem:[#allocation10 + $0x58] sm:$0xff]
        %v1187 = vld [vmem:[#allocation10 + $0x60] sm:$0xff]
        %v1188 = vld [vmem:[#allocation10 + $0x68] sm:$0xff]
        %v1189 = vld [vmem:[#allocation10 + $0x70] sm:$0xff]
        %v1190 = vld [vmem:[#allocation10 + $0x78] sm:$0xff]
        %v1191 = vld [vmem:[%s5] sm:$0x1]
        %v1193 = vperm.slane %v1191, 0
        %1195 = vmatpush.msra.mxu0 %v1190
        %1196 = vmatpush.msra.mxu0 %v1189
        %1197 = vmatpush.msra.mxu0 %v1188
        %1198 = vmatpush.msra.mxu0 %v1187
        %1199 = vmatpush.msra.mxu0 %v1186
        %1200 = vmatpush.msra.mxu0 %v1185
        %1201 = vmatpush.msra.mxu0 %v1184
        %1202 = vmatpush.msra.mxu0 %v1183
        %1203 = vmatpush.msra.mxu0 %v1182
        %1204 = vmatpush.msra.mxu0 %v1181
        %1205 = vmatpush.msra.mxu0 %v1180
        %1206 = vmatpush.msra.mxu0 %v1179
        %1207 = vmatpush.msra.mxu0 %v1178
        %1208 = vmatpush.msra.mxu0 %v1177
        %1209 = vmatpush.msra.mxu0 %v1176
        %1210 = vmatpush.msra.mxu0 %v1175
        %1211 = vmatmul.f32.gmra.mxu0 %v1173
        %v1212 = vpop.f32.mrf.mxu0
        %v1213 = vadd.f32 %v1193, %v1212
        %1214 = vmatmul.f32.gmra.mxu0 %v1174
        %v1215 = vpop.f32.mrf.mxu0
        %v1216 = vadd.f32 %v1193, %v1215
        %1217 = vdwg.mxu0
        %v1218 = vld [vmem:[#allocation12] sm:$0xff]
        %v1219 = vld [vmem:[#allocation12 + $0x8] sm:$0xff]
        %v1220 = vld [vmem:[#allocation12 + $0x10] sm:$0xff]
        %v1221 = vld [vmem:[#allocation12 + $0x18] sm:$0xff]
        %v1222 = vld [vmem:[#allocation12 + $0x20] sm:$0xff]
        %v1223 = vld [vmem:[#allocation12 + $0x28] sm:$0xff]
        %v1224 = vld [vmem:[#allocation12 + $0x30] sm:$0xff]
        %v1225 = vld [vmem:[#allocation12 + $0x38] sm:$0xff]
        %v1226 = vld [vmem:[#allocation12 + $0x40] sm:$0xff]
        %v1227 = vld [vmem:[#allocation12 + $0x48] sm:$0xff]
        %v1228 = vld [vmem:[#allocation12 + $0x50] sm:$0xff]
        %v1229 = vld [vmem:[#allocation12 + $0x58] sm:$0xff]
        %v1230 = vld [vmem:[#allocation12 + $0x60] sm:$0xff]
        %v1231 = vld [vmem:[#allocation12 + $0x68] sm:$0xff]
        %v1232 = vld [vmem:[#allocation12 + $0x70] sm:$0xff]
        %v1233 = vld [vmem:[#allocation12 + $0x78] sm:$0xff]
        %v1234 = vld [vmem:[%s7] sm:$0x1]
        %v1236 = vperm.slane %v1234, 0
        %1238 = vmatpush.msra.mxu0 %v1233
        %1239 = vmatpush.msra.mxu0 %v1232
        %1240 = vmatpush.msra.mxu0 %v1231
        %1241 = vmatpush.msra.mxu0 %v1230
        %1242 = vmatpush.msra.mxu0 %v1229
        %1243 = vmatpush.msra.mxu0 %v1228
        %1244 = vmatpush.msra.mxu0 %v1227
        %1245 = vmatpush.msra.mxu0 %v1226
        %1246 = vmatpush.msra.mxu0 %v1225
        %1247 = vmatpush.msra.mxu0 %v1224
        %1248 = vmatpush.msra.mxu0 %v1223
        %1249 = vmatpush.msra.mxu0 %v1222
        %1250 = vmatpush.msra.mxu0 %v1221
        %1251 = vmatpush.msra.mxu0 %v1220
        %1252 = vmatpush.msra.mxu0 %v1219
        %1253 = vmatpush.msra.mxu0 %v1218
        %1254 = vmatmul.f32.gmra.mxu0 %v1213
        %v1255 = vpop.f32.mrf.mxu0
        %v1256 = vadd.f32 %v1236, %v1255
        %1257 = vmatmul.f32.gmra.mxu0 %v1216
        %v1258 = vpop.f32.mrf.mxu0
        %v1259 = vadd.f32 %v1236, %v1258
        %1260 = vdwg.mxu0
        %v1261 = vadd.f32 %v1256, %v624
        %v1262 = vadd.f32 %v1259, %v625
        %v1263 = vld [vmem:[%s8] sm:$0x1]
        %v1264 = vld [vmem:[%s9] sm:$0x1]
        %1265 = vadd.xlane.f32.xlu0 %v1261
        %v1266 = vpop.xlane.xlu0 %1265
        %1267 = vadd.xlane.f32.xlu0 %v1262
        %v1268 = vpop.xlane.xlu0 %1267
        %v1269 = vrcp.pop 128.0
        %v1270 = vmul.f32 128.0, %v1269
        %v1271 = vsub.f32 1.0, %v1270
        %v1272 = vmul.f32 %v1269, %v1271
        %v1273 = vadd.f32 %v1269, %v1272
        %vm1274 = vweird.f32 %v1269
        %v1275 = vsel %vm1274, %v1269, %v1273
        %v1276 = vmul.f32 %v1266, %v1275
        %v1277 = vmul.f32 %v1268, %v1275
        %v1278 = vsub.f32 %v1261, %v1276
        %v1279 = vsub.f32 %v1262, %v1277
        %v1280 = vmul.f32 %v1278, %v1278
        %v1281 = vmul.f32 %v1279, %v1279
        %1282 = vadd.xlane.f32.xlu0 %v1280
        %v1283 = vpop.xlane.xlu0 %1282
        %1284 = vadd.xlane.f32.xlu0 %v1281
        %v1285 = vpop.xlane.xlu0 %1284
        %v1286 = vmul.f32 %v1283, %v1275
        %v1287 = vmul.f32 %v1285, %v1275
        %v1288 = vadd.f32 %v1286, 1e-05
        %v1289 = vadd.f32 %v1287, 1e-05
        %v1290 = vrsqrt.pop %v1288
        %v1291 = vmul.f32 %v1290, %v1288
        %v1292 = vmul.f32 %v1291, %v1290
        %v1293 = vmul.f32 0.5, %v1292
        %v1294 = vsub.f32 1.5, %v1293
        %v1295 = vmul.f32 %v1290, %v1294
        %vm1296 = vweird.f32 %v1288
        %vm1297 = vweird.f32 %v1290
        %vm1298 = vmor %vm1296, %vm1297
        %v1299 = vsel %vm1298, %v1290, %v1295
        %v1300 = vrsqrt.pop %v1289
        %v1301 = vmul.f32 %v1300, %v1289
        %v1302 = vmul.f32 %v1301, %v1300
        %v1303 = vmul.f32 0.5, %v1302
        %v1304 = vsub.f32 1.5, %v1303
        %v1305 = vmul.f32 %v1300, %v1304
        %vm1306 = vweird.f32 %v1289
        %vm1307 = vweird.f32 %v1300
        %vm1308 = vmor %vm1306, %vm1307
        %v1309 = vsel %vm1308, %v1300, %v1305
        %v1310 = vmul.f32 %v1278, %v1299
        %v1311 = vmul.f32 %v1279, %v1309
        %v1313 = vperm.slane %v1263, 0
        %v1315 = vmul.f32 %v1310, %v1313
        %v1316 = vmul.f32 %v1311, %v1313
        %v1318 = vperm.slane %v1264, 0
        %v1320 = vadd.f32 %v1315, %v1318
        %v1321 = vadd.f32 %v1316, %v1318
        %v1322 = vld [vmem:[#allocation13] sm:$0xff]
        %v1323 = vld [vmem:[#allocation13 + $0x8] sm:$0xff]
        %v1324 = vld [vmem:[#allocation13 + $0x10] sm:$0xff]
        %v1325 = vld [vmem:[#allocation13 + $0x18] sm:$0xff]
        %v1326 = vld [vmem:[#allocation13 + $0x20] sm:$0xff]
        %v1327 = vld [vmem:[#allocation13 + $0x28] sm:$0xff]
        %v1328 = vld [vmem:[#allocation13 + $0x30] sm:$0xff]
        %v1329 = vld [vmem:[#allocation13 + $0x38] sm:$0xff]
        %v1330 = vld [vmem:[#allocation13 + $0x40] sm:$0xff]
        %v1331 = vld [vmem:[#allocation13 + $0x48] sm:$0xff]
        %v1332 = vld [vmem:[#allocation13 + $0x50] sm:$0xff]
        %v1333 = vld [vmem:[#allocation13 + $0x58] sm:$0xff]
        %v1334 = vld [vmem:[#allocation13 + $0x60] sm:$0xff]
        %v1335 = vld [vmem:[#allocation13 + $0x68] sm:$0xff]
        %v1336 = vld [vmem:[#allocation13 + $0x70] sm:$0xff]
        %v1337 = vld [vmem:[#allocation13 + $0x78] sm:$0xff]
        %v1338 = vld [vmem:[%s11] sm:$0x1]
        %v1340 = vperm.slane %v1338, 0
        %1342 = vmatpush.msra.mxu0 %v1337
        %1343 = vmatpush.msra.mxu0 %v1336
        %1344 = vmatpush.msra.mxu0 %v1335
        %1345 = vmatpush.msra.mxu0 %v1334
        %1346 = vmatpush.msra.mxu0 %v1333
        %1347 = vmatpush.msra.mxu0 %v1332
        %1348 = vmatpush.msra.mxu0 %v1331
        %1349 = vmatpush.msra.mxu0 %v1330
        %1350 = vmatpush.msra.mxu0 %v1329
        %1351 = vmatpush.msra.mxu0 %v1328
        %1352 = vmatpush.msra.mxu0 %v1327
        %1353 = vmatpush.msra.mxu0 %v1326
        %1354 = vmatpush.msra.mxu0 %v1325
        %1355 = vmatpush.msra.mxu0 %v1324
        %1356 = vmatpush.msra.mxu0 %v1323
        %1357 = vmatpush.msra.mxu0 %v1322
        %1358 = vmatmul.f32.gmra.mxu0 %v1320
        %v1359 = vpop.f32.mrf.mxu0
        %v1360 = vadd.f32 %v1340, %v1359
        %1361 = vmatmul.f32.gmra.mxu0 %v1321
        %v1362 = vpop.f32.mrf.mxu0
        %v1363 = vadd.f32 %v1340, %v1362
        %1364 = vdwg.mxu0
        %v1365 = vmul.f32 %v1360, 0.5
        %v1366 = vmul.f32 %v1363, 0.5
        %v1367 = vmul.f32 %v1360, 0.70710677
        %v1368 = vmul.f32 %v1363, 0.70710677
        %vm1369 = vcmp.ge.f32.partialorder %v1367, 0.0
        %vm1370 = vcmp.ge.f32.partialorder %v1368, 0.0
        %v1371 = vsel %vm1369, 1.0, -1.0
        %v1372 = vsel %vm1370, 1.0, -1.0
        %v1373 = vand.u32 2147483647, %v1367
        %v1374 = vand.u32 2147483647, %v1368
        %v1375 = vmul.f32 %v1373, 0.3275911
        %v1376 = vmul.f32 %v1374, 0.3275911
        %v1377 = vadd.f32 %v1375, 1.0
        %v1378 = vadd.f32 %v1376, 1.0
        %v1379 = vrcp.pop %v1377
        %v1380 = vmul.f32 %v1377, %v1379
        %v1381 = vsub.f32 1.0, %v1380
        %v1382 = vmul.f32 %v1379, %v1381
        %v1383 = vadd.f32 %v1379, %v1382
        %vm1384 = vweird.f32 %v1377
        %vm1385 = vweird.f32 %v1379
        %vm1386 = vmor %vm1384, %vm1385
        %v1387 = vsel %vm1386, %v1379, %v1383
        %v1388 = vand.u32 2147483647, %v1377
        %vm1389 = vcmp.eq.f32.partialorder %v1388, 8.507059e+37
        %v1390 = vand.u32 %v1377, 2147483648
        %v1391 = vor.u32 1.1754944e-38, %v1390
        %v1392 = vsel %vm1389, %v1391, %v1387
        %v1393 = vmul.f32 1.0, %v1392
        %v1394 = vrcp.pop %v1378
        %v1395 = vmul.f32 %v1378, %v1394
        %v1396 = vsub.f32 1.0, %v1395
        %v1397 = vmul.f32 %v1394, %v1396
        %v1398 = vadd.f32 %v1394, %v1397
        %vm1399 = vweird.f32 %v1378
        %vm1400 = vweird.f32 %v1394
        %vm1401 = vmor %vm1399, %vm1400
        %v1402 = vsel %vm1401, %v1394, %v1398
        %v1403 = vand.u32 2147483647, %v1378
        %vm1404 = vcmp.eq.f32.partialorder %v1403, 8.507059e+37
        %v1405 = vand.u32 %v1378, 2147483648
        %v1406 = vor.u32 1.1754944e-38, %v1405
        %v1407 = vsel %vm1404, %v1406, %v1402
        %v1408 = vmul.f32 1.0, %v1407
        %v1409 = vmul.f32 %v1393, 1.0614054
        %v1410 = vmul.f32 %v1408, 1.0614054
        %v1411 = vadd.f32 %v1409, -1.4531521
        %v1412 = vadd.f32 %v1410, -1.4531521
        %v1413 = vmul.f32 %v1411, %v1393
        %v1414 = vmul.f32 %v1412, %v1408
        %v1415 = vadd.f32 %v1413, 1.4214138
        %v1416 = vadd.f32 %v1414, 1.4214138
        %v1417 = vmul.f32 %v1415, %v1393
        %v1418 = vmul.f32 %v1416, %v1408
        %v1419 = vadd.f32 %v1417, -0.28449672
        %v1420 = vadd.f32 %v1418, -0.28449672
        %v1421 = vmul.f32 %v1419, %v1393
        %v1422 = vmul.f32 %v1420, %v1408
        %v1423 = vadd.f32 %v1421, 0.2548296
        %v1424 = vadd.f32 %v1422, 0.2548296
        %v1425 = vmul.f32 %v1423, %v1393
        %v1426 = vmul.f32 %v1424, %v1408
        %v1427 = vsub.f32 0.0, %v1373
        %v1428 = vsub.f32 0.0, %v1374
        %v1429 = vmul.f32 %v1427, %v1373
        %v1430 = vmul.f32 %v1428, %v1374
        %v1431 = vmul.f32 %v1429, 1.442695
        %v1432 = vpow.pop %v1431
        %v1433 = vmul.f32 %v1430, 1.442695
        %v1434 = vpow.pop %v1433
        %v1435 = vmul.f32 %v1425, %v1432
        %v1436 = vmul.f32 %v1426, %v1434
        %v1437 = vsub.f32 1.0, %v1435
        %v1438 = vsub.f32 1.0, %v1436
        %v1439 = vmul.f32 %v1371, %v1437
        %v1440 = vmul.f32 %v1372, %v1438
        %v1441 = vadd.f32 %v1439, 1.0
        %v1442 = vadd.f32 %v1440, 1.0
        %v1443 = vmul.f32 %v1365, %v1441
        %v1444 = vmul.f32 %v1366, %v1442
        %v1445 = vld [vmem:[#allocation15] sm:$0xff]
        %v1446 = vld [vmem:[#allocation15 + $0x8] sm:$0xff]
        %v1447 = vld [vmem:[#allocation15 + $0x10] sm:$0xff]
        %v1448 = vld [vmem:[#allocation15 + $0x18] sm:$0xff]
        %v1449 = vld [vmem:[#allocation15 + $0x20] sm:$0xff]
        %v1450 = vld [vmem:[#allocation15 + $0x28] sm:$0xff]
        %v1451 = vld [vmem:[#allocation15 + $0x30] sm:$0xff]
        %v1452 = vld [vmem:[#allocation15 + $0x38] sm:$0xff]
        %v1453 = vld [vmem:[#allocation15 + $0x40] sm:$0xff]
        %v1454 = vld [vmem:[#allocation15 + $0x48] sm:$0xff]
        %v1455 = vld [vmem:[#allocation15 + $0x50] sm:$0xff]
        %v1456 = vld [vmem:[#allocation15 + $0x58] sm:$0xff]
        %v1457 = vld [vmem:[#allocation15 + $0x60] sm:$0xff]
        %v1458 = vld [vmem:[#allocation15 + $0x68] sm:$0xff]
        %v1459 = vld [vmem:[#allocation15 + $0x70] sm:$0xff]
        %v1460 = vld [vmem:[#allocation15 + $0x78] sm:$0xff]
        %v1461 = vld [vmem:[%s13] sm:$0x1]
        %v1463 = vperm.slane %v1461, 0
        %1465 = vmatpush.msra.mxu0 %v1460
        %1466 = vmatpush.msra.mxu0 %v1459
        %1467 = vmatpush.msra.mxu0 %v1458
        %1468 = vmatpush.msra.mxu0 %v1457
        %1469 = vmatpush.msra.mxu0 %v1456
        %1470 = vmatpush.msra.mxu0 %v1455
        %1471 = vmatpush.msra.mxu0 %v1454
        %1472 = vmatpush.msra.mxu0 %v1453
        %1473 = vmatpush.msra.mxu0 %v1452
        %1474 = vmatpush.msra.mxu0 %v1451
        %1475 = vmatpush.msra.mxu0 %v1450
        %1476 = vmatpush.msra.mxu0 %v1449
        %1477 = vmatpush.msra.mxu0 %v1448
        %1478 = vmatpush.msra.mxu0 %v1447
        %1479 = vmatpush.msra.mxu0 %v1446
        %1480 = vmatpush.msra.mxu0 %v1445
        %1481 = vmatmul.f32.gmra.mxu0 %v1443
        %v1482 = vpop.f32.mrf.mxu0
        %v1483 = vadd.f32 %v1463, %v1482
        %1484 = vmatmul.f32.gmra.mxu0 %v1444
        %v1485 = vpop.f32.mrf.mxu0
        %v1486 = vadd.f32 %v1463, %v1485
        %1487 = vdwg.mxu0
        %v1488 = vadd.f32 %v1483, %v1320
        %v1489 = vadd.f32 %v1486, %v1321
        %v1490 = vld [vmem:[%s14] sm:$0x1]
        %v1491 = vld [vmem:[%s15] sm:$0x1]
        %1492 = vadd.xlane.f32.xlu0 %v1488
        %v1493 = vpop.xlane.xlu0 %1492
        %1494 = vadd.xlane.f32.xlu0 %v1489
        %v1495 = vpop.xlane.xlu0 %1494
        %v1496 = vmul.f32 %v1493, %v1275
        %v1497 = vmul.f32 %v1495, %v1275
        %v1498 = vsub.f32 %v1488, %v1496
        %v1499 = vsub.f32 %v1489, %v1497
        %v1500 = vmul.f32 %v1498, %v1498
        %v1501 = vmul.f32 %v1499, %v1499
        %1502 = vadd.xlane.f32.xlu0 %v1500
        %v1503 = vpop.xlane.xlu0 %1502
        %1504 = vadd.xlane.f32.xlu0 %v1501
        %v1505 = vpop.xlane.xlu0 %1504
        %v1506 = vmul.f32 %v1503, %v1275
        %v1507 = vmul.f32 %v1505, %v1275
        %v1508 = vadd.f32 %v1506, 1e-05
        %v1509 = vadd.f32 %v1507, 1e-05
        %v1510 = vrsqrt.pop %v1508
        %v1511 = vmul.f32 %v1510, %v1508
        %v1512 = vmul.f32 %v1511, %v1510
        %v1513 = vmul.f32 0.5, %v1512
        %v1514 = vsub.f32 1.5, %v1513
        %v1515 = vmul.f32 %v1510, %v1514
        %vm1516 = vweird.f32 %v1508
        %vm1517 = vweird.f32 %v1510
        %vm1518 = vmor %vm1516, %vm1517
        %v1519 = vsel %vm1518, %v1510, %v1515
        %v1520 = vrsqrt.pop %v1509
        %v1521 = vmul.f32 %v1520, %v1509
        %v1522 = vmul.f32 %v1521, %v1520
        %v1523 = vmul.f32 0.5, %v1522
        %v1524 = vsub.f32 1.5, %v1523
        %v1525 = vmul.f32 %v1520, %v1524
        %vm1526 = vweird.f32 %v1509
        %vm1527 = vweird.f32 %v1520
        %vm1528 = vmor %vm1526, %vm1527
        %v1529 = vsel %vm1528, %v1520, %v1525
        %v1530 = vmul.f32 %v1498, %v1519
        %v1531 = vmul.f32 %v1499, %v1529
        %v1533 = vperm.slane %v1490, 0
        %v1535 = vmul.f32 %v1530, %v1533
        %v1536 = vmul.f32 %v1531, %v1533
        %v1538 = vperm.slane %v1491, 0
        %v1540 = vadd.f32 %v1535, %v1538
        %v1541 = vadd.f32 %v1536, %v1538
        %1542 = vst [vmem:[%s620] sm:$0xff] %v1540
        %1543 = vst [vmem:[%s620 + $0x8] sm:$0xff] %v1541
        %s1544 = sand.u32 %s372, 1
        %s1545 = scalar_lea.sflag [#allocation6], %s1544
        %s1546 = sand.u32 %s372, 1
        %s1547 = smul.addr %s1546, 16
        %s1548 = scalar_lea.vmem [#allocation16], %s1547
        // Predicated region
        $region109: #{tpu_custom_call.1} parent=79 // pred_check
          %p1549 = pneg %p382
        $region110: #{tpu_custom_call.1} parent=79 // pred_check_branch
          %1551 = sbr.rel (%p1549) target = $region112
        $region111: #{tpu_custom_call.1} parent=79 // pred_region
          %s1552 = smul.u32 2, %s44
          %1554 = vsyncadd %s1545, 0
          %s1555 = smul.addr %s1552, 8
          %s1556 = scalar_lea.hbm %s16, %s1555
          %s1557 = sshll.u32 %s1548, 4
          %s1558 = int_to_ptr.vmem [resolvable:$true] %s1557
          %s1559 = sshll.u32 %s1556, 4
          %s1560 = int_to_ptr.hbm [resolvable:$true] %s1559
          %1565 = dma.vmem_to_hbm [thread:$0]  %s1558, 256, %s1560, %s1545, 128, 128, 8
        $region112: #{tpu_custom_call.1} parent=79 // pred_fallthru
          _
      $region80: #{tpu_custom_call.1} parent=5 // pred_fallthru
        _
      %p1566 = scmp.le.s32.totalorder 2, %s39
      // Predicated region
      $region113: #{tpu_custom_call.1} parent=5 // pred_check
        %p1567 = pneg %p1566
      $region114: #{tpu_custom_call.1} parent=5 // pred_check_branch
        %1569 = sbr.rel (%p1567) target = $region116
      $region115: #{tpu_custom_call.1} parent=5 // pred_region
        %s1570 = ssub.s32 %s39, 2
        // Predicated region
        $region117: #{tpu_custom_call.1} parent=115 // pred_check
          %p1571 = pneg %p388
        $region118: #{tpu_custom_call.1} parent=115 // pred_check_branch
          %1573 = sbr.rel (%p1571) target = $region120
        $region119: #{tpu_custom_call.1} parent=115 // pred_region
          %s1574 = sand.u32 %s373, 1
          %s1575 = scalar_lea.sflag [#allocation6], %s1574
          %s1576 = sand.u32 %s373, 1
          %s1577 = smul.addr %s1576, 16
          %s1578 = scalar_lea.vmem [#allocation16], %s1577
          %1580 = dma.done %s1575, 256
        $region120: #{tpu_custom_call.1} parent=115 // pred_fallthru
          _
      $region116: #{tpu_custom_call.1} parent=5 // pred_fallthru
        _
    $region6: #{tpu_custom_call.1} parent=1 // loop_footer
      %s43 = sadd.s32 1, %s39
    $region7: #{tpu_custom_call.1} parent=1 // loop_footer_branch
      %38 = sbr.rel target = $region3
    $region8: #{tpu_custom_call.1} parent=1 // loop_exit
      _
    %1581 = vsyncpa [#allocation5], 1
    %s1582 = scalar_lea.sflag [#allocation5], 1
    %1583 = vsyncpa %s1582, 1
    %1584 = vsyncpa [#allocation8], 1
    %1585 = vsyncpa [#allocation11], 1
    %1586 = vsyncpa [#allocation14], 1
    %1587 = vsyncpa [#allocation6], 1
    %s1588 = scalar_lea.sflag [#allocation6], 1
    %1589 = vsyncpa %s1588, 1

// kernel: tpu_custom_call.1
$region0: #{tpu_custom_call.1}
  #allocation0 [shape = 'u32[]', space=smem, size = 0x4, offset = 0x4, fixed_abs, tag = 'smem constant byte address 0x4 - core index']
  #allocation1 [shape = 'u32[72,128]{1,0:T(1,128)}', space=vmem, size = 0x9000, scoped, tag = 'internal scratch']
  #allocation2 [shape = 's32[1]{0}', space=sflag, size = 0x4, scoped, tag = 'scoped memory for tpu_custom_call.1']
  #allocation3 [shape = 'u8[512]{0}', space=smem, size = 0x200, scoped, tag = 'prefetched SMEM operand 0']
  %s0 = inlined_call_operand.hbm [shape: s32[2], index: 0, kind: input, shape index: {}]
  %s1 = inlined_call_operand.hbm [shape: f32[32,128], index: 1, kind: input, shape index: {}]
  %s2 = inlined_call_operand.hbm [shape: f32[128,384], index: 2, kind: input, shape index: {}]
  %s3 = inlined_call_operand.hbm [shape: f32[1,384], index: 3, kind: input, shape index: {}]
  %s4 = inlined_call_operand.hbm [shape: f32[128,128], index: 4, kind: input, shape index: {}]
  %s5 = inlined_call_operand.vmem [shape: f32[1,128], index: 5, kind: input, shape index: {}]
  %s6 = inlined_call_operand.hbm [shape: f32[128,128], index: 6, kind: input, shape index: {}]
  %s7 = inlined_call_operand.vmem [shape: f32[1,128], index: 7, kind: input, shape index: {}]
  %s8 = inlined_call_operand.vmem [shape: f32[1,128], index: 8, kind: input, shape index: {}]
  %s9 = inlined_call_operand.vmem [shape: f32[1,128], index: 9, kind: input, shape index: {}]
  %s10 = inlined_call_operand.hbm [shape: f32[128,128], index: 10, kind: input, shape index: {}]
  %s11 = inlined_call_operand.vmem [shape: f32[1,128], index: 11, kind: input, shape index: {}]
  %s12 = inlined_call_operand.hbm [shape: f32[128,128], index: 12, kind: input, shape index: {}]
  %s13 = inlined_call_operand.vmem [shape: f32[1,128], index: 13, kind: input, shape index: {}]
  %s14 = inlined_call_operand.vmem [shape: f32[1,128], index: 14, kind: input, shape index: {}]
  %s15 = inlined_call_operand.vmem [shape: f32[1,128], index: 15, kind: input, shape index: {}]
  %s16 = inlined_call_operand.hbm [shape: f32[32,128], index: 16, kind: output, shape index: {}]
  %s17 = sld [smem:[#allocation0]]
  $region121: #{tpu_custom_call.1} parent=0
    _
  %s19 = ssub.s32 1, %s17
  %s20 = scalar_select 0, %s19, %s17
  %s22 = sshll.u32 %s0, 4
  %s23 = int_to_ptr.hbm [resolvable:$true] %s22
  %25 = dma.hbm_to_smem %s23, 16, [#allocation3], [#allocation2]
  %27 = dma.done [#allocation2], 16
  %28 = sfence
  $region1: #{tpu_custom_call.1} parent=0
    #allocation4 [shape = 'u8[16384]{0}', space=vmem, size = 0x4000, scoped, tag = 'input window, operand 1']
    #allocation5 [shape = 's32[2]{0}', space=sflag, size = 0x8, scoped, tag = 'scoped memory for tpu_custom_call.1']
    #allocation6 [shape = 's32[2]{0}', space=sflag, size = 0x8, scoped, tag = 'scoped memory for tpu_custom_call.1']
    #allocation7 [shape = 'u8[196608]{0}', space=vmem, size = 0x30000, scoped, tag = 'input window, operand 2, single buffered']
    #allocation8 [shape = 's32[1]{0}', space=sflag, size = 0x4, scoped, tag = 'scoped memory for tpu_custom_call.1']
    #allocation9 [shape = 'u8[1536]{0}', space=vmem, size = 0x800, scoped, tag = 'input window, operand 3, single buffered']
    #allocation10 [shape = 'u8[65536]{0}', space=vmem, size = 0x10000, scoped, tag = 'input window, operand 4, single buffered']
    #allocation11 [shape = 's32[1]{0}', space=sflag, size = 0x4, scoped, tag = 'scoped memory for tpu_custom_call.1']
    #allocation12 [shape = 'u8[65536]{0}', space=vmem, size = 0x10000, scoped, tag = 'input window, operand 6, single buffered']
    #allocation13 [shape = 'u8[65536]{0}', space=vmem, size = 0x10000, scoped, tag = 'input window, operand 10, single buffered']
    #allocation14 [shape = 's32[1]{0}', space=sflag, size = 0x4, scoped, tag = 'scoped memory for tpu_custom_call.1']
    #allocation15 [shape = 'u8[65536]{0}', space=vmem, size = 0x10000, scoped, tag = 'input window, operand 12, single buffered']
    #allocation16 [shape = 'u8[16384]{0}', space=vmem, size = 0x4000, scoped, tag = 'output window, operand 0']
    %29 = vsyncpa [#allocation5], 0
    %s30 = scalar_lea.sflag [#allocation5], 1
    %31 = vsyncpa %s30, 0
    %32 = vsyncpa [#allocation8], 0
    %33 = vsyncpa [#allocation11], 0
    %34 = vsyncpa [#allocation14], 0
    %35 = vsyncpa [#allocation6], 0
    %s36 = scalar_lea.sflag [#allocation6], 1
    %37 = vsyncpa %s36, 0
    loop: start=0, step=1, limit=4
    $region2: #{tpu_custom_call.1} parent=1 // loop_pre_header
      _
    $region3: #{tpu_custom_call.1} parent=1 // loop_header
      %s39 = sphi 0, %s43
      %p40 = scmp.ge.s32.totalorder %s39, 4
      %s49 = sphi 0, %s51
      %s52 = sphi 0, %s49
      %s53 = sphi 0, %s52
      %s69 = sphi 0, %s53
      %s73 = sphi 0, %s73
      %s75 = sphi 0, %s73
      %s76 = sphi 0, %s75
      %s90 = sphi 0, %s76
      %s94 = sphi 0, %s94
      %s96 = sphi 0, %s94
      %s97 = sphi 0, %s96
      %s111 = sphi 0, %s97
      %s115 = sphi 0, %s115
      %s117 = sphi 0, %s115
      %s118 = sphi 0, %s117
      %s132 = sphi 0, %s118
      %s136 = sphi 0, %s136
      %s138 = sphi 0, %s136
      %s139 = sphi 0, %s138
      %s153 = sphi 0, %s139
      %s157 = sphi 0, %s157
      %s159 = sphi 0, %s157
      %s160 = sphi 0, %s159
      %s174 = sphi 0, %s160
      %s178 = sphi 0, %s178
      %s180 = sphi 0, %s178
      %s181 = sphi 0, %s180
      %s195 = sphi 0, %s181
      %s199 = sphi 0, %s199
      %s201 = sphi 0, %s199
      %s202 = sphi 0, %s201
      %s216 = sphi 0, %s202
      %s220 = sphi 0, %s220
      %s222 = sphi 0, %s220
      %s223 = sphi 0, %s222
      %s237 = sphi 0, %s223
      %s241 = sphi 0, %s241
      %s243 = sphi 0, %s241
      %s244 = sphi 0, %s243
      %s258 = sphi 0, %s244
      %s262 = sphi 0, %s262
      %s264 = sphi 0, %s262
      %s265 = sphi 0, %s264
      %s279 = sphi 0, %s265
      %s283 = sphi 0, %s283
      %s285 = sphi 0, %s283
      %s286 = sphi 0, %s285
      %s300 = sphi 0, %s286
      %s304 = sphi 0, %s304
      %s306 = sphi 0, %s304
      %s307 = sphi 0, %s306
      %s321 = sphi 0, %s307
      %s325 = sphi 0, %s325
      %s327 = sphi 0, %s325
      %s328 = sphi 0, %s327
      %s342 = sphi 0, %s328
      %s346 = sphi 0, %s346
      %s348 = sphi 0, %s346
      %s349 = sphi 0, %s348
      %s363 = sphi 0, %s349
      %s369 = sphi 0, %s371
      %s372 = sphi 0, %s369
      %s373 = sphi 0, %s372
      %s389 = sphi 0, %s373
    $region4: #{tpu_custom_call.1} parent=1 // loop_header_branch
      %42 = sbr.rel (%p40) target = $region8
    $region5: #{tpu_custom_call.1} parent=1 // loop_body
      %s44 = ssub.s32 %s39, 1
      %s45 = ssub.s32 %s39, 2
      %s46 = sadd.s32 %s39, 1
      %s47 = ssub.s32 %s39, %s46
      %p48 = scmp.eq.s32.totalorder %s47, 0
      %s50 = sadd.s32 %s49, 1
      %s51 = scalar_select %p48, %s49, %s50
      %p54 = pneg %p48
      %p55 = scmp.eq.s32.totalorder %s39, 1
      %p56 = por %p54, %p55
      %p57 = scmp.ne.s32.totalorder %s49, %s52
      %p58 = scmp.eq.s32.totalorder %s39, 0
      %p59 = por %p57, %p58
      %p60 = scmp.ne.s32.totalorder %s49, %s52
      %p61 = scmp.eq.s32.totalorder %s44, 1
      %p62 = por %p60, %p61
      %p63 = scmp.ne.s32.totalorder %s52, %s53
      %p64 = scmp.eq.s32.totalorder %s44, 0
      %p65 = por %p63, %p64
      %p66 = scmp.ne.s32.totalorder %s52, %s53
      %p67 = scmp.eq.s32.totalorder %s45, 1
      %p68 = por %p66, %p67
      %p70 = scmp.ne.s32.totalorder %s53, %s69
      %p71 = scmp.eq.s32.totalorder %s45, 0
      %p72 = por %p70, %p71
      %s74 = sadd.s32 %s73, 1
      %p77 = scmp.eq.s32.totalorder %s39, 1
      %p78 = scmp.ne.s32.totalorder %s73, %s75
      %p79 = scmp.eq.s32.totalorder %s39, 0
      %p80 = por %p78, %p79
      %p81 = scmp.ne.s32.totalorder %s73, %s75
      %p82 = scmp.eq.s32.totalorder %s44, 1
      %p83 = por %p81, %p82
      %p84 = scmp.ne.s32.totalorder %s75, %s76
      %p85 = scmp.eq.s32.totalorder %s44, 0
      %p86 = por %p84, %p85
      %p87 = scmp.ne.s32.totalorder %s75, %s76
      %p88 = scmp.eq.s32.totalorder %s45, 1
      %p89 = por %p87, %p88
      %p91 = scmp.ne.s32.totalorder %s76, %s90
      %p92 = scmp.eq.s32.totalorder %s45, 0
      %p93 = por %p91, %p92
      %s95 = sadd.s32 %s94, 1
      %p98 = scmp.eq.s32.totalorder %s39, 1
      %p99 = scmp.ne.s32.totalorder %s94, %s96
      %p100 = scmp.eq.s32.totalorder %s39, 0
      %p101 = por %p99, %p100
      %p102 = scmp.ne.s32.totalorder %s94, %s96
      %p103 = scmp.eq.s32.totalorder %s44, 1
      %p104 = por %p102, %p103
      %p105 = scmp.ne.s32.totalorder %s96, %s97
      %p106 = scmp.eq.s32.totalorder %s44, 0
      %p107 = por %p105, %p106
      %p108 = scmp.ne.s32.totalorder %s96, %s97
      %p109 = scmp.eq.s32.totalorder %s45, 1
      %p110 = por %p108, %p109
      %p112 = scmp.ne.s32.totalorder %s97, %s111
      %p113 = scmp.eq.s32.totalorder %s45, 0
      %p114 = por %p112, %p113
      %s116 = sadd.s32 %s115, 1
      %p119 = scmp.eq.s32.totalorder %s39, 1
      %p120 = scmp.ne.s32.totalorder %s115, %s117
      %p121 = scmp.eq.s32.totalorder %s39, 0
      %p122 = por %p120, %p121
      %p123 = scmp.ne.s32.totalorder %s115, %s117
      %p124 = scmp.eq.s32.totalorder %s44, 1
      %p125 = por %p123, %p124
      %p126 = scmp.ne.s32.totalorder %s117, %s118
      %p127 = scmp.eq.s32.totalorder %s44, 0
      %p128 = por %p126, %p127
      %p129 = scmp.ne.s32.totalorder %s117, %s118
      %p130 = scmp.eq.s32.totalorder %s45, 1
      %p131 = por %p129, %p130
      %p133 = scmp.ne.s32.totalorder %s118, %s132
      %p134 = scmp.eq.s32.totalorder %s45, 0
      %p135 = por %p133, %p134
      %s137 = sadd.s32 %s136, 1
      %p140 = scmp.eq.s32.totalorder %s39, 1
      %p141 = scmp.ne.s32.totalorder %s136, %s138
      %p142 = scmp.eq.s32.totalorder %s39, 0
      %p143 = por %p141, %p142
      %p144 = scmp.ne.s32.totalorder %s136, %s138
      %p145 = scmp.eq.s32.totalorder %s44, 1
      %p146 = por %p144, %p145
      %p147 = scmp.ne.s32.totalorder %s138, %s139
      %p148 = scmp.eq.s32.totalorder %s44, 0
      %p149 = por %p147, %p148
      %p150 = scmp.ne.s32.totalorder %s138, %s139
      %p151 = scmp.eq.s32.totalorder %s45, 1
      %p152 = por %p150, %p151
      %p154 = scmp.ne.s32.totalorder %s139, %s153
      %p155 = scmp.eq.s32.totalorder %s45, 0
      %p156 = por %p154, %p155
      %s158 = sadd.s32 %s157, 1
      %p161 = scmp.eq.s32.totalorder %s39, 1
      %p162 = scmp.ne.s32.totalorder %s157, %s159
      %p163 = scmp.eq.s32.totalorder %s39, 0
      %p164 = por %p162, %p163
      %p165 = scmp.ne.s32.totalorder %s157, %s159
      %p166 = scmp.eq.s32.totalorder %s44, 1
      %p167 = por %p165, %p166
      %p168 = scmp.ne.s32.totalorder %s159, %s160
      %p169 = scmp.eq.s32.totalorder %s44, 0
      %p170 = por %p168, %p169
      %p171 = scmp.ne.s32.totalorder %s159, %s160
      %p172 = scmp.eq.s32.totalorder %s45, 1
      %p173 = por %p171, %p172
      %p175 = scmp.ne.s32.totalorder %s160, %s174
      %p176 = scmp.eq.s32.totalorder %s45, 0
      %p177 = por %p175, %p176
      %s179 = sadd.s32 %s178, 1
      %p182 = scmp.eq.s32.totalorder %s39, 1
      %p183 = scmp.ne.s32.totalorder %s178, %s180
      %p184 = scmp.eq.s32.totalorder %s39, 0
      %p185 = por %p183, %p184
      %p186 = scmp.ne.s32.totalorder %s178, %s180
      %p187 = scmp.eq.s32.totalorder %s44, 1
      %p188 = por %p186, %p187
      %p189 = scmp.ne.s32.totalorder %s180, %s181
      %p190 = scmp.eq.s32.totalorder %s44, 0
      %p191 = por %p189, %p190
      %p192 = scmp.ne.s32.totalorder %s180, %s181
      %p193 = scmp.eq.s32.totalorder %s45, 1
      %p194 = por %p192, %p193
      %p196 = scmp.ne.s32.totalorder %s181, %s195
      %p197 = scmp.eq.s32.totalorder %s45, 0
      %p198 = por %p196, %p197
      %s200 = sadd.s32 %s199, 1
      %p203 = scmp.eq.s32.totalorder %s39, 1
      %p204 = scmp.ne.s32.totalorder %s199, %s201
      %p205 = scmp.eq.s32.totalorder %s39, 0
      %p206 = por %p204, %p205
      %p207 = scmp.ne.s32.totalorder %s199, %s201
      %p208 = scmp.eq.s32.totalorder %s44, 1
      %p209 = por %p207, %p208
      %p210 = scmp.ne.s32.totalorder %s201, %s202
      %p211 = scmp.eq.s32.totalorder %s44, 0
      %p212 = por %p210, %p211
      %p213 = scmp.ne.s32.totalorder %s201, %s202
      %p214 = scmp.eq.s32.totalorder %s45, 1
      %p215 = por %p213, %p214
      %p217 = scmp.ne.s32.totalorder %s202, %s216
      %p218 = scmp.eq.s32.totalorder %s45, 0
      %p219 = por %p217, %p218
      %s221 = sadd.s32 %s220, 1
      %p224 = scmp.eq.s32.totalorder %s39, 1
      %p225 = scmp.ne.s32.totalorder %s220, %s222
      %p226 = scmp.eq.s32.totalorder %s39, 0
      %p227 = por %p225, %p226
      %p228 = scmp.ne.s32.totalorder %s220, %s222
      %p229 = scmp.eq.s32.totalorder %s44, 1
      %p230 = por %p228, %p229
      %p231 = scmp.ne.s32.totalorder %s222, %s223
      %p232 = scmp.eq.s32.totalorder %s44, 0
      %p233 = por %p231, %p232
      %p234 = scmp.ne.s32.totalorder %s222, %s223
      %p235 = scmp.eq.s32.totalorder %s45, 1
      %p236 = por %p234, %p235
      %p238 = scmp.ne.s32.totalorder %s223, %s237
      %p239 = scmp.eq.s32.totalorder %s45, 0
      %p240 = por %p238, %p239
      %s242 = sadd.s32 %s241, 1
      %p245 = scmp.eq.s32.totalorder %s39, 1
      %p246 = scmp.ne.s32.totalorder %s241, %s243
      %p247 = scmp.eq.s32.totalorder %s39, 0
      %p248 = por %p246, %p247
      %p249 = scmp.ne.s32.totalorder %s241, %s243
      %p250 = scmp.eq.s32.totalorder %s44, 1
      %p251 = por %p249, %p250
      %p252 = scmp.ne.s32.totalorder %s243, %s244
      %p253 = scmp.eq.s32.totalorder %s44, 0
      %p254 = por %p252, %p253
      %p255 = scmp.ne.s32.totalorder %s243, %s244
      %p256 = scmp.eq.s32.totalorder %s45, 1
      %p257 = por %p255, %p256
      %p259 = scmp.ne.s32.totalorder %s244, %s258
      %p260 = scmp.eq.s32.totalorder %s45, 0
      %p261 = por %p259, %p260
      %s263 = sadd.s32 %s262, 1
      %p266 = scmp.eq.s32.totalorder %s39, 1
      %p267 = scmp.ne.s32.totalorder %s262, %s264
      %p268 = scmp.eq.s32.totalorder %s39, 0
      %p269 = por %p267, %p268
      %p270 = scmp.ne.s32.totalorder %s262, %s264
      %p271 = scmp.eq.s32.totalorder %s44, 1
      %p272 = por %p270, %p271
      %p273 = scmp.ne.s32.totalorder %s264, %s265
      %p274 = scmp.eq.s32.totalorder %s44, 0
      %p275 = por %p273, %p274
      %p276 = scmp.ne.s32.totalorder %s264, %s265
      %p277 = scmp.eq.s32.totalorder %s45, 1
      %p278 = por %p276, %p277
      %p280 = scmp.ne.s32.totalorder %s265, %s279
      %p281 = scmp.eq.s32.totalorder %s45, 0
      %p282 = por %p280, %p281
      %s284 = sadd.s32 %s283, 1
      %p287 = scmp.eq.s32.totalorder %s39, 1
      %p288 = scmp.ne.s32.totalorder %s283, %s285
      %p289 = scmp.eq.s32.totalorder %s39, 0
      %p290 = por %p288, %p289
      %p291 = scmp.ne.s32.totalorder %s283, %s285
      %p292 = scmp.eq.s32.totalorder %s44, 1
      %p293 = por %p291, %p292
      %p294 = scmp.ne.s32.totalorder %s285, %s286
      %p295 = scmp.eq.s32.totalorder %s44, 0
      %p296 = por %p294, %p295
      %p297 = scmp.ne.s32.totalorder %s285, %s286
      %p298 = scmp.eq.s32.totalorder %s45, 1
      %p299 = por %p297, %p298
      %p301 = scmp.ne.s32.totalorder %s286, %s300
      %p302 = scmp.eq.s32.totalorder %s45, 0
      %p303 = por %p301, %p302
      %s305 = sadd.s32 %s304, 1
      %p308 = scmp.eq.s32.totalorder %s39, 1
      %p309 = scmp.ne.s32.totalorder %s304, %s306
      %p310 = scmp.eq.s32.totalorder %s39, 0
      %p311 = por %p309, %p310
      %p312 = scmp.ne.s32.totalorder %s304, %s306
      %p313 = scmp.eq.s32.totalorder %s44, 1
      %p314 = por %p312, %p313
      %p315 = scmp.ne.s32.totalorder %s306, %s307
      %p316 = scmp.eq.s32.totalorder %s44, 0
      %p317 = por %p315, %p316
      %p318 = scmp.ne.s32.totalorder %s306, %s307
      %p319 = scmp.eq.s32.totalorder %s45, 1
      %p320 = por %p318, %p319
      %p322 = scmp.ne.s32.totalorder %s307, %s321
      %p323 = scmp.eq.s32.totalorder %s45, 0
      %p324 = por %p322, %p323
      %s326 = sadd.s32 %s325, 1
      %p329 = scmp.eq.s32.totalorder %s39, 1
      %p330 = scmp.ne.s32.totalorder %s325, %s327
      %p331 = scmp.eq.s32.totalorder %s39, 0
      %p332 = por %p330, %p331
      %p333 = scmp.ne.s32.totalorder %s325, %s327
      %p334 = scmp.eq.s32.totalorder %s44, 1
      %p335 = por %p333, %p334
      %p336 = scmp.ne.s32.totalorder %s327, %s328
      %p337 = scmp.eq.s32.totalorder %s44, 0
      %p338 = por %p336, %p337
      %p339 = scmp.ne.s32.totalorder %s327, %s328
      %p340 = scmp.eq.s32.totalorder %s45, 1
      %p341 = por %p339, %p340
      %p343 = scmp.ne.s32.totalorder %s328, %s342
      %p344 = scmp.eq.s32.totalorder %s45, 0
      %p345 = por %p343, %p344
      %s347 = sadd.s32 %s346, 1
      %p350 = scmp.eq.s32.totalorder %s39, 1
      %p351 = scmp.ne.s32.totalorder %s346, %s348
      %p352 = scmp.eq.s32.totalorder %s39, 0
      %p353 = por %p351, %p352
      %p354 = scmp.ne.s32.totalorder %s346, %s348
      %p355 = scmp.eq.s32.totalorder %s44, 1
      %p356 = por %p354, %p355
      %p357 = scmp.ne.s32.totalorder %s348, %s349
      %p358 = scmp.eq.s32.totalorder %s44, 0
      %p359 = por %p357, %p358
      %p360 = scmp.ne.s32.totalorder %s348, %s349
      %p361 = scmp.eq.s32.totalorder %s45, 1
      %p362 = por %p360, %p361
      %p364 = scmp.ne.s32.totalorder %s349, %s363
      %p365 = scmp.eq.s32.totalorder %s45, 0
      %p366 = por %p364, %p365
      %s367 = ssub.s32 %s39, %s46
      %p368 = scmp.eq.s32.totalorder %s367, 0
      %s370 = sadd.s32 %s369, 1
      %s371 = scalar_select %p368, %s369, %s370
      %p374 = pneg %p368
      %p375 = scmp.eq.s32.totalorder %s39, 1
      %p376 = por %p374, %p375
      %p377 = scmp.ne.s32.totalorder %s369, %s372
      %p378 = scmp.eq.s32.totalorder %s39, 0
      %p379 = por %p377, %p378
      %p380 = scmp.ne.s32.totalorder %s369, %s372
      %p381 = scmp.eq.s32.totalorder %s44, 1
      %p382 = por %p380, %p381
      %p383 = scmp.ne.s32.totalorder %s372, %s373
      %p384 = scmp.eq.s32.totalorder %s44, 0
      %p385 = por %p383, %p384
      %p386 = scmp.ne.s32.totalorder %s372, %s373
      %p387 = scmp.eq.s32.totalorder %s45, 1
      %p388 = por %p386, %p387
      %p390 = scmp.ne.s32.totalorder %s373, %s389
      %p391 = scmp.eq.s32.totalorder %s45, 0
      %p392 = por %p390, %p391
      %p393 = scmp.le.s32.totalorder 1, %s39
      %p394 = scmp.lt.s32.totalorder %s39, 3
      %p395 = pnand %p393, %p394
      %p396 = pneg %p395
      // Predicated region
      $region9: #{tpu_custom_call.1} parent=5 // pred_check
        _
      $region10: #{tpu_custom_call.1} parent=5 // pred_check_branch
        %398 = sbr.rel (%p395) target = $region12
      $region11: #{tpu_custom_call.1} parent=5 // pred_region
        %s399 = ssub.s32 %s39, 1
        // Predicated region
        $region13: #{tpu_custom_call.1} parent=11 // pred_check
          %p400 = pneg %p86
        $region14: #{tpu_custom_call.1} parent=11 // pred_check_branch
          %402 = sbr.rel (%p400) target = $region16
        $region15: #{tpu_custom_call.1} parent=11 // pred_region
          %404 = vsyncadd [#allocation8], 0
          %s405 = sshll.u32 %s2, 4
          %s406 = int_to_ptr.hbm [resolvable:$true] %s405
          %s407 = sshll.u32 [#allocation7], 4
          %s408 = int_to_ptr.vmem [resolvable:$true] %s407
          %413 = dma.hbm_to_vmem [thread:$0]  %s406, 6144, %s408, [#allocation8], 384, 384, 24
        $region16: #{tpu_custom_call.1} parent=11 // pred_fallthru
          _
        // Predicated region
        $region17: #{tpu_custom_call.1} parent=11 // pred_check
          %p414 = pneg %p107
        $region18: #{tpu_custom_call.1} parent=11 // pred_check_branch
          %416 = sbr.rel (%p414) target = $region20
        $region19: #{tpu_custom_call.1} parent=11 // pred_region
          %418 = vsyncadd [#allocation8], 0
          %s420 = sshll.u32 %s3, 4
          %s421 = int_to_ptr.hbm [resolvable:$true] %s420
          %s422 = sshll.u32 [#allocation9], 4
          %s423 = int_to_ptr.vmem [resolvable:$true] %s422
          %425 = dma.hbm_to_vmem [thread:$0]  %s421, 48, %s423, [#allocation8]
        $region20: #{tpu_custom_call.1} parent=11 // pred_fallthru
          _
        // Predicated region
        $region21: #{tpu_custom_call.1} parent=11 // pred_check
          %p426 = pneg %p128
        $region22: #{tpu_custom_call.1} parent=11 // pred_check_branch
          %428 = sbr.rel (%p426) target = $region24
        $region23: #{tpu_custom_call.1} parent=11 // pred_region
          %430 = vsyncadd [#allocation11], 0
          %s431 = sshll.u32 %s4, 4
          %s432 = int_to_ptr.hbm [resolvable:$true] %s431
          %s433 = sshll.u32 [#allocation10], 4
          %s434 = int_to_ptr.vmem [resolvable:$true] %s433
          %439 = dma.hbm_to_vmem [thread:$0]  %s432, 2048, %s434, [#allocation11], 128, 128, 8
        $region24: #{tpu_custom_call.1} parent=11 // pred_fallthru
          _
        // Predicated region
        $region25: #{tpu_custom_call.1} parent=11 // pred_check
          %p440 = pneg %p149
        $region26: #{tpu_custom_call.1} parent=11 // pred_check_branch
          %442 = sbr.rel (%p440) target = $region28
        $region27: #{tpu_custom_call.1} parent=11 // pred_region
          _
        $region28: #{tpu_custom_call.1} parent=11 // pred_fallthru
          _
        // Predicated region
        $region29: #{tpu_custom_call.1} parent=11 // pred_check
          %p443 = pneg %p170
        $region30: #{tpu_custom_call.1} parent=11 // pred_check_branch
          %445 = sbr.rel (%p443) target = $region32
        $region31: #{tpu_custom_call.1} parent=11 // pred_region
          %447 = vsyncadd [#allocation11], 0
          %s448 = sshll.u32 %s6, 4
          %s449 = int_to_ptr.hbm [resolvable:$true] %s448
          %s450 = sshll.u32 [#allocation12], 4
          %s451 = int_to_ptr.vmem [resolvable:$true] %s450
          %456 = dma.hbm_to_vmem [thread:$0]  %s449, 2048, %s451, [#allocation11], 128, 128, 8
        $region32: #{tpu_custom_call.1} parent=11 // pred_fallthru
          _
        // Predicated region
        $region33: #{tpu_custom_call.1} parent=11 // pred_check
          %p457 = pneg %p191
        $region34: #{tpu_custom_call.1} parent=11 // pred_check_branch
          %459 = sbr.rel (%p457) target = $region36
        $region35: #{tpu_custom_call.1} parent=11 // pred_region
          _
        $region36: #{tpu_custom_call.1} parent=11 // pred_fallthru
          _
        // Predicated region
        $region37: #{tpu_custom_call.1} parent=11 // pred_check
          %p460 = pneg %p212
        $region38: #{tpu_custom_call.1} parent=11 // pred_check_branch
          %462 = sbr.rel (%p460) target = $region40
        $region39: #{tpu_custom_call.1} parent=11 // pred_region
          _
        $region40: #{tpu_custom_call.1} parent=11 // pred_fallthru
          _
        // Predicated region
        $region41: #{tpu_custom_call.1} parent=11 // pred_check
          %p463 = pneg %p233
        $region42: #{tpu_custom_call.1} parent=11 // pred_check_branch
          %465 = sbr.rel (%p463) target = $region44
        $region43: #{tpu_custom_call.1} parent=11 // pred_region
          _
        $region44: #{tpu_custom_call.1} parent=11 // pred_fallthru
          _
        // Predicated region
        $region45: #{tpu_custom_call.1} parent=11 // pred_check
          %p466 = pneg %p254
        $region46: #{tpu_custom_call.1} parent=11 // pred_check_branch
          %468 = sbr.rel (%p466) target = $region48
        $region47: #{tpu_custom_call.1} parent=11 // pred_region
          %470 = vsyncadd [#allocation14], 0
          %s471 = sshll.u32 %s10, 4
          %s472 = int_to_ptr.hbm [resolvable:$true] %s471
          %s473 = sshll.u32 [#allocation13], 4
          %s474 = int_to_ptr.vmem [resolvable:$true] %s473
          %479 = dma.hbm_to_vmem [thread:$0]  %s472, 2048, %s474, [#allocation14], 128, 128, 8
        $region48: #{tpu_custom_call.1} parent=11 // pred_fallthru
          _
        // Predicated region
        $region49: #{tpu_custom_call.1} parent=11 // pred_check
          %p480 = pneg %p275
        $region50: #{tpu_custom_call.1} parent=11 // pred_check_branch
          %482 = sbr.rel (%p480) target = $region52
        $region51: #{tpu_custom_call.1} parent=11 // pred_region
          _
        $region52: #{tpu_custom_call.1} parent=11 // pred_fallthru
          _
        // Predicated region
        $region53: #{tpu_custom_call.1} parent=11 // pred_check
          %p483 = pneg %p296
        $region54: #{tpu_custom_call.1} parent=11 // pred_check_branch
          %485 = sbr.rel (%p483) target = $region56
        $region55: #{tpu_custom_call.1} parent=11 // pred_region
          %487 = vsyncadd [#allocation14], 0
          %s488 = sshll.u32 %s12, 4
          %s489 = int_to_ptr.hbm [resolvable:$true] %s488
          %s490 = sshll.u32 [#allocation15], 4
          %s491 = int_to_ptr.vmem [resolvable:$true] %s490
          %496 = dma.hbm_to_vmem [thread:$0]  %s489, 2048, %s491, [#allocation14], 128, 128, 8
        $region56: #{tpu_custom_call.1} parent=11 // pred_fallthru
          _
        // Predicated region
        $region57: #{tpu_custom_call.1} parent=11 // pred_check
          %p497 = pneg %p317
        $region58: #{tpu_custom_call.1} parent=11 // pred_check_branch
          %499 = sbr.rel (%p497) target = $region60
        $region59: #{tpu_custom_call.1} parent=11 // pred_region
          _
        $region60: #{tpu_custom_call.1} parent=11 // pred_fallthru
          _
        // Predicated region
        $region61: #{tpu_custom_call.1} parent=11 // pred_check
          %p500 = pneg %p338
        $region62: #{tpu_custom_call.1} parent=11 // pred_check_branch
          %502 = sbr.rel (%p500) target = $region64
        $region63: #{tpu_custom_call.1} parent=11 // pred_region
          _
        $region64: #{tpu_custom_call.1} parent=11 // pred_fallthru
          _
        // Predicated region
        $region65: #{tpu_custom_call.1} parent=11 // pred_check
          %p503 = pneg %p359
        $region66: #{tpu_custom_call.1} parent=11 // pred_check_branch
          %505 = sbr.rel (%p503) target = $region68
        $region67: #{tpu_custom_call.1} parent=11 // pred_region
          _
        $region68: #{tpu_custom_call.1} parent=11 // pred_fallthru
          _
      $region12: #{tpu_custom_call.1} parent=5 // pred_fallthru
        _
      %p506 = scmp.lt.s32.totalorder %s39, 2
      // Predicated region
      $region69: #{tpu_custom_call.1} parent=5 // pred_check
        %p507 = pneg %p506
      $region70: #{tpu_custom_call.1} parent=5 // pred_check_branch
        %509 = sbr.rel (%p507) target = $region72
      $region71: #{tpu_custom_call.1} parent=5 // pred_region
        // Predicated region
        $region73: #{tpu_custom_call.1} parent=71 // pred_check
          %p510 = pneg %p59
        $region74: #{tpu_custom_call.1} parent=71 // pred_check_branch
          %512 = sbr.rel (%p510) target = $region76
        $region75: #{tpu_custom_call.1} parent=71 // pred_region
          %s513 = sand.u32 %s49, 1
          %s514 = scalar_lea.sflag [#allocation5], %s513
          %s515 = sand.u32 %s49, 1
          %s516 = smul.addr %s515, 16
          %s517 = scalar_lea.vmem [#allocation4], %s516
          %s518 = smul.u32 2, %s39
          %520 = vsyncadd %s514, 0
          %s521 = smul.addr %s518, 8
          %s522 = scalar_lea.hbm %s1, %s521
          %s523 = sshll.u32 %s522, 4
          %s524 = int_to_ptr.hbm [resolvable:$true] %s523
          %s525 = sshll.u32 %s517, 4
          %s526 = int_to_ptr.vmem [resolvable:$true] %s525
          %531 = dma.hbm_to_vmem [thread:$0]  %s524, 256, %s526, %s514, 128, 128, 8
        $region76: #{tpu_custom_call.1} parent=71 // pred_fallthru
          _
      $region72: #{tpu_custom_call.1} parent=5 // pred_fallthru
        _
      %p532 = scmp.le.s32.totalorder 1, %s39
      %p533 = scmp.lt.s32.totalorder %s39, 3
      %p534 = pnand %p532, %p533
      %p535 = pneg %p534
      // Predicated region
      $region77: #{tpu_custom_call.1} parent=5 // pred_check
        _
      $region78: #{tpu_custom_call.1} parent=5 // pred_check_branch
        %537 = sbr.rel (%p534) target = $region80
      $region79: #{tpu_custom_call.1} parent=5 // pred_region
        %s538 = ssub.s32 %s39, 1
        %s539 = sand.u32 %s52, 1
        %s540 = scalar_lea.sflag [#allocation5], %s539
        %s541 = sand.u32 %s52, 1
        %s542 = smul.addr %s541, 16
        %s543 = scalar_lea.vmem [#allocation4], %s542
        // Predicated region
        $region81: #{tpu_custom_call.1} parent=79 // pred_check
          %p544 = pneg %p65
        $region82: #{tpu_custom_call.1} parent=79 // pred_check_branch
          %546 = sbr.rel (%p544) target = $region84
        $region83: #{tpu_custom_call.1} parent=79 // pred_region
          %548 = dma.done %s540, 256
        $region84: #{tpu_custom_call.1} parent=79 // pred_fallthru
          _
        // Predicated region
        $region85: #{tpu_custom_call.1} parent=79 // pred_check
          %p549 = pneg %p86
        $region86: #{tpu_custom_call.1} parent=79 // pred_check_branch
          %551 = sbr.rel (%p549) target = $region88
        $region87: #{tpu_custom_call.1} parent=79 // pred_region
          %553 = dma.done [#allocation8], 6144
        $region88: #{tpu_custom_call.1} parent=79 // pred_fallthru
          _
        // Predicated region
        $region89: #{tpu_custom_call.1} parent=79 // pred_check
          %p554 = pneg %p107
        $region90: #{tpu_custom_call.1} parent=79 // pred_check_branch
          %556 = sbr.rel (%p554) target = $region92
        $region91: #{tpu_custom_call.1} parent=79 // pred_region
          %558 = dma.done [#allocation8], 48
        $region92: #{tpu_custom_call.1} parent=79 // pred_fallthru
          _
        // Predicated region
        $region93: #{tpu_custom_call.1} parent=79 // pred_check
          %p559 = pneg %p128
        $region94: #{tpu_custom_call.1} parent=79 // pred_check_branch
          %561 = sbr.rel (%p559) target = $region96
        $region95: #{tpu_custom_call.1} parent=79 // pred_region
          %563 = dma.done [#allocation11], 2048
        $region96: #{tpu_custom_call.1} parent=79 // pred_fallthru
          _
        // Predicated region
        $region97: #{tpu_custom_call.1} parent=79 // pred_check
          %p564 = pneg %p170
        $region98: #{tpu_custom_call.1} parent=79 // pred_check_branch
          %566 = sbr.rel (%p564) target = $region100
        $region99: #{tpu_custom_call.1} parent=79 // pred_region
          %568 = dma.done [#allocation11], 2048
        $region100: #{tpu_custom_call.1} parent=79 // pred_fallthru
          _
        // Predicated region
        $region101: #{tpu_custom_call.1} parent=79 // pred_check
          %p569 = pneg %p254
        $region102: #{tpu_custom_call.1} parent=79 // pred_check_branch
          %571 = sbr.rel (%p569) target = $region104
        $region103: #{tpu_custom_call.1} parent=79 // pred_region
          %573 = dma.done [#allocation14], 2048
        $region104: #{tpu_custom_call.1} parent=79 // pred_fallthru
          _
        // Predicated region
        $region105: #{tpu_custom_call.1} parent=79 // pred_check
          %p574 = pneg %p296
        $region106: #{tpu_custom_call.1} parent=79 // pred_check_branch
          %576 = sbr.rel (%p574) target = $region108
        $region107: #{tpu_custom_call.1} parent=79 // pred_region
          %578 = dma.done [#allocation14], 2048
        $region108: #{tpu_custom_call.1} parent=79 // pred_fallthru
          _
        %s579 = sand.u32 %s52, 1
        %s580 = scalar_lea.sflag [#allocation5], %s579
        %s581 = sand.u32 %s52, 1
        %s582 = smul.addr %s581, 16
        %s583 = scalar_lea.vmem [#allocation4], %s582
        %p584 = pneg %p65
        %p585 = pneg %p62
        %p586 = pneg %p86
        %p587 = pneg %p83
        %p588 = pneg %p107
        %p589 = pneg %p104
        %p590 = pneg %p128
        %p591 = pneg %p125
        %p592 = pneg %p149
        %p593 = pneg %p146
        %p594 = pneg %p170
        %p595 = pneg %p167
        %p596 = pneg %p191
        %p597 = pneg %p188
        %p598 = pneg %p212
        %p599 = pneg %p209
        %p600 = pneg %p233
        %p601 = pneg %p230
        %p602 = pneg %p254
        %p603 = pneg %p251
        %p604 = pneg %p275
        %p605 = pneg %p272
        %p606 = pneg %p296
        %p607 = pneg %p293
        %p608 = pneg %p317
        %p609 = pneg %p314
        %p610 = pneg %p338
        %p611 = pneg %p335
        %p612 = pneg %p359
        %p613 = pneg %p356
        %p614 = pneg %p385
        %p615 = pneg %p382
        %s616 = sand.u32 %s372, 1
        %s617 = scalar_lea.sflag [#allocation6], %s616
        %s618 = sand.u32 %s372, 1
        %s619 = smul.addr %s618, 16
        %s620 = scalar_lea.vmem [#allocation16], %s619
        %s621 = smul.u32 2, %s44
        %s622 = smul.u32 2, %s44
        %s623 = sld [smem:[#allocation3 + %s44]]
        %v624 = vld [vmem:[%s543] sm:$0xff]
        %v625 = vld [vmem:[%s543 + $0x8] sm:$0xff]
        %v626 = vld [vmem:[#allocation7] sm:$0xff]
        %v627 = vld [vmem:[#allocation7 + $0x8] sm:$0xff]
        %v628 = vld [vmem:[#allocation7 + $0x10] sm:$0xff]
        %v629 = vld [vmem:[#allocation7 + $0x18] sm:$0xff]
        %v630 = vld [vmem:[#allocation7 + $0x20] sm:$0xff]
        %v631 = vld [vmem:[#allocation7 + $0x28] sm:$0xff]
        %v632 = vld [vmem:[#allocation7 + $0x30] sm:$0xff]
        %v633 = vld [vmem:[#allocation7 + $0x38] sm:$0xff]
        %v634 = vld [vmem:[#allocation7 + $0x40] sm:$0xff]
        %v635 = vld [vmem:[#allocation7 + $0x48] sm:$0xff]
        %v636 = vld [vmem:[#allocation7 + $0x50] sm:$0xff]
        %v637 = vld [vmem:[#allocation7 + $0x58] sm:$0xff]
        %v638 = vld [vmem:[#allocation7 + $0x60] sm:$0xff]
        %v639 = vld [vmem:[#allocation7 + $0x68] sm:$0xff]
        %v640 = vld [vmem:[#allocation7 + $0x70] sm:$0xff]
        %v641 = vld [vmem:[#allocation7 + $0x78] sm:$0xff]
        %v642 = vld [vmem:[#allocation7 + $0x80] sm:$0xff]
        %v643 = vld [vmem:[#allocation7 + $0x88] sm:$0xff]
        %v644 = vld [vmem:[#allocation7 + $0x90] sm:$0xff]
        %v645 = vld [vmem:[#allocation7 + $0x98] sm:$0xff]
        %v646 = vld [vmem:[#allocation7 + $0xa0] sm:$0xff]
        %v647 = vld [vmem:[#allocation7 + $0xa8] sm:$0xff]
        %v648 = vld [vmem:[#allocation7 + $0xb0] sm:$0xff]
        %v649 = vld [vmem:[#allocation7 + $0xb8] sm:$0xff]
        %v650 = vld [vmem:[#allocation7 + $0xc0] sm:$0xff]
        %v651 = vld [vmem:[#allocation7 + $0xc8] sm:$0xff]
        %v652 = vld [vmem:[#allocation7 + $0xd0] sm:$0xff]
        %v653 = vld [vmem:[#allocation7 + $0xd8] sm:$0xff]
        %v654 = vld [vmem:[#allocation7 + $0xe0] sm:$0xff]
        %v655 = vld [vmem:[#allocation7 + $0xe8] sm:$0xff]
        %v656 = vld [vmem:[#allocation7 + $0xf0] sm:$0xff]
        %v657 = vld [vmem:[#allocation7 + $0xf8] sm:$0xff]
        %v658 = vld [vmem:[#allocation7 + $0x100] sm:$0xff]
        %v659 = vld [vmem:[#allocation7 + $0x108] sm:$0xff]
        %v660 = vld [vmem:[#allocation7 + $0x110] sm:$0xff]
        %v661 = vld [vmem:[#allocation7 + $0x118] sm:$0xff]
        %v662 = vld [vmem:[#allocation7 + $0x120] sm:$0xff]
        %v663 = vld [vmem:[#allocation7 + $0x128] sm:$0xff]
        %v664 = vld [vmem:[#allocation7 + $0x130] sm:$0xff]
        %v665 = vld [vmem:[#allocation7 + $0x138] sm:$0xff]
        %v666 = vld [vmem:[#allocation7 + $0x140] sm:$0xff]
        %v667 = vld [vmem:[#allocation7 + $0x148] sm:$0xff]
        %v668 = vld [vmem:[#allocation7 + $0x150] sm:$0xff]
        %v669 = vld [vmem:[#allocation7 + $0x158] sm:$0xff]
        %v670 = vld [vmem:[#allocation7 + $0x160] sm:$0xff]
        %v671 = vld [vmem:[#allocation7 + $0x168] sm:$0xff]
        %v672 = vld [vmem:[#allocation7 + $0x170] sm:$0xff]
        %v673 = vld [vmem:[#allocation7 + $0x178] sm:$0xff]
        %v674 = vld [vmem:[#allocation9] sm:$0x7]
        %v676 = vperm.slane %v674, 0
        %v677 = vperm.slane %v674, 1
        %v678 = vperm.slane %v674, 2
        %682 = vmatpush.msra.mxu0 %v671
        %683 = vmatpush.msra.mxu0 %v668
        %684 = vmatpush.msra.mxu0 %v665
        %685 = vmatpush.msra.mxu0 %v662
        %686 = vmatpush.msra.mxu0 %v659
        %687 = vmatpush.msra.mxu0 %v656
        %688 = vmatpush.msra.mxu0 %v653
        %689 = vmatpush.msra.mxu0 %v650
        %690 = vmatpush.msra.mxu0 %v647
        %691 = vmatpush.msra.mxu0 %v644
        %692 = vmatpush.msra.mxu0 %v641
        %693 = vmatpush.msra.mxu0 %v638
        %694 = vmatpush.msra.mxu0 %v635
        %695 = vmatpush.msra.mxu0 %v632
        %696 = vmatpush.msra.mxu0 %v629
        %697 = vmatpush.msra.mxu0 %v626
        %698 = vmatmul.f32.gmra.mxu0 %v624
        %v699 = vpop.f32.mrf.mxu0
        %v700 = vadd.f32 %v676, %v699
        %701 = vmatmul.f32.gmra.mxu0 %v625
        %v702 = vpop.f32.mrf.mxu0
        %v703 = vadd.f32 %v676, %v702
        %704 = vdwg.mxu0
        %705 = vmatpush.msra.mxu0 %v672
        %706 = vmatpush.msra.mxu0 %v669
        %707 = vmatpush.msra.mxu0 %v666
        %708 = vmatpush.msra.mxu0 %v663
        %709 = vmatpush.msra.mxu0 %v660
        %710 = vmatpush.msra.mxu0 %v657
        %711 = vmatpush.msra.mxu0 %v654
        %712 = vmatpush.msra.mxu0 %v651
        %713 = vmatpush.msra.mxu0 %v648
        %714 = vmatpush.msra.mxu0 %v645
        %715 = vmatpush.msra.mxu0 %v642
        %716 = vmatpush.msra.mxu0 %v639
        %717 = vmatpush.msra.mxu0 %v636
        %718 = vmatpush.msra.mxu0 %v633
        %719 = vmatpush.msra.mxu0 %v630
        %720 = vmatpush.msra.mxu0 %v627
        %721 = vmatmul.f32.gmra.mxu0 %v624
        %v722 = vpop.f32.mrf.mxu0
        %v723 = vadd.f32 %v677, %v722
        %724 = vmatmul.f32.gmra.mxu0 %v625
        %v725 = vpop.f32.mrf.mxu0
        %v726 = vadd.f32 %v677, %v725
        %727 = vdwg.mxu0
        %728 = vmatpush.msra.mxu0 %v673
        %729 = vmatpush.msra.mxu0 %v670
        %730 = vmatpush.msra.mxu0 %v667
        %731 = vmatpush.msra.mxu0 %v664
        %732 = vmatpush.msra.mxu0 %v661
        %733 = vmatpush.msra.mxu0 %v658
        %734 = vmatpush.msra.mxu0 %v655
        %735 = vmatpush.msra.mxu0 %v652
        %736 = vmatpush.msra.mxu0 %v649
        %737 = vmatpush.msra.mxu0 %v646
        %738 = vmatpush.msra.mxu0 %v643
        %739 = vmatpush.msra.mxu0 %v640
        %740 = vmatpush.msra.mxu0 %v637
        %741 = vmatpush.msra.mxu0 %v634
        %742 = vmatpush.msra.mxu0 %v631
        %743 = vmatpush.msra.mxu0 %v628
        %744 = vmatmul.f32.gmra.mxu0 %v624
        %v745 = vpop.f32.mrf.mxu0
        %v746 = vadd.f32 %v678, %v745
        %747 = vmatmul.f32.gmra.mxu0 %v625
        %v748 = vpop.f32.mrf.mxu0
        %v749 = vadd.f32 %v678, %v748
        %750 = vdwg.mxu0
        %v751 = vmul.f32 %v700, 0.17677669
        %v752 = vmul.f32 %v703, 0.17677669
        %755 = vrot.lane.b32.xlu0 %v751, 96
        %v756 = vpop.permute.xlu0 %755
        %757 = vrot.lane.b32.xlu0 %v752, 96
        %v758 = vpop.permute.xlu0 %757
        %759 = vrot.lane.b32.xlu0 %v751, 64
        %v760 = vpop.permute.xlu0 %759
        %761 = vrot.lane.b32.xlu0 %v752, 64
        %v762 = vpop.permute.xlu0 %761
        %763 = vrot.lane.b32.xlu0 %v751, 32
        %v764 = vpop.permute.xlu0 %763
        %765 = vrot.lane.b32.xlu0 %v752, 32
        %v766 = vpop.permute.xlu0 %765
        %769 = vrot.lane.b32.xlu0 %v723, 96
        %v770 = vpop.permute.xlu0 %769
        %771 = vrot.lane.b32.xlu0 %v726, 96
        %v772 = vpop.permute.xlu0 %771
        %773 = vrot.lane.b32.xlu0 %v723, 64
        %v774 = vpop.permute.xlu0 %773
        %775 = vrot.lane.b32.xlu0 %v726, 64
        %v776 = vpop.permute.xlu0 %775
        %777 = vrot.lane.b32.xlu0 %v723, 32
        %v778 = vpop.permute.xlu0 %777
        %779 = vrot.lane.b32.xlu0 %v726, 32
        %v780 = vpop.permute.xlu0 %779
        %783 = vrot.lane.b32.xlu0 %v746, 96
        %v784 = vpop.permute.xlu0 %783
        %785 = vrot.lane.b32.xlu0 %v749, 96
        %v786 = vpop.permute.xlu0 %785
        %789 = vrot.lane.b32.xlu0 %v746, 64
        %v790 = vpop.permute.xlu0 %789
        %791 = vrot.lane.b32.xlu0 %v749, 64
        %v792 = vpop.permute.xlu0 %791
        %795 = vrot.lane.b32.xlu0 %v746, 32
        %v796 = vpop.permute.xlu0 %795
        %797 = vrot.lane.b32.xlu0 %v749, 32
        %v798 = vpop.permute.xlu0 %797
        %vm801 = vcmask 261120
        %v802 = vsel %vm801, %v751, 0
        %v804 = vsel %vm801, %v752, 0
        %v806 = vsel %vm801, %v723, 0
        %v808 = vsel %vm801, %v726, 0
        %810 = vmatpush.xpose.msra.mxu0 0.0
        %811 = vmatpush.xpose.msra.mxu0 0.0
        %812 = vmatpush.xpose.msra.mxu0 0.0
        %813 = vmatpush.xpose.msra.mxu0 0.0
        %814 = vmatpush.xpose.msra.mxu0 0.0
        %815 = vmatpush.xpose.msra.mxu0 0.0
        %816 = vmatpush.xpose.msra.mxu0 0.0
        %817 = vmatpush.xpose.msra.mxu0 0.0
        %818 = vmatpush.xpose.msra.mxu0 0.0
        %819 = vmatpush.xpose.msra.mxu0 0.0
        %820 = vmatpush.xpose.msra.mxu0 0.0
        %821 = vmatpush.xpose.msra.mxu0 0.0
        %822 = vmatpush.xpose.msra.mxu0 0.0
        %823 = vmatpush.xpose.msra.mxu0 0.0
        %824 = vmatpush.xpose.msra.mxu0 %v808
        %825 = vmatpush.xpose.msra.mxu0 %v806
        %826 = vmatmul.f32.gmra.mxu0 %v802
        %v827 = vpop.f32.mrf.mxu0
        %v828 = vadd.f32 0.0, %v827
        %829 = vmatmul.f32.gmra.mxu0 %v804
        %v830 = vpop.f32.mrf.mxu0
        %v831 = vadd.f32 0.0, %v830
        %832 = vdwg.mxu0
        %v833 = vsel %vm801, %v756, 0
        %v835 = vsel %vm801, %v758, 0
        %v837 = vsel %vm801, %v770, 0
        %v839 = vsel %vm801, %v772, 0
        %841 = vmatpush.xpose.msra.mxu0 0.0
        %842 = vmatpush.xpose.msra.mxu0 0.0
        %843 = vmatpush.xpose.msra.mxu0 0.0
        %844 = vmatpush.xpose.msra.mxu0 0.0
        %845 = vmatpush.xpose.msra.mxu0 0.0
        %846 = vmatpush.xpose.msra.mxu0 0.0
        %847 = vmatpush.xpose.msra.mxu0 0.0
        %848 = vmatpush.xpose.msra.mxu0 0.0
        %849 = vmatpush.xpose.msra.mxu0 0.0
        %850 = vmatpush.xpose.msra.mxu0 0.0
        %851 = vmatpush.xpose.msra.mxu0 0.0
        %852 = vmatpush.xpose.msra.mxu0 0.0
        %853 = vmatpush.xpose.msra.mxu0 0.0
        %854 = vmatpush.xpose.msra.mxu0 0.0
        %855 = vmatpush.xpose.msra.mxu0 %v839
        %856 = vmatpush.xpose.msra.mxu0 %v837
        %857 = vmatmul.f32.gmra.mxu0 %v833
        %v858 = vpop.f32.mrf.mxu0
        %v859 = vadd.f32 0.0, %v858
        %860 = vmatmul.f32.gmra.mxu0 %v835
        %v861 = vpop.f32.mrf.mxu0
        %v862 = vadd.f32 0.0, %v861
        %863 = vdwg.mxu0
        %v864 = vsel %vm801, %v760, 0
        %v866 = vsel %vm801, %v762, 0
        %v868 = vsel %vm801, %v774, 0
        %v870 = vsel %vm801, %v776, 0
        %872 = vmatpush.xpose.msra.mxu0 0.0
        %873 = vmatpush.xpose.msra.mxu0 0.0
        %874 = vmatpush.xpose.msra.mxu0 0.0
        %875 = vmatpush.xpose.msra.mxu0 0.0
        %876 = vmatpush.xpose.msra.mxu0 0.0
        %877 = vmatpush.xpose.msra.mxu0 0.0
        %878 = vmatpush.xpose.msra.mxu0 0.0
        %879 = vmatpush.xpose.msra.mxu0 0.0
        %880 = vmatpush.xpose.msra.mxu0 0.0
        %881 = vmatpush.xpose.msra.mxu0 0.0
        %882 = vmatpush.xpose.msra.mxu0 0.0
        %883 = vmatpush.xpose.msra.mxu0 0.0
        %884 = vmatpush.xpose.msra.mxu0 0.0
        %885 = vmatpush.xpose.msra.mxu0 0.0
        %886 = vmatpush.xpose.msra.mxu0 %v870
        %887 = vmatpush.xpose.msra.mxu0 %v868
        %888 = vmatmul.f32.gmra.mxu0 %v864
        %v889 = vpop.f32.mrf.mxu0
        %v890 = vadd.f32 0.0, %v889
        %891 = vmatmul.f32.gmra.mxu0 %v866
        %v892 = vpop.f32.mrf.mxu0
        %v893 = vadd.f32 0.0, %v892
        %894 = vdwg.mxu0
        %v895 = vsel %vm801, %v764, 0
        %v897 = vsel %vm801, %v766, 0
        %v899 = vsel %vm801, %v778, 0
        %v901 = vsel %vm801, %v780, 0
        %903 = vmatpush.xpose.msra.mxu0 0.0
        %904 = vmatpush.xpose.msra.mxu0 0.0
        %905 = vmatpush.xpose.msra.mxu0 0.0
        %906 = vmatpush.xpose.msra.mxu0 0.0
        %907 = vmatpush.xpose.msra.mxu0 0.0
        %908 = vmatpush.xpose.msra.mxu0 0.0
        %909 = vmatpush.xpose.msra.mxu0 0.0
        %910 = vmatpush.xpose.msra.mxu0 0.0
        %911 = vmatpush.xpose.msra.mxu0 0.0
        %912 = vmatpush.xpose.msra.mxu0 0.0
        %913 = vmatpush.xpose.msra.mxu0 0.0
        %914 = vmatpush.xpose.msra.mxu0 0.0
        %915 = vmatpush.xpose.msra.mxu0 0.0
        %916 = vmatpush.xpose.msra.mxu0 0.0
        %917 = vmatpush.xpose.msra.mxu0 %v901
        %918 = vmatpush.xpose.msra.mxu0 %v899
        %919 = vmatmul.f32.gmra.mxu0 %v895
        %v920 = vpop.f32.mrf.mxu0
        %v921 = vadd.f32 0.0, %v920
        %922 = vmatmul.f32.gmra.mxu0 %v897
        %v923 = vpop.f32.mrf.mxu0
        %v924 = vadd.f32 0.0, %v923
        %925 = vdwg.mxu0
        %v926 = vlaneseq
        %v927 = vand.u32 %v926, 127
        %v928 = vstv %s623
        %vm929 = vcmp.ge.s32.totalorder %v927, %v928
        %v930 = vsel %vm929, -1e+30, %v828
        %v931 = vsel %vm929, -1e+30, %v831
        %v932 = vsel %vm929, -1e+30, %v859
        %v933 = vsel %vm929, -1e+30, %v862
        %v934 = vsel %vm929, -1e+30, %v890
        %v935 = vsel %vm929, -1e+30, %v893
        %v936 = vsel %vm929, -1e+30, %v921
        %v937 = vsel %vm929, -1e+30, %v924
        %vm938 = vcmask 130048
        %v939 = vsel %vm938, %v930, -inf
        %940 = vmax.xlane.f32.xlu0 %v939
        %v941 = vpop.xlane.xlu0 %940
        %v942 = vsel %vm938, %v931, -inf
        %943 = vmax.xlane.f32.xlu0 %v942
        %v944 = vpop.xlane.xlu0 %943
        %v945 = vsel %vm938, %v932, -inf
        %946 = vmax.xlane.f32.xlu0 %v945
        %v947 = vpop.xlane.xlu0 %946
        %v948 = vsel %vm938, %v933, -inf
        %949 = vmax.xlane.f32.xlu0 %v948
        %v950 = vpop.xlane.xlu0 %949
        %v951 = vsel %vm938, %v934, -inf
        %952 = vmax.xlane.f32.xlu0 %v951
        %v953 = vpop.xlane.xlu0 %952
        %v954 = vsel %vm938, %v935, -inf
        %955 = vmax.xlane.f32.xlu0 %v954
        %v956 = vpop.xlane.xlu0 %955
        %v957 = vsel %vm938, %v936, -inf
        %958 = vmax.xlane.f32.xlu0 %v957
        %v959 = vpop.xlane.xlu0 %958
        %v960 = vsel %vm938, %v937, -inf
        %961 = vmax.xlane.f32.xlu0 %v960
        %v962 = vpop.xlane.xlu0 %961
        %v963 = vsub.f32 %v930, %v941
        %v964 = vsub.f32 %v931, %v944
        %v965 = vsub.f32 %v932, %v947
        %v966 = vsub.f32 %v933, %v950
        %v967 = vsub.f32 %v934, %v953
        %v968 = vsub.f32 %v935, %v956
        %v969 = vsub.f32 %v936, %v959
        %v970 = vsub.f32 %v937, %v962
        %v971 = vmul.f32 %v963, 1.442695
        %v972 = vpow.pop %v971
        %v973 = vmul.f32 %v964, 1.442695
        %v974 = vpow.pop %v973
        %v975 = vmul.f32 %v965, 1.442695
        %v976 = vpow.pop %v975
        %v977 = vmul.f32 %v966, 1.442695
        %v978 = vpow.pop %v977
        %v979 = vmul.f32 %v967, 1.442695
        %v980 = vpow.pop %v979
        %v981 = vmul.f32 %v968, 1.442695
        %v982 = vpow.pop %v981
        %v983 = vmul.f32 %v969, 1.442695
        %v984 = vpow.pop %v983
        %v985 = vmul.f32 %v970, 1.442695
        %v986 = vpow.pop %v985
        %v987 = vsel %vm938, %v972, 0.0
        %988 = vadd.xlane.f32.xlu0 %v987
        %v989 = vpop.xlane.xlu0 %988
        %v990 = vsel %vm938, %v974, 0.0
        %991 = vadd.xlane.f32.xlu0 %v990
        %v992 = vpop.xlane.xlu0 %991
        %v993 = vsel %vm938, %v976, 0.0
        %994 = vadd.xlane.f32.xlu0 %v993
        %v995 = vpop.xlane.xlu0 %994
        %v996 = vsel %vm938, %v978, 0.0
        %997 = vadd.xlane.f32.xlu0 %v996
        %v998 = vpop.xlane.xlu0 %997
        %v999 = vsel %vm938, %v980, 0.0
        %1000 = vadd.xlane.f32.xlu0 %v999
        %v1001 = vpop.xlane.xlu0 %1000
        %v1002 = vsel %vm938, %v982, 0.0
        %1003 = vadd.xlane.f32.xlu0 %v1002
        %v1004 = vpop.xlane.xlu0 %1003
        %v1005 = vsel %vm938, %v984, 0.0
        %1006 = vadd.xlane.f32.xlu0 %v1005
        %v1007 = vpop.xlane.xlu0 %1006
        %v1008 = vsel %vm938, %v986, 0.0
        %1009 = vadd.xlane.f32.xlu0 %v1008
        %v1010 = vpop.xlane.xlu0 %1009
        %v1011 = vrcp.pop %v989
        %v1012 = vrcp.pop %v992
        %v1013 = vrcp.pop %v995
        %v1014 = vrcp.pop %v998
        %v1015 = vrcp.pop %v1001
        %v1016 = vrcp.pop %v1004
        %v1017 = vrcp.pop %v1007
        %v1018 = vrcp.pop %v1010
        %v1019 = vmul.f32 %v972, %v1011
        %v1020 = vmul.f32 %v974, %v1012
        %v1021 = vmul.f32 %v976, %v1013
        %v1022 = vmul.f32 %v978, %v1014
        %v1023 = vmul.f32 %v980, %v1015
        %v1024 = vmul.f32 %v982, %v1016
        %v1025 = vmul.f32 %v984, %v1017
        %v1026 = vmul.f32 %v986, %v1018
        %v1028 = vsel %vm938, %v1019, 0
        %v1031 = vsel %vm938, %v1020, 0
        %1033 = vmatpush.msra.mxu0 0.0
        %1034 = vmatpush.msra.mxu0 0.0
        %1035 = vmatpush.msra.mxu0 0.0
        %1036 = vmatpush.msra.mxu0 0.0
        %1037 = vmatpush.msra.mxu0 0.0
        %1038 = vmatpush.msra.mxu0 0.0
        %1039 = vmatpush.msra.mxu0 0.0
        %1040 = vmatpush.msra.mxu0 0.0
        %1041 = vmatpush.msra.mxu0 0.0
        %1042 = vmatpush.msra.mxu0 0.0
        %1043 = vmatpush.msra.mxu0 0.0
        %1044 = vmatpush.msra.mxu0 0.0
        %1045 = vmatpush.msra.mxu0 0.0
        %1046 = vmatpush.msra.mxu0 0.0
        %1047 = vmatpush.msra.mxu0 %v749
        %1048 = vmatpush.msra.mxu0 %v746
        %1049 = vmatmul.f32.gmra.mxu0 %v1028
        %v1050 = vpop.f32.mrf.mxu0
        %v1051 = vadd.f32 0.0, %v1050
        %1052 = vmatmul.f32.gmra.mxu0 %v1031
        %v1053 = vpop.f32.mrf.mxu0
        %v1054 = vadd.f32 0.0, %v1053
        %1055 = vdwg.mxu0
        %v1057 = vsel %vm938, %v1021, 0
        %v1060 = vsel %vm938, %v1022, 0
        %1062 = vmatpush.msra.mxu0 0.0
        %1063 = vmatpush.msra.mxu0 0.0
        %1064 = vmatpush.msra.mxu0 0.0
        %1065 = vmatpush.msra.mxu0 0.0
        %1066 = vmatpush.msra.mxu0 0.0
        %1067 = vmatpush.msra.mxu0 0.0
        %1068 = vmatpush.msra.mxu0 0.0
        %1069 = vmatpush.msra.mxu0 0.0
        %1070 = vmatpush.msra.mxu0 0.0
        %1071 = vmatpush.msra.mxu0 0.0
        %1072 = vmatpush.msra.mxu0 0.0
        %1073 = vmatpush.msra.mxu0 0.0
        %1074 = vmatpush.msra.mxu0 0.0
        %1075 = vmatpush.msra.mxu0 0.0
        %1076 = vmatpush.msra.mxu0 %v786
        %1077 = vmatpush.msra.mxu0 %v784
        %1078 = vmatmul.f32.gmra.mxu0 %v1057
        %v1079 = vpop.f32.mrf.mxu0
        %v1080 = vadd.f32 0.0, %v1079
        %1081 = vmatmul.f32.gmra.mxu0 %v1060
        %v1082 = vpop.f32.mrf.mxu0
        %v1083 = vadd.f32 0.0, %v1082
        %1084 = vdwg.mxu0
        %v1086 = vsel %vm938, %v1023, 0
        %v1089 = vsel %vm938, %v1024, 0
        %1091 = vmatpush.msra.mxu0 0.0
        %1092 = vmatpush.msra.mxu0 0.0
        %1093 = vmatpush.msra.mxu0 0.0
        %1094 = vmatpush.msra.mxu0 0.0
        %1095 = vmatpush.msra.mxu0 0.0
        %1096 = vmatpush.msra.mxu0 0.0
        %1097 = vmatpush.msra.mxu0 0.0
        %1098 = vmatpush.msra.mxu0 0.0
        %1099 = vmatpush.msra.mxu0 0.0
        %1100 = vmatpush.msra.mxu0 0.0
        %1101 = vmatpush.msra.mxu0 0.0
        %1102 = vmatpush.msra.mxu0 0.0
        %1103 = vmatpush.msra.mxu0 0.0
        %1104 = vmatpush.msra.mxu0 0.0
        %1105 = vmatpush.msra.mxu0 %v792
        %1106 = vmatpush.msra.mxu0 %v790
        %1107 = vmatmul.f32.gmra.mxu0 %v1086
        %v1108 = vpop.f32.mrf.mxu0
        %v1109 = vadd.f32 0.0, %v1108
        %1110 = vmatmul.f32.gmra.mxu0 %v1089
        %v1111 = vpop.f32.mrf.mxu0
        %v1112 = vadd.f32 0.0, %v1111
        %1113 = vdwg.mxu0
        %v1115 = vsel %vm938, %v1025, 0
        %v1118 = vsel %vm938, %v1026, 0
        %1120 = vmatpush.msra.mxu0 0.0
        %1121 = vmatpush.msra.mxu0 0.0
        %1122 = vmatpush.msra.mxu0 0.0
        %1123 = vmatpush.msra.mxu0 0.0
        %1124 = vmatpush.msra.mxu0 0.0
        %1125 = vmatpush.msra.mxu0 0.0
        %1126 = vmatpush.msra.mxu0 0.0
        %1127 = vmatpush.msra.mxu0 0.0
        %1128 = vmatpush.msra.mxu0 0.0
        %1129 = vmatpush.msra.mxu0 0.0
        %1130 = vmatpush.msra.mxu0 0.0
        %1131 = vmatpush.msra.mxu0 0.0
        %1132 = vmatpush.msra.mxu0 0.0
        %1133 = vmatpush.msra.mxu0 0.0
        %1134 = vmatpush.msra.mxu0 %v798
        %1135 = vmatpush.msra.mxu0 %v796
        %1136 = vmatmul.f32.gmra.mxu0 %v1115
        %v1137 = vpop.f32.mrf.mxu0
        %v1138 = vadd.f32 0.0, %v1137
        %1139 = vmatmul.f32.gmra.mxu0 %v1118
        %v1140 = vpop.f32.mrf.mxu0
        %v1141 = vadd.f32 0.0, %v1140
        %1142 = vdwg.mxu0
        %1145 = vrot.lane.b32.xlu0 %v1080, 32
        %v1146 = vpop.permute.xlu0 %1145
        %1147 = vrot.lane.b32.xlu0 %v1083, 32
        %v1148 = vpop.permute.xlu0 %1147
        %1153 = vrot.lane.b32.xlu0 %v1109, 64
        %v1154 = vpop.permute.xlu0 %1153
        %1155 = vrot.lane.b32.xlu0 %v1112, 64
        %v1156 = vpop.permute.xlu0 %1155
        %1161 = vrot.lane.b32.xlu0 %v1138, 96
        %v1162 = vpop.permute.xlu0 %1161
        %1163 = vrot.lane.b32.xlu0 %v1141, 96
        %v1164 = vpop.permute.xlu0 %1163
        %v1167 = vsel %vm801, %v1051, %v1146
        %v1168 = vsel %vm801, %v1054, %v1148
        %vm1169 = vcmask 523264
        %v1170 = vsel %vm1169, %v1167, %v1154
        %v1171 = vsel %vm1169, %v1168, %v1156
        %vm1172 = vcmask 785408
        %v1173 = vsel %vm1172, %v1170, %v1162
        %v1174 = vsel %vm1172, %v1171, %v1164
        %v1175 = vld [vmem:[#allocation10] sm:$0xff]
        %v1176 = vld [vmem:[#allocation10 + $0x8] sm:$0xff]
        %v1177 = vld [vmem:[#allocation10 + $0x10] sm:$0xff]
        %v1178 = vld [vmem:[#allocation10 + $0x18] sm:$0xff]
        %v1179 = vld [vmem:[#allocation10 + $0x20] sm:$0xff]
        %v1180 = vld [vmem:[#allocation10 + $0x28] sm:$0xff]
        %v1181 = vld [vmem:[#allocation10 + $0x30] sm:$0xff]
        %v1182 = vld [vmem:[#allocation10 + $0x38] sm:$0xff]
        %v1183 = vld [vmem:[#allocation10 + $0x40] sm:$0xff]
        %v1184 = vld [vmem:[#allocation10 + $0x48] sm:$0xff]
        %v1185 = vld [vmem:[#allocation10 + $0x50] sm:$0xff]
        %v1186 = vld [vmem:[#allocation10 + $0x58] sm:$0xff]
        %v1187 = vld [vmem:[#allocation10 + $0x60] sm:$0xff]
        %v1188 = vld [vmem:[#allocation10 + $0x68] sm:$0xff]
        %v1189 = vld [vmem:[#allocation10 + $0x70] sm:$0xff]
        %v1190 = vld [vmem:[#allocation10 + $0x78] sm:$0xff]
        %v1191 = vld [vmem:[%s5] sm:$0x1]
        %v1193 = vperm.slane %v1191, 0
        %1195 = vmatpush.msra.mxu0 %v1190
        %1196 = vmatpush.msra.mxu0 %v1189
        %1197 = vmatpush.msra.mxu0 %v1188
        %1198 = vmatpush.msra.mxu0 %v1187
        %1199 = vmatpush.msra.mxu0 %v1186
        %1200 = vmatpush.msra.mxu0 %v1185
        %1201 = vmatpush.msra.mxu0 %v1184
        %1202 = vmatpush.msra.mxu0 %v1183
        %1203 = vmatpush.msra.mxu0 %v1182
        %1204 = vmatpush.msra.mxu0 %v1181
        %1205 = vmatpush.msra.mxu0 %v1180
        %1206 = vmatpush.msra.mxu0 %v1179
        %1207 = vmatpush.msra.mxu0 %v1178
        %1208 = vmatpush.msra.mxu0 %v1177
        %1209 = vmatpush.msra.mxu0 %v1176
        %1210 = vmatpush.msra.mxu0 %v1175
        %1211 = vmatmul.f32.gmra.mxu0 %v1173
        %v1212 = vpop.f32.mrf.mxu0
        %v1213 = vadd.f32 %v1193, %v1212
        %1214 = vmatmul.f32.gmra.mxu0 %v1174
        %v1215 = vpop.f32.mrf.mxu0
        %v1216 = vadd.f32 %v1193, %v1215
        %1217 = vdwg.mxu0
        %v1218 = vld [vmem:[#allocation12] sm:$0xff]
        %v1219 = vld [vmem:[#allocation12 + $0x8] sm:$0xff]
        %v1220 = vld [vmem:[#allocation12 + $0x10] sm:$0xff]
        %v1221 = vld [vmem:[#allocation12 + $0x18] sm:$0xff]
        %v1222 = vld [vmem:[#allocation12 + $0x20] sm:$0xff]
        %v1223 = vld [vmem:[#allocation12 + $0x28] sm:$0xff]
        %v1224 = vld [vmem:[#allocation12 + $0x30] sm:$0xff]
        %v1225 = vld [vmem:[#allocation12 + $0x38] sm:$0xff]
        %v1226 = vld [vmem:[#allocation12 + $0x40] sm:$0xff]
        %v1227 = vld [vmem:[#allocation12 + $0x48] sm:$0xff]
        %v1228 = vld [vmem:[#allocation12 + $0x50] sm:$0xff]
        %v1229 = vld [vmem:[#allocation12 + $0x58] sm:$0xff]
        %v1230 = vld [vmem:[#allocation12 + $0x60] sm:$0xff]
        %v1231 = vld [vmem:[#allocation12 + $0x68] sm:$0xff]
        %v1232 = vld [vmem:[#allocation12 + $0x70] sm:$0xff]
        %v1233 = vld [vmem:[#allocation12 + $0x78] sm:$0xff]
        %v1234 = vld [vmem:[%s7] sm:$0x1]
        %v1236 = vperm.slane %v1234, 0
        %1238 = vmatpush.msra.mxu0 %v1233
        %1239 = vmatpush.msra.mxu0 %v1232
        %1240 = vmatpush.msra.mxu0 %v1231
        %1241 = vmatpush.msra.mxu0 %v1230
        %1242 = vmatpush.msra.mxu0 %v1229
        %1243 = vmatpush.msra.mxu0 %v1228
        %1244 = vmatpush.msra.mxu0 %v1227
        %1245 = vmatpush.msra.mxu0 %v1226
        %1246 = vmatpush.msra.mxu0 %v1225
        %1247 = vmatpush.msra.mxu0 %v1224
        %1248 = vmatpush.msra.mxu0 %v1223
        %1249 = vmatpush.msra.mxu0 %v1222
        %1250 = vmatpush.msra.mxu0 %v1221
        %1251 = vmatpush.msra.mxu0 %v1220
        %1252 = vmatpush.msra.mxu0 %v1219
        %1253 = vmatpush.msra.mxu0 %v1218
        %1254 = vmatmul.f32.gmra.mxu0 %v1213
        %v1255 = vpop.f32.mrf.mxu0
        %v1256 = vadd.f32 %v1236, %v1255
        %1257 = vmatmul.f32.gmra.mxu0 %v1216
        %v1258 = vpop.f32.mrf.mxu0
        %v1259 = vadd.f32 %v1236, %v1258
        %1260 = vdwg.mxu0
        %v1261 = vadd.f32 %v1256, %v624
        %v1262 = vadd.f32 %v1259, %v625
        %v1263 = vld [vmem:[%s8] sm:$0x1]
        %v1264 = vld [vmem:[%s9] sm:$0x1]
        %1265 = vadd.xlane.f32.xlu0 %v1261
        %v1266 = vpop.xlane.xlu0 %1265
        %1267 = vadd.xlane.f32.xlu0 %v1262
        %v1268 = vpop.xlane.xlu0 %1267
        %v1269 = vrcp.pop 128.0
        %v1270 = vmul.f32 128.0, %v1269
        %v1271 = vsub.f32 1.0, %v1270
        %v1272 = vmul.f32 %v1269, %v1271
        %v1273 = vadd.f32 %v1269, %v1272
        %vm1274 = vweird.f32 %v1269
        %v1275 = vsel %vm1274, %v1269, %v1273
        %v1276 = vmul.f32 %v1266, %v1275
        %v1277 = vmul.f32 %v1268, %v1275
        %v1278 = vsub.f32 %v1261, %v1276
        %v1279 = vsub.f32 %v1262, %v1277
        %v1280 = vmul.f32 %v1278, %v1278
        %v1281 = vmul.f32 %v1279, %v1279
        %1282 = vadd.xlane.f32.xlu0 %v1280
        %v1283 = vpop.xlane.xlu0 %1282
        %1284 = vadd.xlane.f32.xlu0 %v1281
        %v1285 = vpop.xlane.xlu0 %1284
        %v1286 = vmul.f32 %v1283, %v1275
        %v1287 = vmul.f32 %v1285, %v1275
        %v1288 = vadd.f32 %v1286, 1e-05
        %v1289 = vadd.f32 %v1287, 1e-05
        %v1290 = vrsqrt.pop %v1288
        %v1291 = vmul.f32 %v1290, %v1288
        %v1292 = vmul.f32 %v1291, %v1290
        %v1293 = vmul.f32 0.5, %v1292
        %v1294 = vsub.f32 1.5, %v1293
        %v1295 = vmul.f32 %v1290, %v1294
        %vm1296 = vweird.f32 %v1288
        %vm1297 = vweird.f32 %v1290
        %vm1298 = vmor %vm1296, %vm1297
        %v1299 = vsel %vm1298, %v1290, %v1295
        %v1300 = vrsqrt.pop %v1289
        %v1301 = vmul.f32 %v1300, %v1289
        %v1302 = vmul.f32 %v1301, %v1300
        %v1303 = vmul.f32 0.5, %v1302
        %v1304 = vsub.f32 1.5, %v1303
        %v1305 = vmul.f32 %v1300, %v1304
        %vm1306 = vweird.f32 %v1289
        %vm1307 = vweird.f32 %v1300
        %vm1308 = vmor %vm1306, %vm1307
        %v1309 = vsel %vm1308, %v1300, %v1305
        %v1310 = vmul.f32 %v1278, %v1299
        %v1311 = vmul.f32 %v1279, %v1309
        %v1313 = vperm.slane %v1263, 0
        %v1315 = vmul.f32 %v1310, %v1313
        %v1316 = vmul.f32 %v1311, %v1313
        %v1318 = vperm.slane %v1264, 0
        %v1320 = vadd.f32 %v1315, %v1318
        %v1321 = vadd.f32 %v1316, %v1318
        %v1322 = vld [vmem:[#allocation13] sm:$0xff]
        %v1323 = vld [vmem:[#allocation13 + $0x8] sm:$0xff]
        %v1324 = vld [vmem:[#allocation13 + $0x10] sm:$0xff]
        %v1325 = vld [vmem:[#allocation13 + $0x18] sm:$0xff]
        %v1326 = vld [vmem:[#allocation13 + $0x20] sm:$0xff]
        %v1327 = vld [vmem:[#allocation13 + $0x28] sm:$0xff]
        %v1328 = vld [vmem:[#allocation13 + $0x30] sm:$0xff]
        %v1329 = vld [vmem:[#allocation13 + $0x38] sm:$0xff]
        %v1330 = vld [vmem:[#allocation13 + $0x40] sm:$0xff]
        %v1331 = vld [vmem:[#allocation13 + $0x48] sm:$0xff]
        %v1332 = vld [vmem:[#allocation13 + $0x50] sm:$0xff]
        %v1333 = vld [vmem:[#allocation13 + $0x58] sm:$0xff]
        %v1334 = vld [vmem:[#allocation13 + $0x60] sm:$0xff]
        %v1335 = vld [vmem:[#allocation13 + $0x68] sm:$0xff]
        %v1336 = vld [vmem:[#allocation13 + $0x70] sm:$0xff]
        %v1337 = vld [vmem:[#allocation13 + $0x78] sm:$0xff]
        %v1338 = vld [vmem:[%s11] sm:$0x1]
        %v1340 = vperm.slane %v1338, 0
        %1342 = vmatpush.msra.mxu0 %v1337
        %1343 = vmatpush.msra.mxu0 %v1336
        %1344 = vmatpush.msra.mxu0 %v1335
        %1345 = vmatpush.msra.mxu0 %v1334
        %1346 = vmatpush.msra.mxu0 %v1333
        %1347 = vmatpush.msra.mxu0 %v1332
        %1348 = vmatpush.msra.mxu0 %v1331
        %1349 = vmatpush.msra.mxu0 %v1330
        %1350 = vmatpush.msra.mxu0 %v1329
        %1351 = vmatpush.msra.mxu0 %v1328
        %1352 = vmatpush.msra.mxu0 %v1327
        %1353 = vmatpush.msra.mxu0 %v1326
        %1354 = vmatpush.msra.mxu0 %v1325
        %1355 = vmatpush.msra.mxu0 %v1324
        %1356 = vmatpush.msra.mxu0 %v1323
        %1357 = vmatpush.msra.mxu0 %v1322
        %1358 = vmatmul.f32.gmra.mxu0 %v1320
        %v1359 = vpop.f32.mrf.mxu0
        %v1360 = vadd.f32 %v1340, %v1359
        %1361 = vmatmul.f32.gmra.mxu0 %v1321
        %v1362 = vpop.f32.mrf.mxu0
        %v1363 = vadd.f32 %v1340, %v1362
        %1364 = vdwg.mxu0
        %v1365 = vmul.f32 %v1360, 0.5
        %v1366 = vmul.f32 %v1363, 0.5
        %v1367 = vmul.f32 %v1360, 0.70710677
        %v1368 = vmul.f32 %v1363, 0.70710677
        %vm1369 = vcmp.ge.f32.partialorder %v1367, 0.0
        %vm1370 = vcmp.ge.f32.partialorder %v1368, 0.0
        %v1371 = vsel %vm1369, 1.0, -1.0
        %v1372 = vsel %vm1370, 1.0, -1.0
        %v1373 = vand.u32 2147483647, %v1367
        %v1374 = vand.u32 2147483647, %v1368
        %v1375 = vmul.f32 %v1373, 0.3275911
        %v1376 = vmul.f32 %v1374, 0.3275911
        %v1377 = vadd.f32 %v1375, 1.0
        %v1378 = vadd.f32 %v1376, 1.0
        %v1379 = vrcp.pop %v1377
        %v1380 = vmul.f32 %v1377, %v1379
        %v1381 = vsub.f32 1.0, %v1380
        %v1382 = vmul.f32 %v1379, %v1381
        %v1383 = vadd.f32 %v1379, %v1382
        %vm1384 = vweird.f32 %v1377
        %vm1385 = vweird.f32 %v1379
        %vm1386 = vmor %vm1384, %vm1385
        %v1387 = vsel %vm1386, %v1379, %v1383
        %v1388 = vand.u32 2147483647, %v1377
        %vm1389 = vcmp.eq.f32.partialorder %v1388, 8.507059e+37
        %v1390 = vand.u32 %v1377, 2147483648
        %v1391 = vor.u32 1.1754944e-38, %v1390
        %v1392 = vsel %vm1389, %v1391, %v1387
        %v1393 = vmul.f32 1.0, %v1392
        %v1394 = vrcp.pop %v1378
        %v1395 = vmul.f32 %v1378, %v1394
        %v1396 = vsub.f32 1.0, %v1395
        %v1397 = vmul.f32 %v1394, %v1396
        %v1398 = vadd.f32 %v1394, %v1397
        %vm1399 = vweird.f32 %v1378
        %vm1400 = vweird.f32 %v1394
        %vm1401 = vmor %vm1399, %vm1400
        %v1402 = vsel %vm1401, %v1394, %v1398
        %v1403 = vand.u32 2147483647, %v1378
        %vm1404 = vcmp.eq.f32.partialorder %v1403, 8.507059e+37
        %v1405 = vand.u32 %v1378, 2147483648
        %v1406 = vor.u32 1.1754944e-38, %v1405
        %v1407 = vsel %vm1404, %v1406, %v1402
        %v1408 = vmul.f32 1.0, %v1407
        %v1409 = vmul.f32 %v1393, 1.0614054
        %v1410 = vmul.f32 %v1408, 1.0614054
        %v1411 = vadd.f32 %v1409, -1.4531521
        %v1412 = vadd.f32 %v1410, -1.4531521
        %v1413 = vmul.f32 %v1411, %v1393
        %v1414 = vmul.f32 %v1412, %v1408
        %v1415 = vadd.f32 %v1413, 1.4214138
        %v1416 = vadd.f32 %v1414, 1.4214138
        %v1417 = vmul.f32 %v1415, %v1393
        %v1418 = vmul.f32 %v1416, %v1408
        %v1419 = vadd.f32 %v1417, -0.28449672
        %v1420 = vadd.f32 %v1418, -0.28449672
        %v1421 = vmul.f32 %v1419, %v1393
        %v1422 = vmul.f32 %v1420, %v1408
        %v1423 = vadd.f32 %v1421, 0.2548296
        %v1424 = vadd.f32 %v1422, 0.2548296
        %v1425 = vmul.f32 %v1423, %v1393
        %v1426 = vmul.f32 %v1424, %v1408
        %v1427 = vsub.f32 0.0, %v1373
        %v1428 = vsub.f32 0.0, %v1374
        %v1429 = vmul.f32 %v1427, %v1373
        %v1430 = vmul.f32 %v1428, %v1374
        %v1431 = vmul.f32 %v1429, 1.442695
        %v1432 = vpow.pop %v1431
        %v1433 = vmul.f32 %v1430, 1.442695
        %v1434 = vpow.pop %v1433
        %v1435 = vmul.f32 %v1425, %v1432
        %v1436 = vmul.f32 %v1426, %v1434
        %v1437 = vsub.f32 1.0, %v1435
        %v1438 = vsub.f32 1.0, %v1436
        %v1439 = vmul.f32 %v1371, %v1437
        %v1440 = vmul.f32 %v1372, %v1438
        %v1441 = vadd.f32 %v1439, 1.0
        %v1442 = vadd.f32 %v1440, 1.0
        %v1443 = vmul.f32 %v1365, %v1441
        %v1444 = vmul.f32 %v1366, %v1442
        %v1445 = vld [vmem:[#allocation15] sm:$0xff]
        %v1446 = vld [vmem:[#allocation15 + $0x8] sm:$0xff]
        %v1447 = vld [vmem:[#allocation15 + $0x10] sm:$0xff]
        %v1448 = vld [vmem:[#allocation15 + $0x18] sm:$0xff]
        %v1449 = vld [vmem:[#allocation15 + $0x20] sm:$0xff]
        %v1450 = vld [vmem:[#allocation15 + $0x28] sm:$0xff]
        %v1451 = vld [vmem:[#allocation15 + $0x30] sm:$0xff]
        %v1452 = vld [vmem:[#allocation15 + $0x38] sm:$0xff]
        %v1453 = vld [vmem:[#allocation15 + $0x40] sm:$0xff]
        %v1454 = vld [vmem:[#allocation15 + $0x48] sm:$0xff]
        %v1455 = vld [vmem:[#allocation15 + $0x50] sm:$0xff]
        %v1456 = vld [vmem:[#allocation15 + $0x58] sm:$0xff]
        %v1457 = vld [vmem:[#allocation15 + $0x60] sm:$0xff]
        %v1458 = vld [vmem:[#allocation15 + $0x68] sm:$0xff]
        %v1459 = vld [vmem:[#allocation15 + $0x70] sm:$0xff]
        %v1460 = vld [vmem:[#allocation15 + $0x78] sm:$0xff]
        %v1461 = vld [vmem:[%s13] sm:$0x1]
        %v1463 = vperm.slane %v1461, 0
        %1465 = vmatpush.msra.mxu0 %v1460
        %1466 = vmatpush.msra.mxu0 %v1459
        %1467 = vmatpush.msra.mxu0 %v1458
        %1468 = vmatpush.msra.mxu0 %v1457
        %1469 = vmatpush.msra.mxu0 %v1456
        %1470 = vmatpush.msra.mxu0 %v1455
        %1471 = vmatpush.msra.mxu0 %v1454
        %1472 = vmatpush.msra.mxu0 %v1453
        %1473 = vmatpush.msra.mxu0 %v1452
        %1474 = vmatpush.msra.mxu0 %v1451
        %1475 = vmatpush.msra.mxu0 %v1450
        %1476 = vmatpush.msra.mxu0 %v1449
        %1477 = vmatpush.msra.mxu0 %v1448
        %1478 = vmatpush.msra.mxu0 %v1447
        %1479 = vmatpush.msra.mxu0 %v1446
        %1480 = vmatpush.msra.mxu0 %v1445
        %1481 = vmatmul.f32.gmra.mxu0 %v1443
        %v1482 = vpop.f32.mrf.mxu0
        %v1483 = vadd.f32 %v1463, %v1482
        %1484 = vmatmul.f32.gmra.mxu0 %v1444
        %v1485 = vpop.f32.mrf.mxu0
        %v1486 = vadd.f32 %v1463, %v1485
        %1487 = vdwg.mxu0
        %v1488 = vadd.f32 %v1483, %v1320
        %v1489 = vadd.f32 %v1486, %v1321
        %v1490 = vld [vmem:[%s14] sm:$0x1]
        %v1491 = vld [vmem:[%s15] sm:$0x1]
        %1492 = vadd.xlane.f32.xlu0 %v1488
        %v1493 = vpop.xlane.xlu0 %1492
        %1494 = vadd.xlane.f32.xlu0 %v1489
        %v1495 = vpop.xlane.xlu0 %1494
        %v1496 = vmul.f32 %v1493, %v1275
        %v1497 = vmul.f32 %v1495, %v1275
        %v1498 = vsub.f32 %v1488, %v1496
        %v1499 = vsub.f32 %v1489, %v1497
        %v1500 = vmul.f32 %v1498, %v1498
        %v1501 = vmul.f32 %v1499, %v1499
        %1502 = vadd.xlane.f32.xlu0 %v1500
        %v1503 = vpop.xlane.xlu0 %1502
        %1504 = vadd.xlane.f32.xlu0 %v1501
        %v1505 = vpop.xlane.xlu0 %1504
        %v1506 = vmul.f32 %v1503, %v1275
        %v1507 = vmul.f32 %v1505, %v1275
        %v1508 = vadd.f32 %v1506, 1e-05
        %v1509 = vadd.f32 %v1507, 1e-05
        %v1510 = vrsqrt.pop %v1508
        %v1511 = vmul.f32 %v1510, %v1508
        %v1512 = vmul.f32 %v1511, %v1510
        %v1513 = vmul.f32 0.5, %v1512
        %v1514 = vsub.f32 1.5, %v1513
        %v1515 = vmul.f32 %v1510, %v1514
        %vm1516 = vweird.f32 %v1508
        %vm1517 = vweird.f32 %v1510
        %vm1518 = vmor %vm1516, %vm1517
        %v1519 = vsel %vm1518, %v1510, %v1515
        %v1520 = vrsqrt.pop %v1509
        %v1521 = vmul.f32 %v1520, %v1509
        %v1522 = vmul.f32 %v1521, %v1520
        %v1523 = vmul.f32 0.5, %v1522
        %v1524 = vsub.f32 1.5, %v1523
        %v1525 = vmul.f32 %v1520, %v1524
        %vm1526 = vweird.f32 %v1509
        %vm1527 = vweird.f32 %v1520
        %vm1528 = vmor %vm1526, %vm1527
        %v1529 = vsel %vm1528, %v1520, %v1525
        %v1530 = vmul.f32 %v1498, %v1519
        %v1531 = vmul.f32 %v1499, %v1529
        %v1533 = vperm.slane %v1490, 0
        %v1535 = vmul.f32 %v1530, %v1533
        %v1536 = vmul.f32 %v1531, %v1533
        %v1538 = vperm.slane %v1491, 0
        %v1540 = vadd.f32 %v1535, %v1538
        %v1541 = vadd.f32 %v1536, %v1538
        %1542 = vst [vmem:[%s620] sm:$0xff] %v1540
        %1543 = vst [vmem:[%s620 + $0x8] sm:$0xff] %v1541
        %s1544 = sand.u32 %s372, 1
        %s1545 = scalar_lea.sflag [#allocation6], %s1544
        %s1546 = sand.u32 %s372, 1
        %s1547 = smul.addr %s1546, 16
        %s1548 = scalar_lea.vmem [#allocation16], %s1547
        // Predicated region
        $region109: #{tpu_custom_call.1} parent=79 // pred_check
          %p1549 = pneg %p382
        $region110: #{tpu_custom_call.1} parent=79 // pred_check_branch
          %1551 = sbr.rel (%p1549) target = $region112
        $region111: #{tpu_custom_call.1} parent=79 // pred_region
          %s1552 = smul.u32 2, %s44
          %1554 = vsyncadd %s1545, 0
          %s1555 = smul.addr %s1552, 8
          %s1556 = scalar_lea.hbm %s16, %s1555
          %s1557 = sshll.u32 %s1548, 4
          %s1558 = int_to_ptr.vmem [resolvable:$true] %s1557
          %s1559 = sshll.u32 %s1556, 4
          %s1560 = int_to_ptr.hbm [resolvable:$true] %s1559
          %1565 = dma.vmem_to_hbm [thread:$0]  %s1558, 256, %s1560, %s1545, 128, 128, 8
        $region112: #{tpu_custom_call.1} parent=79 // pred_fallthru
          _
      $region80: #{tpu_custom_call.1} parent=5 // pred_fallthru
        _
      %p1566 = scmp.le.s32.totalorder 2, %s39
      // Predicated region
      $region113: #{tpu_custom_call.1} parent=5 // pred_check
        %p1567 = pneg %p1566
      $region114: #{tpu_custom_call.1} parent=5 // pred_check_branch
        %1569 = sbr.rel (%p1567) target = $region116
      $region115: #{tpu_custom_call.1} parent=5 // pred_region
        %s1570 = ssub.s32 %s39, 2
        // Predicated region
        $region117: #{tpu_custom_call.1} parent=115 // pred_check
          %p1571 = pneg %p388
        $region118: #{tpu_custom_call.1} parent=115 // pred_check_branch
          %1573 = sbr.rel (%p1571) target = $region120
        $region119: #{tpu_custom_call.1} parent=115 // pred_region
          %s1574 = sand.u32 %s373, 1
          %s1575 = scalar_lea.sflag [#allocation6], %s1574
          %s1576 = sand.u32 %s373, 1
          %s1577 = smul.addr %s1576, 16
          %s1578 = scalar_lea.vmem [#allocation16], %s1577
          %1580 = dma.done %s1575, 256
        $region120: #{tpu_custom_call.1} parent=115 // pred_fallthru
          _
      $region116: #{tpu_custom_call.1} parent=5 // pred_fallthru
        _
    $region6: #{tpu_custom_call.1} parent=1 // loop_footer
      %s43 = sadd.s32 1, %s39
    $region7: #{tpu_custom_call.1} parent=1 // loop_footer_branch
      %38 = sbr.rel target = $region3
    $region8: #{tpu_custom_call.1} parent=1 // loop_exit
      _
    %1581 = vsyncpa [#allocation5], 1
    %s1582 = scalar_lea.sflag [#allocation5], 1
    %1583 = vsyncpa %s1582, 1
    %1584 = vsyncpa [#allocation8], 1
    %1585 = vsyncpa [#allocation11], 1
    %1586 = vsyncpa [#allocation14], 1
    %1587 = vsyncpa [#allocation6], 1
    %s1588 = scalar_lea.sflag [#allocation6], 1
    %1589 = vsyncpa %s1588, 1

</llo_original>
